<compile_context>
chip_gen: v7x
topology: tpu7x:2x2x1
jax: 0.10.0
libtpu: 0.0.40
codegen_flags: <defaults>
</compile_context>

<pallas_src>
import functools
import math

import jax
import jax.numpy as jnp
from jax.experimental import pallas as pl
from jax.experimental.pallas import tpu as pltpu


def _layernorm(h, eps=1e-5):
    mu = jnp.mean(h, axis=-1, keepdims=True)
    var = jnp.mean((h - mu) ** 2, axis=-1, keepdims=True)
    return (h - mu) * jax.lax.rsqrt(var + eps)


def dit_block_kernel(
    xq_ref, xk_ref, cond_ref,
    wq_ref, wk_ref, wv_ref, wo_ref,       # per-head: (H,D,dk) x3, (H,dk,D)
    w1_ref, b1_ref, w2_ref, b2_ref,        # FFN
    out_ref,
    q_s, k_s, v_s, m_s, l_s, acc_s,        # VMEM scratch
    *, num_heads, cache_kv, ff_chunk,
):
    f32 = jnp.float32
    tq = xq_ref.shape[1]
    tk = xk_ref.shape[1]

    qi = pl.program_id(1)
    ki = pl.program_id(2)
    nk = pl.num_programs(2)

    # ---- first KV step for this (batch, q-tile): project Q once, reset stats ----
    @pl.when(ki == 0)
    def _init():
        cond = cond_ref[0].astype(f32)                       # (6, D)
        shift_msa, scale1_msa = cond[0:1], cond[1:2]
        xq = xq_ref[0].astype(f32)
        hq = (_layernorm(xq) * scale1_msa + shift_msa).astype(wq_ref.dtype)
        for h in range(num_heads):                           # 1/sqrt(dk) folded into Wq
            q_s[h] = jnp.dot(hq, wq_ref[h], preferred_element_type=f32)
        m_s[...] = jnp.full(m_s.shape, -jnp.inf, f32)
        l_s[...] = jnp.zeros(l_s.shape, f32)
        acc_s[...] = jnp.zeros(acc_s.shape, f32)

    # ---- K/V projection of the current kv tile into slot `slot` of the cache ----
    def _project_kv(slot):
        cond = cond_ref[0].astype(f32)
        shift_msa, scale1_msa = cond[0:1], cond[1:2]
        xk = xk_ref[0].astype(f32)
        hk = (_layernorm(xk) * scale1_msa + shift_msa).astype(wk_ref.dtype)
        for h in range(num_heads):
            k_s[slot, h] = jnp.dot(hk, wk_ref[h], preferred_element_type=f32)
            v_s[slot, h] = jnp.dot(hk, wv_ref[h], preferred_element_type=f32)

    if cache_kv:
        # Fill the whole-sequence K/V cache once per batch, on the qi==0 sweep
        # (even for kv tiles that q-tile 0 does not attend to).
        @pl.when(qi == 0)
        def _fill_cache():
            _project_kv(ki)

    # ---- online-softmax update; skip KV tiles entirely above the diagonal ----
    q_last = (qi + 1) * tq - 1
    @pl.when(ki * tk <= q_last)
    def _attend():
        if cache_kv:
            slot = ki
        else:
            slot = 0
            _project_kv(0)
        k_t = k_s[slot]                                      # (H, tk, dk)
        v_t = v_s[slot]

        s = jnp.einsum("hqd,hkd->hqk", q_s[...], k_t,
                       preferred_element_type=f32)           # (H, tq, tk)
        q_pos = qi * tq + jax.lax.broadcasted_iota(jnp.int32, (1, tq, tk), 1)
        k_pos = ki * tk + jax.lax.broadcasted_iota(jnp.int32, (1, tq, tk), 2)
        s = jnp.where(q_pos >= k_pos, s, -1e30)

        m_new = jnp.maximum(m_s[...], s.max(axis=-1, keepdims=True))
        alpha = jnp.exp(m_s[...] - m_new)
        p = jnp.exp(s - m_new)
        l_s[...] = alpha * l_s[...] + p.sum(axis=-1, keepdims=True)
        acc_s[...] = alpha * acc_s[...] + jnp.einsum(
            "hqk,hkd->hqd", p, v_t, preferred_element_type=f32)
        m_s[...] = m_new

    # ---- last KV step: finish attention, residual, adaLN-modulated MLP ----
    @pl.when(ki == nk - 1)
    def _finalize():
        cond = cond_ref[0].astype(f32)
        gate_msa = cond[2:3]
        shift_mlp, scale1_mlp, gate_mlp = cond[3:4], cond[4:5], cond[5:6]

        o = acc_s[...] * pl.reciprocal(l_s[...], approx=True)   # (H, tq, dk)
        o = o.astype(wo_ref.dtype)
        attn = jnp.dot(o[0], wo_ref[0], preferred_element_type=f32)
        for h in range(1, num_heads):                            # per-head out-proj
            attn = attn + jnp.dot(o[h], wo_ref[h], preferred_element_type=f32)

        x_new = xq_ref[0].astype(f32) + gate_msa * attn

        h2 = (_layernorm(x_new) * scale1_mlp + shift_mlp).astype(w1_ref.dtype)
        dff = w1_ref.shape[1]
        n_chunks = dff // ff_chunk
        ff_acc = None
        for j in range(n_chunks):                                # chunked FFN
            sl = pl.ds(j * ff_chunk, ff_chunk)
            t = jnp.dot(h2, w1_ref[:, sl], preferred_element_type=f32)
            t = t + b1_ref[:, sl].astype(f32)
            t = t * jax.nn.sigmoid(t)                            # SiLU
            t = jnp.dot(t.astype(w2_ref.dtype), w2_ref[sl, :],
                        preferred_element_type=f32)
            ff_acc = t if ff_acc is None else ff_acc + t
        ff = ff_acc + b2_ref[...].astype(f32)

        out_ref[0] = (x_new + gate_mlp * ff).astype(out_ref.dtype)


def _pick_tile(s, cap=128):
    if s <= cap:
        return s
    for t in (cap, 64, 32, 16, 8):
        if s % t == 0:
            return t
    return s


def dit_block(x, c, params, *, num_heads, tq=None, tk=None, cache_kv=None):
    B, S, D = x.shape
    H = num_heads
    assert D % H == 0
    dk = D // H
    wc, bc, wq, wkv, wo, w1, b1, w2, b2 = params

    # ---- hoisted adaLN conditioning (M=1 matmul done once in XLA) ----
    cmod = jax.nn.silu(c.astype(jnp.float32)) @ wc.astype(jnp.float32) + bc[0].astype(jnp.float32)
    sh_msa, sc_msa, g_msa, sh_mlp, sc_mlp, g_mlp = jnp.split(cmod, 6, axis=-1)
    cond = jnp.stack([sh_msa, 1.0 + sc_msa, g_msa,
                      sh_mlp, 1.0 + sc_mlp, g_mlp], axis=1)          # (B, 6, D)
    cond = cond.astype(jnp.float32)

    # ---- per-head weight layouts; fold 1/sqrt(dk) into Wq; split Wkv ----
    inv_sqrt_dk = 1.0 / math.sqrt(dk)
    wq_r = (wq * inv_sqrt_dk).reshape(D, H, dk).transpose(1, 0, 2)   # (H, D, dk)
    wk_r = wkv[:, :D].reshape(D, H, dk).transpose(1, 0, 2)           # (H, D, dk)
    wv_r = wkv[:, D:].reshape(D, H, dk).transpose(1, 0, 2)           # (H, D, dk)
    wo_r = wo.reshape(H, dk, D)                                      # (H, dk, D)

    if tq is None:
        tq = _pick_tile(S)
    if tk is None:
        tk = _pick_tile(S)
    assert S % tq == 0 and S % tk == 0
    nq, nk = S // tq, S // tk

    # ---- decide whether the whole-sequence K/V cache fits in VMEM ----
    if cache_kv is None:
        kv_cache_bytes = 2 * nk * H * tk * max(dk, 128) * 4          # lane-padded
        cache_kv = (nq > 1) and (kv_cache_bytes <= 16 * 1024 * 1024)
    kv_slots = nk if cache_kv else 1

    # ---- FFN hidden-dim chunking (avoid a huge (tq, 4D) live intermediate) ----
    dff = w1.shape[1]
    if dff <= 512:
        ff_chunk = dff
    elif dff % 512 == 0:
        ff_chunk = 512
    elif dff % 256 == 0:
        ff_chunk = 256
    else:
        ff_chunk = dff

    def full(shape):
        n = len(shape)
        return pl.BlockSpec(shape, lambda b, qi, ki, _n=n: (0,) * _n)

    if cache_kv:
        # kv tile of x is only needed during the qi==0 cache-fill sweep; for
        # qi>0 keep the block index constant so it is not re-DMA'd from HBM.
        xk_spec = pl.BlockSpec(
            (1, tk, D), lambda b, qi, ki: (b, jnp.where(qi == 0, ki, 0), 0))
        dims = ("parallel", "arbitrary", "arbitrary")   # q axis sequential (cache dep)
    else:
        xk_spec = pl.BlockSpec((1, tk, D), lambda b, qi, ki: (b, ki, 0))
        dims = ("parallel", "parallel", "arbitrary")

    kernel = functools.partial(dit_block_kernel, num_heads=H,
                               cache_kv=cache_kv, ff_chunk=ff_chunk)

    return pl.pallas_call(
        kernel,
        out_shape=jax.ShapeDtypeStruct((B, S, D), x.dtype),
        grid_spec=pltpu.PrefetchScalarGridSpec(
            num_scalar_prefetch=0,
            grid=(B, nq, nk),
            in_specs=[
                pl.BlockSpec((1, tq, D), lambda b, qi, ki: (b, qi, 0)),   # x (q tile)
                xk_spec,                                                  # x (kv tile)
                pl.BlockSpec((1, 6, D), lambda b, qi, ki: (b, 0, 0)),     # adaLN cond
                full((H, D, dk)), full((H, D, dk)), full((H, D, dk)),     # Wq, Wk, Wv
                full((H, dk, D)),                                         # Wo
                full((D, dff)), full((1, dff)),                           # W1, b1
                full((dff, D)), full((1, D)),                             # W2, b2
            ],
            out_specs=pl.BlockSpec((1, tq, D), lambda b, qi, ki: (b, qi, 0)),
            scratch_shapes=[
                pltpu.VMEM((H, tq, dk), jnp.float32),            # Q
                pltpu.VMEM((kv_slots, H, tk, dk), jnp.float32),  # K cache
                pltpu.VMEM((kv_slots, H, tk, dk), jnp.float32),  # V cache
                pltpu.VMEM((H, tq, 1), jnp.float32),             # running max
                pltpu.VMEM((H, tq, 1), jnp.float32),             # running denom
                pltpu.VMEM((H, tq, dk), jnp.float32),            # running numerator
            ],
        ),
        compiler_params=pltpu.CompilerParams(
            dimension_semantics=dims,
            vmem_limit_bytes=64 * 1024 * 1024,
        ),
    )(x, x, cond, wq_r, wk_r, wv_r, wo_r, w1, b1, w2, b2)


# ---------------- pure-JAX reference (mirrors the PyTorch forward) -------------
def dit_block_ref(x, c, params, *, num_heads):
    wc, bc, wq, wkv, wo, w1, b1, w2, b2 = params
    B, S, D = x.shape
    d_k = D // num_heads

    cmod = jax.nn.silu(c) @ wc + bc[0]
    shift_msa, scale_msa, gate_msa, shift_mlp, scale_mlp, gate_mlp = jnp.split(cmod, 6, -1)

    def ln(h):
        mu = jnp.mean(h, -1, keepdims=True)
        var = jnp.mean((h - mu) ** 2, -1, keepdims=True)
        return (h - mu) / jnp.sqrt(var + 1e-5)

    def modulate(h, shift, scale):
        return h * (1 + scale[:, None, :]) + shift[:, None, :]

    h = modulate(ln(x), shift_msa, scale_msa)
    q = (h @ wq).reshape(B, S, num_heads, d_k).transpose(0, 2, 1, 3)
    kv = h @ wkv
    k = kv[..., :D].reshape(B, S, num_heads, d_k).transpose(0, 2, 1, 3)
    v = kv[..., D:].reshape(B, S, num_heads, d_k).transpose(0, 2, 1, 3)
    s = jnp.einsum("bhqd,bhkd->bhqk", q, k) / math.sqrt(d_k)
    mask = jnp.tril(jnp.ones((S, S), bool))
    s = jnp.where(mask, s, -1e30)
    p = jax.nn.softmax(s, -1)
    o = jnp.einsum("bhqk,bhkd->bhqd", p, v).transpose(0, 2, 1, 3).reshape(B, S, D)
    x = x + gate_msa[:, None, :] * (o @ wo)

    h = modulate(ln(x), shift_mlp, scale_mlp)
    ff = jax.nn.silu(h @ w1 + b1[0]) @ w2 + b2[0]
    return x + gate_mlp[:, None, :] * ff


if __name__ == "__main__":
    B, S, D, num_heads = 2, 16, 32, 4
    key = jax.random.PRNGKey(0)
    ks = jax.random.split(key, 12)

    x = jax.random.normal(ks[0], (B, S, D), jnp.float32)
    c = jax.random.normal(ks[1], (B, D), jnp.float32)

    def w(k, shape, scale=0.05):
        return scale * jax.random.normal(k, shape, jnp.float32)

    params = (
        w(ks[2], (D, 6 * D)), w(ks[3], (1, 6 * D)),                # c_transform
        w(ks[4], (D, D)), w(ks[5], (D, 2 * D)), w(ks[6], (D, D)),  # Wq, Wkv, Wo
        w(ks[7], (D, 4 * D)), w(ks[8], (1, 4 * D)),                # FFN linear_1
        w(ks[9], (4 * D, D)), w(ks[10], (1, D)),                   # FFN linear_2
    )

    ref = dit_block_ref(x, c, params, num_heads=num_heads)

    # tq=tk=8 -> grid (2, 2, 2): multi-tile online softmax, causal skip,
    # and the cross-q-tile K/V cache path.
    out = dit_block(x, c, params, num_heads=num_heads, tq=8, tk=8)
    out = jax.block_until_ready(out)
    assert out.shape == (B, S, D)
    err = float(jnp.max(jnp.abs(out - ref)))
    assert jnp.allclose(out, ref, atol=2e-3, rtol=2e-3), f"cached path mismatch: {err}"

    # Also exercise the no-cache fallback path (recompute K/V per q tile).
    out2 = dit_block(x, c, params, num_heads=num_heads, tq=8, tk=8, cache_kv=False)
    out2 = jax.block_until_ready(out2)
    err2 = float(jnp.max(jnp.abs(out2 - ref)))
    assert jnp.allclose(out2, ref, atol=2e-3, rtol=2e-3), f"fallback path mismatch: {err2}"

    print("KERNEL_OK")
</pallas_src>

<mosaic_0001>
module attributes {stable_mosaic.version = 11 : i64} {
  func.func @dit_block_kernel(%arg0: i32, %arg1: i32, %arg2: i32, %arg3: memref<1x8x32xf32, #tpu.memory_space<vmem>>, %arg4: memref<1x8x32xf32, #tpu.memory_space<vmem>>, %arg5: memref<1x6x32xf32, #tpu.memory_space<vmem>>, %arg6: memref<4x32x8xf32, #tpu.memory_space<vmem>>, %arg7: memref<4x32x8xf32, #tpu.memory_space<vmem>>, %arg8: memref<4x32x8xf32, #tpu.memory_space<vmem>>, %arg9: memref<4x8x32xf32, #tpu.memory_space<vmem>>, %arg10: memref<32x128xf32, #tpu.memory_space<vmem>>, %arg11: memref<1x128xf32, #tpu.memory_space<vmem>>, %arg12: memref<128x32xf32, #tpu.memory_space<vmem>>, %arg13: memref<1x32xf32, #tpu.memory_space<vmem>>, %arg14: memref<1x8x32xf32, #tpu.memory_space<vmem>>, %arg15: memref<4x8x8xf32, #tpu.memory_space<vmem>>, %arg16: memref<2x4x8x8xf32, #tpu.memory_space<vmem>>, %arg17: memref<2x4x8x8xf32, #tpu.memory_space<vmem>>, %arg18: memref<4x8x1xf32, #tpu.memory_space<vmem>>, %arg19: memref<4x8x1xf32, #tpu.memory_space<vmem>>, %arg20: memref<4x8x8xf32, #tpu.memory_space<vmem>>) attributes {dimension_semantics = [#tpu.dimension_semantics<parallel>, #tpu.dimension_semantics<arbitrary>, #tpu.dimension_semantics<arbitrary>], iteration_bounds = array<i64: 2, 2, 2>, scalar_prefetch = 0 : i64, scratch_operands = 6 : i64, tpu.core_type = #tpu.core_type<tc>, window_params = [{transform_indices = @transform_0, window_bounds = array<i64: 1, 8, 32>}, {transform_indices = @transform_1, window_bounds = array<i64: 1, 8, 32>}, {transform_indices = @transform_2, window_bounds = array<i64: 1, 6, 32>}, {pipeline_mode = #tpu.pipeline_mode<synchronous>, transform_indices = @transform_3, window_bounds = array<i64: 4, 32, 8>}, {pipeline_mode = #tpu.pipeline_mode<synchronous>, transform_indices = @transform_4, window_bounds = array<i64: 4, 32, 8>}, {pipeline_mode = #tpu.pipeline_mode<synchronous>, transform_indices = @transform_5, window_bounds = array<i64: 4, 32, 8>}, {pipeline_mode = #tpu.pipeline_mode<synchronous>, transform_indices = @transform_6, window_bounds = array<i64: 4, 8, 32>}, {pipeline_mode = #tpu.pipeline_mode<synchronous>, transform_indices = @transform_7, window_bounds = array<i64: 32, 128>}, {pipeline_mode = #tpu.pipeline_mode<synchronous>, transform_indices = @transform_8, window_bounds = array<i64: 1, 128>}, {pipeline_mode = #tpu.pipeline_mode<synchronous>, transform_indices = @transform_9, window_bounds = array<i64: 128, 32>}, {pipeline_mode = #tpu.pipeline_mode<synchronous>, transform_indices = @transform_10, window_bounds = array<i64: 1, 32>}, {transform_indices = @transform_11, window_bounds = array<i64: 1, 8, 32>}]} {
    %c0_i32 = arith.constant 0 : i32
    %0 = arith.cmpi eq, %arg2, %c0_i32 : i32
    %1 = arith.extui %0 : i1 to i32
    %c0_i32_0 = arith.constant 0 : i32
    %2 = arith.cmpi ne, %1, %c0_i32_0 : i32
    scf.if %2 {
      %c0 = arith.constant 0 : index
      %c0_8 = arith.constant 0 : index
      %c0_9 = arith.constant 0 : index
      %16 = vector.load %arg5[%c0, %c0_8, %c0_9] : memref<1x6x32xf32, #tpu.memory_space<vmem>>, vector<1x6x32xf32>
      %17 = vector.shape_cast %16 : vector<1x6x32xf32> to vector<6x32xf32>
      %18 = vector.extract_strided_slice %17 {offsets = [0, 0], sizes = [1, 32], strides = [1, 1]} : vector<6x32xf32> to vector<1x32xf32>
      %19 = vector.extract_strided_slice %17 {offsets = [1, 0], sizes = [1, 32], strides = [1, 1]} : vector<6x32xf32> to vector<1x32xf32>
      %c0_10 = arith.constant 0 : index
      %c0_11 = arith.constant 0 : index
      %c0_12 = arith.constant 0 : index
      %20 = vector.load %arg3[%c0_10, %c0_11, %c0_12] : memref<1x8x32xf32, #tpu.memory_space<vmem>>, vector<1x8x32xf32>
      %21 = vector.shape_cast %20 : vector<1x8x32xf32> to vector<8x32xf32>
      %cst = arith.constant dense<0.000000e+00> : vector<8xf32>
      %22 = vector.multi_reduction <add>, %21, %cst [1] : vector<8x32xf32> to vector<8xf32>
      %23 = vector.shape_cast %22 : vector<8xf32> to vector<8x1xf32>
      %cst_13 = arith.constant 3.200000e+01 : f32
      %24 = vector.broadcast %cst_13 : f32 to vector<8x1xf32>
      %25 = arith.divf %23, %24 : vector<8x1xf32>
      %26 = vector.broadcast %25 : vector<8x1xf32> to vector<8x32xf32>
      %27 = arith.subf %21, %26 : vector<8x32xf32>
      %28 = arith.mulf %27, %27 : vector<8x32xf32>
      %cst_14 = arith.constant dense<0.000000e+00> : vector<8xf32>
      %29 = vector.multi_reduction <add>, %28, %cst_14 [1] : vector<8x32xf32> to vector<8xf32>
      %30 = vector.shape_cast %29 : vector<8xf32> to vector<8x1xf32>
      %cst_15 = arith.constant 3.200000e+01 : f32
      %31 = vector.broadcast %cst_15 : f32 to vector<8x1xf32>
      %32 = arith.divf %30, %31 : vector<8x1xf32>
      %33 = vector.broadcast %25 : vector<8x1xf32> to vector<8x32xf32>
      %34 = arith.subf %21, %33 : vector<8x32xf32>
      %cst_16 = arith.constant 9.99999974E-6 : f32
      %35 = vector.broadcast %cst_16 : f32 to vector<8x1xf32>
      %36 = arith.addf %32, %35 : vector<8x1xf32>
      %37 = math.rsqrt %36 : vector<8x1xf32>
      %38 = vector.broadcast %37 : vector<8x1xf32> to vector<8x32xf32>
      %39 = arith.mulf %34, %38 : vector<8x32xf32>
      %40 = vector.broadcast %19 : vector<1x32xf32> to vector<8x32xf32>
      %41 = arith.mulf %39, %40 : vector<8x32xf32>
      %42 = vector.broadcast %18 : vector<1x32xf32> to vector<8x32xf32>
      %43 = arith.addf %41, %42 : vector<8x32xf32>
      %c0_17 = arith.constant 0 : index
      %c0_18 = arith.constant 0 : index
      %c0_19 = arith.constant 0 : index
      %44 = vector.load %arg6[%c0_17, %c0_18, %c0_19] : memref<4x32x8xf32, #tpu.memory_space<vmem>>, vector<1x32x8xf32>
      %45 = vector.shape_cast %44 : vector<1x32x8xf32> to vector<32x8xf32>
      %cst_20 = arith.constant dense<0.000000e+00> : vector<8x8xf32>
      %46 = tpu.matmul %43, %45, %cst_20 {dimension_numbers = #tpu.dot_dimension_numbers<[1], [0], [0], [1], [0, 0, 1, 1], [], []>} : vector<8x32xf32>, vector<32x8xf32>, vector<8x8xf32> -> vector<8x8xf32>
      %c0_21 = arith.constant 0 : index
      %c0_22 = arith.constant 0 : index
      %c0_23 = arith.constant 0 : index
      %47 = vector.load %arg15[%c0_21, %c0_22, %c0_23] : memref<4x8x8xf32, #tpu.memory_space<vmem>>, vector<1x8x8xf32>
      %48 = vector.shape_cast %47 : vector<1x8x8xf32> to vector<8x8xf32>
      %49 = vector.shape_cast %46 : vector<8x8xf32> to vector<1x8x8xf32>
      tpu.vector_store %arg15[%c0_21, %c0_22, %c0_23], %49 {strides = array<i32>} : memref<4x8x8xf32, #tpu.memory_space<vmem>>, vector<1x8x8xf32>,
      %c1 = arith.constant 1 : index
      %c0_24 = arith.constant 0 : index
      %c0_25 = arith.constant 0 : index
      %50 = vector.load %arg6[%c1, %c0_24, %c0_25] : memref<4x32x8xf32, #tpu.memory_space<vmem>>, vector<1x32x8xf32>
      %51 = vector.shape_cast %50 : vector<1x32x8xf32> to vector<32x8xf32>
      %cst_26 = arith.constant dense<0.000000e+00> : vector<8x8xf32>
      %52 = tpu.matmul %43, %51, %cst_26 {dimension_numbers = #tpu.dot_dimension_numbers<[1], [0], [0], [1], [0, 0, 1, 1], [], []>} : vector<8x32xf32>, vector<32x8xf32>, vector<8x8xf32> -> vector<8x8xf32>
      %c1_27 = arith.constant 1 : index
      %c0_28 = arith.constant 0 : index
      %c0_29 = arith.constant 0 : index
      %53 = vector.load %arg15[%c1_27, %c0_28, %c0_29] : memref<4x8x8xf32, #tpu.memory_space<vmem>>, vector<1x8x8xf32>
      %54 = vector.shape_cast %53 : vector<1x8x8xf32> to vector<8x8xf32>
      %55 = vector.shape_cast %52 : vector<8x8xf32> to vector<1x8x8xf32>
      tpu.vector_store %arg15[%c1_27, %c0_28, %c0_29], %55 {strides = array<i32>} : memref<4x8x8xf32, #tpu.memory_space<vmem>>, vector<1x8x8xf32>,
      %c2 = arith.constant 2 : index
      %c0_30 = arith.constant 0 : index
      %c0_31 = arith.constant 0 : index
      %56 = vector.load %arg6[%c2, %c0_30, %c0_31] : memref<4x32x8xf32, #tpu.memory_space<vmem>>, vector<1x32x8xf32>
      %57 = vector.shape_cast %56 : vector<1x32x8xf32> to vector<32x8xf32>
      %cst_32 = arith.constant dense<0.000000e+00> : vector<8x8xf32>
      %58 = tpu.matmul %43, %57, %cst_32 {dimension_numbers = #tpu.dot_dimension_numbers<[1], [0], [0], [1], [0, 0, 1, 1], [], []>} : vector<8x32xf32>, vector<32x8xf32>, vector<8x8xf32> -> vector<8x8xf32>
      %c2_33 = arith.constant 2 : index
      %c0_34 = arith.constant 0 : index
      %c0_35 = arith.constant 0 : index
      %59 = vector.load %arg15[%c2_33, %c0_34, %c0_35] : memref<4x8x8xf32, #tpu.memory_space<vmem>>, vector<1x8x8xf32>
      %60 = vector.shape_cast %59 : vector<1x8x8xf32> to vector<8x8xf32>
      %61 = vector.shape_cast %58 : vector<8x8xf32> to vector<1x8x8xf32>
      tpu.vector_store %arg15[%c2_33, %c0_34, %c0_35], %61 {strides = array<i32>} : memref<4x8x8xf32, #tpu.memory_space<vmem>>, vector<1x8x8xf32>,
      %c3 = arith.constant 3 : index
      %c0_36 = arith.constant 0 : index
      %c0_37 = arith.constant 0 : index
      %62 = vector.load %arg6[%c3, %c0_36, %c0_37] : memref<4x32x8xf32, #tpu.memory_space<vmem>>, vector<1x32x8xf32>
      %63 = vector.shape_cast %62 : vector<1x32x8xf32> to vector<32x8xf32>
      %cst_38 = arith.constant dense<0.000000e+00> : vector<8x8xf32>
      %64 = tpu.matmul %43, %63, %cst_38 {dimension_numbers = #tpu.dot_dimension_numbers<[1], [0], [0], [1], [0, 0, 1, 1], [], []>} : vector<8x32xf32>, vector<32x8xf32>, vector<8x8xf32> -> vector<8x8xf32>
      %c3_39 = arith.constant 3 : index
      %c0_40 = arith.constant 0 : index
      %c0_41 = arith.constant 0 : index
      %65 = vector.load %arg15[%c3_39, %c0_40, %c0_41] : memref<4x8x8xf32, #tpu.memory_space<vmem>>, vector<1x8x8xf32>
      %66 = vector.shape_cast %65 : vector<1x8x8xf32> to vector<8x8xf32>
      %67 = vector.shape_cast %64 : vector<8x8xf32> to vector<1x8x8xf32>
      tpu.vector_store %arg15[%c3_39, %c0_40, %c0_41], %67 {strides = array<i32>} : memref<4x8x8xf32, #tpu.memory_space<vmem>>, vector<1x8x8xf32>,
      %cst_42 = arith.constant 0xFF800000 : f32
      %68 = vector.broadcast %cst_42 : f32 to vector<4x8x1xf32>
      %c0_43 = arith.constant 0 : index
      %c0_44 = arith.constant 0 : index
      %c0_45 = arith.constant 0 : index
      %69 = vector.load %arg18[%c0_43, %c0_44, %c0_45] : memref<4x8x1xf32, #tpu.memory_space<vmem>>, vector<4x8x1xf32>
      tpu.vector_store %arg18[%c0_43, %c0_44, %c0_45], %68 {strides = array<i32>} : memref<4x8x1xf32, #tpu.memory_space<vmem>>, vector<4x8x1xf32>,
      %cst_46 = arith.constant 0.000000e+00 : f32
      %70 = vector.broadcast %cst_46 : f32 to vector<4x8x1xf32>
      %c0_47 = arith.constant 0 : index
      %c0_48 = arith.constant 0 : index
      %c0_49 = arith.constant 0 : index
      %71 = vector.load %arg19[%c0_47, %c0_48, %c0_49] : memref<4x8x1xf32, #tpu.memory_space<vmem>>, vector<4x8x1xf32>
      tpu.vector_store %arg19[%c0_47, %c0_48, %c0_49], %70 {strides = array<i32>} : memref<4x8x1xf32, #tpu.memory_space<vmem>>, vector<4x8x1xf32>,
      %cst_50 = arith.constant 0.000000e+00 : f32
      %72 = vector.broadcast %cst_50 : f32 to vector<4x8x8xf32>
      %c0_51 = arith.constant 0 : index
      %c0_52 = arith.constant 0 : index
      %c0_53 = arith.constant 0 : index
      %73 = vector.load %arg20[%c0_51, %c0_52, %c0_53] : memref<4x8x8xf32, #tpu.memory_space<vmem>>, vector<4x8x8xf32>
      tpu.vector_store %arg20[%c0_51, %c0_52, %c0_53], %72 {strides = array<i32>} : memref<4x8x8xf32, #tpu.memory_space<vmem>>, vector<4x8x8xf32>,
    } else {
    }
    %c0_i32_1 = arith.constant 0 : i32
    %3 = arith.cmpi eq, %arg1, %c0_i32_1 : i32
    %4 = arith.extui %3 : i1 to i32
    %c0_i32_2 = arith.constant 0 : i32
    %5 = arith.cmpi ne, %4, %c0_i32_2 : i32
    scf.if %5 {
      %c0 = arith.constant 0 : index
      %c0_8 = arith.constant 0 : index
      %c0_9 = arith.constant 0 : index
      %16 = vector.load %arg5[%c0, %c0_8, %c0_9] : memref<1x6x32xf32, #tpu.memory_space<vmem>>, vector<1x6x32xf32>
      %17 = vector.shape_cast %16 : vector<1x6x32xf32> to vector<6x32xf32>
      %18 = vector.extract_strided_slice %17 {offsets = [0, 0], sizes = [1, 32], strides = [1, 1]} : vector<6x32xf32> to vector<1x32xf32>
      %19 = vector.extract_strided_slice %17 {offsets = [1, 0], sizes = [1, 32], strides = [1, 1]} : vector<6x32xf32> to vector<1x32xf32>
      %c0_10 = arith.constant 0 : index
      %c0_11 = arith.constant 0 : index
      %c0_12 = arith.constant 0 : index
      %20 = vector.load %arg4[%c0_10, %c0_11, %c0_12] : memref<1x8x32xf32, #tpu.memory_space<vmem>>, vector<1x8x32xf32>
      %21 = vector.shape_cast %20 : vector<1x8x32xf32> to vector<8x32xf32>
      %cst = arith.constant dense<0.000000e+00> : vector<8xf32>
      %22 = vector.multi_reduction <add>, %21, %cst [1] : vector<8x32xf32> to vector<8xf32>
      %23 = vector.shape_cast %22 : vector<8xf32> to vector<8x1xf32>
      %cst_13 = arith.constant 3.200000e+01 : f32
      %24 = vector.broadcast %cst_13 : f32 to vector<8x1xf32>
      %25 = arith.divf %23, %24 : vector<8x1xf32>
      %26 = vector.broadcast %25 : vector<8x1xf32> to vector<8x32xf32>
      %27 = arith.subf %21, %26 : vector<8x32xf32>
      %28 = arith.mulf %27, %27 : vector<8x32xf32>
      %cst_14 = arith.constant dense<0.000000e+00> : vector<8xf32>
      %29 = vector.multi_reduction <add>, %28, %cst_14 [1] : vector<8x32xf32> to vector<8xf32>
      %30 = vector.shape_cast %29 : vector<8xf32> to vector<8x1xf32>
      %cst_15 = arith.constant 3.200000e+01 : f32
      %31 = vector.broadcast %cst_15 : f32 to vector<8x1xf32>
      %32 = arith.divf %30, %31 : vector<8x1xf32>
      %33 = vector.broadcast %25 : vector<8x1xf32> to vector<8x32xf32>
      %34 = arith.subf %21, %33 : vector<8x32xf32>
      %cst_16 = arith.constant 9.99999974E-6 : f32
      %35 = vector.broadcast %cst_16 : f32 to vector<8x1xf32>
      %36 = arith.addf %32, %35 : vector<8x1xf32>
      %37 = math.rsqrt %36 : vector<8x1xf32>
      %38 = vector.broadcast %37 : vector<8x1xf32> to vector<8x32xf32>
      %39 = arith.mulf %34, %38 : vector<8x32xf32>
      %40 = vector.broadcast %19 : vector<1x32xf32> to vector<8x32xf32>
      %41 = arith.mulf %39, %40 : vector<8x32xf32>
      %42 = vector.broadcast %18 : vector<1x32xf32> to vector<8x32xf32>
      %43 = arith.addf %41, %42 : vector<8x32xf32>
      %c0_17 = arith.constant 0 : index
      %c0_18 = arith.constant 0 : index
      %c0_19 = arith.constant 0 : index
      %44 = vector.load %arg7[%c0_17, %c0_18, %c0_19] : memref<4x32x8xf32, #tpu.memory_space<vmem>>, vector<1x32x8xf32>
      %45 = vector.shape_cast %44 : vector<1x32x8xf32> to vector<32x8xf32>
      %cst_20 = arith.constant dense<0.000000e+00> : vector<8x8xf32>
      %46 = tpu.matmul %43, %45, %cst_20 {dimension_numbers = #tpu.dot_dimension_numbers<[1], [0], [0], [1], [0, 0, 1, 1], [], []>} : vector<8x32xf32>, vector<32x8xf32>, vector<8x8xf32> -> vector<8x8xf32>
      %47 = arith.index_cast %arg2 : i32 to index
      %c0_21 = arith.constant 0 : index
      %c0_22 = arith.constant 0 : index
      %c0_23 = arith.constant 0 : index
      %48 = vector.load %arg16[%47, %c0_21, %c0_22, %c0_23] : memref<2x4x8x8xf32, #tpu.memory_space<vmem>>, vector<1x1x8x8xf32>
      %49 = vector.shape_cast %48 : vector<1x1x8x8xf32> to vector<8x8xf32>
      %50 = vector.shape_cast %46 : vector<8x8xf32> to vector<1x1x8x8xf32>
      tpu.vector_store %arg16[%47, %c0_21, %c0_22, %c0_23], %50 {strides = array<i32>} : memref<2x4x8x8xf32, #tpu.memory_space<vmem>>, vector<1x1x8x8xf32>,
      %c0_24 = arith.constant 0 : index
      %c0_25 = arith.constant 0 : index
      %c0_26 = arith.constant 0 : index
      %51 = vector.load %arg8[%c0_24, %c0_25, %c0_26] : memref<4x32x8xf32, #tpu.memory_space<vmem>>, vector<1x32x8xf32>
      %52 = vector.shape_cast %51 : vector<1x32x8xf32> to vector<32x8xf32>
      %cst_27 = arith.constant dense<0.000000e+00> : vector<8x8xf32>
      %53 = tpu.matmul %43, %52, %cst_27 {dimension_numbers = #tpu.dot_dimension_numbers<[1], [0], [0], [1], [0, 0, 1, 1], [], []>} : vector<8x32xf32>, vector<32x8xf32>, vector<8x8xf32> -> vector<8x8xf32>
      %54 = arith.index_cast %arg2 : i32 to index
      %c0_28 = arith.constant 0 : index
      %c0_29 = arith.constant 0 : index
      %c0_30 = arith.constant 0 : index
      %55 = vector.load %arg17[%54, %c0_28, %c0_29, %c0_30] : memref<2x4x8x8xf32, #tpu.memory_space<vmem>>, vector<1x1x8x8xf32>
      %56 = vector.shape_cast %55 : vector<1x1x8x8xf32> to vector<8x8xf32>
      %57 = vector.shape_cast %53 : vector<8x8xf32> to vector<1x1x8x8xf32>
      tpu.vector_store %arg17[%54, %c0_28, %c0_29, %c0_30], %57 {strides = array<i32>} : memref<2x4x8x8xf32, #tpu.memory_space<vmem>>, vector<1x1x8x8xf32>,
      %c1 = arith.constant 1 : index
      %c0_31 = arith.constant 0 : index
      %c0_32 = arith.constant 0 : index
      %58 = vector.load %arg7[%c1, %c0_31, %c0_32] : memref<4x32x8xf32, #tpu.memory_space<vmem>>, vector<1x32x8xf32>
      %59 = vector.shape_cast %58 : vector<1x32x8xf32> to vector<32x8xf32>
      %cst_33 = arith.constant dense<0.000000e+00> : vector<8x8xf32>
      %60 = tpu.matmul %43, %59, %cst_33 {dimension_numbers = #tpu.dot_dimension_numbers<[1], [0], [0], [1], [0, 0, 1, 1], [], []>} : vector<8x32xf32>, vector<32x8xf32>, vector<8x8xf32> -> vector<8x8xf32>
      %61 = arith.index_cast %arg2 : i32 to index
      %c1_34 = arith.constant 1 : index
      %c0_35 = arith.constant 0 : index
      %c0_36 = arith.constant 0 : index
      %62 = vector.load %arg16[%61, %c1_34, %c0_35, %c0_36] : memref<2x4x8x8xf32, #tpu.memory_space<vmem>>, vector<1x1x8x8xf32>
      %63 = vector.shape_cast %62 : vector<1x1x8x8xf32> to vector<8x8xf32>
      %64 = vector.shape_cast %60 : vector<8x8xf32> to vector<1x1x8x8xf32>
      tpu.vector_store %arg16[%61, %c1_34, %c0_35, %c0_36], %64 {strides = array<i32>} : memref<2x4x8x8xf32, #tpu.memory_space<vmem>>, vector<1x1x8x8xf32>,
      %c1_37 = arith.constant 1 : index
      %c0_38 = arith.constant 0 : index
      %c0_39 = arith.constant 0 : index
      %65 = vector.load %arg8[%c1_37, %c0_38, %c0_39] : memref<4x32x8xf32, #tpu.memory_space<vmem>>, vector<1x32x8xf32>
      %66 = vector.shape_cast %65 : vector<1x32x8xf32> to vector<32x8xf32>
      %cst_40 = arith.constant dense<0.000000e+00> : vector<8x8xf32>
      %67 = tpu.matmul %43, %66, %cst_40 {dimension_numbers = #tpu.dot_dimension_numbers<[1], [0], [0], [1], [0, 0, 1, 1], [], []>} : vector<8x32xf32>, vector<32x8xf32>, vector<8x8xf32> -> vector<8x8xf32>
      %68 = arith.index_cast %arg2 : i32 to index
      %c1_41 = arith.constant 1 : index
      %c0_42 = arith.constant 0 : index
      %c0_43 = arith.constant 0 : index
      %69 = vector.load %arg17[%68, %c1_41, %c0_42, %c0_43] : memref<2x4x8x8xf32, #tpu.memory_space<vmem>>, vector<1x1x8x8xf32>
      %70 = vector.shape_cast %69 : vector<1x1x8x8xf32> to vector<8x8xf32>
      %71 = vector.shape_cast %67 : vector<8x8xf32> to vector<1x1x8x8xf32>
      tpu.vector_store %arg17[%68, %c1_41, %c0_42, %c0_43], %71 {strides = array<i32>} : memref<2x4x8x8xf32, #tpu.memory_space<vmem>>, vector<1x1x8x8xf32>,
      %c2 = arith.constant 2 : index
      %c0_44 = arith.constant 0 : index
      %c0_45 = arith.constant 0 : index
      %72 = vector.load %arg7[%c2, %c0_44, %c0_45] : memref<4x32x8xf32, #tpu.memory_space<vmem>>, vector<1x32x8xf32>
      %73 = vector.shape_cast %72 : vector<1x32x8xf32> to vector<32x8xf32>
      %cst_46 = arith.constant dense<0.000000e+00> : vector<8x8xf32>
      %74 = tpu.matmul %43, %73, %cst_46 {dimension_numbers = #tpu.dot_dimension_numbers<[1], [0], [0], [1], [0, 0, 1, 1], [], []>} : vector<8x32xf32>, vector<32x8xf32>, vector<8x8xf32> -> vector<8x8xf32>
      %75 = arith.index_cast %arg2 : i32 to index
      %c2_47 = arith.constant 2 : index
      %c0_48 = arith.constant 0 : index
      %c0_49 = arith.constant 0 : index
      %76 = vector.load %arg16[%75, %c2_47, %c0_48, %c0_49] : memref<2x4x8x8xf32, #tpu.memory_space<vmem>>, vector<1x1x8x8xf32>
      %77 = vector.shape_cast %76 : vector<1x1x8x8xf32> to vector<8x8xf32>
      %78 = vector.shape_cast %74 : vector<8x8xf32> to vector<1x1x8x8xf32>
      tpu.vector_store %arg16[%75, %c2_47, %c0_48, %c0_49], %78 {strides = array<i32>} : memref<2x4x8x8xf32, #tpu.memory_space<vmem>>, vector<1x1x8x8xf32>,
      %c2_50 = arith.constant 2 : index
      %c0_51 = arith.constant 0 : index
      %c0_52 = arith.constant 0 : index
      %79 = vector.load %arg8[%c2_50, %c0_51, %c0_52] : memref<4x32x8xf32, #tpu.memory_space<vmem>>, vector<1x32x8xf32>
      %80 = vector.shape_cast %79 : vector<1x32x8xf32> to vector<32x8xf32>
      %cst_53 = arith.constant dense<0.000000e+00> : vector<8x8xf32>
      %81 = tpu.matmul %43, %80, %cst_53 {dimension_numbers = #tpu.dot_dimension_numbers<[1], [0], [0], [1], [0, 0, 1, 1], [], []>} : vector<8x32xf32>, vector<32x8xf32>, vector<8x8xf32> -> vector<8x8xf32>
      %82 = arith.index_cast %arg2 : i32 to index
      %c2_54 = arith.constant 2 : index
      %c0_55 = arith.constant 0 : index
      %c0_56 = arith.constant 0 : index
      %83 = vector.load %arg17[%82, %c2_54, %c0_55, %c0_56] : memref<2x4x8x8xf32, #tpu.memory_space<vmem>>, vector<1x1x8x8xf32>
      %84 = vector.shape_cast %83 : vector<1x1x8x8xf32> to vector<8x8xf32>
      %85 = vector.shape_cast %81 : vector<8x8xf32> to vector<1x1x8x8xf32>
      tpu.vector_store %arg17[%82, %c2_54, %c0_55, %c0_56], %85 {strides = array<i32>} : memref<2x4x8x8xf32, #tpu.memory_space<vmem>>, vector<1x1x8x8xf32>,
      %c3 = arith.constant 3 : index
      %c0_57 = arith.constant 0 : index
      %c0_58 = arith.constant 0 : index
      %86 = vector.load %arg7[%c3, %c0_57, %c0_58] : memref<4x32x8xf32, #tpu.memory_space<vmem>>, vector<1x32x8xf32>
      %87 = vector.shape_cast %86 : vector<1x32x8xf32> to vector<32x8xf32>
      %cst_59 = arith.constant dense<0.000000e+00> : vector<8x8xf32>
      %88 = tpu.matmul %43, %87, %cst_59 {dimension_numbers = #tpu.dot_dimension_numbers<[1], [0], [0], [1], [0, 0, 1, 1], [], []>} : vector<8x32xf32>, vector<32x8xf32>, vector<8x8xf32> -> vector<8x8xf32>
      %89 = arith.index_cast %arg2 : i32 to index
      %c3_60 = arith.constant 3 : index
      %c0_61 = arith.constant 0 : index
      %c0_62 = arith.constant 0 : index
      %90 = vector.load %arg16[%89, %c3_60, %c0_61, %c0_62] : memref<2x4x8x8xf32, #tpu.memory_space<vmem>>, vector<1x1x8x8xf32>
      %91 = vector.shape_cast %90 : vector<1x1x8x8xf32> to vector<8x8xf32>
      %92 = vector.shape_cast %88 : vector<8x8xf32> to vector<1x1x8x8xf32>
      tpu.vector_store %arg16[%89, %c3_60, %c0_61, %c0_62], %92 {strides = array<i32>} : memref<2x4x8x8xf32, #tpu.memory_space<vmem>>, vector<1x1x8x8xf32>,
      %c3_63 = arith.constant 3 : index
      %c0_64 = arith.constant 0 : index
      %c0_65 = arith.constant 0 : index
      %93 = vector.load %arg8[%c3_63, %c0_64, %c0_65] : memref<4x32x8xf32, #tpu.memory_space<vmem>>, vector<1x32x8xf32>
      %94 = vector.shape_cast %93 : vector<1x32x8xf32> to vector<32x8xf32>
      %cst_66 = arith.constant dense<0.000000e+00> : vector<8x8xf32>
      %95 = tpu.matmul %43, %94, %cst_66 {dimension_numbers = #tpu.dot_dimension_numbers<[1], [0], [0], [1], [0, 0, 1, 1], [], []>} : vector<8x32xf32>, vector<32x8xf32>, vector<8x8xf32> -> vector<8x8xf32>
      %96 = arith.index_cast %arg2 : i32 to index
      %c3_67 = arith.constant 3 : index
      %c0_68 = arith.constant 0 : index
      %c0_69 = arith.constant 0 : index
      %97 = vector.load %arg17[%96, %c3_67, %c0_68, %c0_69] : memref<2x4x8x8xf32, #tpu.memory_space<vmem>>, vector<1x1x8x8xf32>
      %98 = vector.shape_cast %97 : vector<1x1x8x8xf32> to vector<8x8xf32>
      %99 = vector.shape_cast %95 : vector<8x8xf32> to vector<1x1x8x8xf32>
      tpu.vector_store %arg17[%96, %c3_67, %c0_68, %c0_69], %99 {strides = array<i32>} : memref<2x4x8x8xf32, #tpu.memory_space<vmem>>, vector<1x1x8x8xf32>,
    } else {
    }
    %c1_i32 = arith.constant 1 : i32
    %6 = arith.addi %arg1, %c1_i32 : i32
    %c8_i32 = arith.constant 8 : i32
    %7 = arith.muli %6, %c8_i32 : i32
    %c1_i32_3 = arith.constant 1 : i32
    %8 = arith.subi %7, %c1_i32_3 : i32
    %c8_i32_4 = arith.constant 8 : i32
    %9 = arith.muli %arg2, %c8_i32_4 : i32
    %10 = arith.cmpi sle, %9, %8 : i32
    %11 = arith.extui %10 : i1 to i32
    %c0_i32_5 = arith.constant 0 : i32
    %12 = arith.cmpi ne, %11, %c0_i32_5 : i32
    scf.if %12 {
      %16 = arith.index_cast %arg2 : i32 to index
      %c0 = arith.constant 0 : index
      %c0_8 = arith.constant 0 : index
      %c0_9 = arith.constant 0 : index
      %17 = vector.load %arg16[%16, %c0, %c0_8, %c0_9] : memref<2x4x8x8xf32, #tpu.memory_space<vmem>>, vector<1x4x8x8xf32>
      %18 = vector.shape_cast %17 : vector<1x4x8x8xf32> to vector<4x8x8xf32>
      %19 = arith.index_cast %arg2 : i32 to index
      %c0_10 = arith.constant 0 : index
      %c0_11 = arith.constant 0 : index
      %c0_12 = arith.constant 0 : index
      %20 = vector.load %arg17[%19, %c0_10, %c0_11, %c0_12] : memref<2x4x8x8xf32, #tpu.memory_space<vmem>>, vector<1x4x8x8xf32>
      %21 = vector.shape_cast %20 : vector<1x4x8x8xf32> to vector<4x8x8xf32>
      %c0_13 = arith.constant 0 : index
      %c0_14 = arith.constant 0 : index
      %c0_15 = arith.constant 0 : index
      %22 = vector.load %arg15[%c0_13, %c0_14, %c0_15] : memref<4x8x8xf32, #tpu.memory_space<vmem>>, vector<4x8x8xf32>
      "tpu.trace_start"() <{level = 10 : i32, message = "hqd,hkd->hqk"}> : () -> ()
      %cst = arith.constant dense<0.000000e+00> : vector<4x8x8xf32>
      %23 = tpu.matmul %22, %18, %cst {dimension_numbers = #tpu.dot_dimension_numbers<[2], [2], [1], [1], [0, 0, 0, 1, 1, 1], [0], [0]>} : vector<4x8x8xf32>, vector<4x8x8xf32>, vector<4x8x8xf32> -> vector<4x8x8xf32>
      "tpu.trace_stop"() : () -> ()
      %c8_i32_16 = arith.constant 8 : i32
      %24 = arith.muli %arg1, %c8_i32_16 : i32
      %25 = tpu.iota {dimensions = array<i32: 1>} : vector<1x8x8xi32>
      %26 = vector.broadcast %24 : i32 to vector<1x8x8xi32>
      %27 = arith.addi %26, %25 : vector<1x8x8xi32>
      %c8_i32_17 = arith.constant 8 : i32
      %28 = arith.muli %arg2, %c8_i32_17 : i32
      %29 = tpu.iota {dimensions = array<i32: 2>} : vector<1x8x8xi32>
      %30 = vector.broadcast %28 : i32 to vector<1x8x8xi32>
      %31 = arith.addi %30, %29 : vector<1x8x8xi32>
      %32 = arith.cmpi sge, %27, %31 : vector<1x8x8xi32>
      %cst_18 = arith.constant -1.000000e+30 : f32
      %33 = vector.shape_cast %32 : vector<1x8x8xi1> to vector<1x8x8xi1>
      %34 = vector.broadcast %33 : vector<1x8x8xi1> to vector<4x8x8xi1>
      %35 = vector.broadcast %cst_18 : f32 to vector<4x8x8xf32>
      %36 = arith.select %34, %23, %35 : vector<4x8x8xi1>, vector<4x8x8xf32>
      %c0_19 = arith.constant 0 : index
      %c0_20 = arith.constant 0 : index
      %c0_21 = arith.constant 0 : index
      %37 = vector.load %arg18[%c0_19, %c0_20, %c0_21] : memref<4x8x1xf32, #tpu.memory_space<vmem>>, vector<4x8x1xf32>
      %cst_22 = arith.constant dense<0xFF800000> : vector<4x8xf32>
      %38 = vector.multi_reduction <maximumf>, %36, %cst_22 [2] : vector<4x8x8xf32> to vector<4x8xf32>
      %39 = vector.shape_cast %38 : vector<4x8xf32> to vector<4x8x1xf32>
      %40 = arith.maximumf %37, %39 : vector<4x8x1xf32>
      %c0_23 = arith.constant 0 : index
      %c0_24 = arith.constant 0 : index
      %c0_25 = arith.constant 0 : index
      %41 = vector.load %arg18[%c0_23, %c0_24, %c0_25] : memref<4x8x1xf32, #tpu.memory_space<vmem>>, vector<4x8x1xf32>
      %42 = arith.subf %41, %40 : vector<4x8x1xf32>
      %43 = math.exp %42 : vector<4x8x1xf32>
      %44 = vector.broadcast %40 : vector<4x8x1xf32> to vector<4x8x8xf32>
      %45 = arith.subf %36, %44 : vector<4x8x8xf32>
      %46 = math.exp %45 : vector<4x8x8xf32>
      %c0_26 = arith.constant 0 : index
      %c0_27 = arith.constant 0 : index
      %c0_28 = arith.constant 0 : index
      %47 = vector.load %arg19[%c0_26, %c0_27, %c0_28] : memref<4x8x1xf32, #tpu.memory_space<vmem>>, vector<4x8x1xf32>
      %48 = arith.mulf %43, %47 : vector<4x8x1xf32>
      %cst_29 = arith.constant dense<0.000000e+00> : vector<4x8xf32>
      %49 = vector.multi_reduction <add>, %46, %cst_29 [2] : vector<4x8x8xf32> to vector<4x8xf32>
      %50 = vector.shape_cast %49 : vector<4x8xf32> to vector<4x8x1xf32>
      %51 = arith.addf %48, %50 : vector<4x8x1xf32>
      %c0_30 = arith.constant 0 : index
      %c0_31 = arith.constant 0 : index
      %c0_32 = arith.constant 0 : index
      %52 = vector.load %arg19[%c0_30, %c0_31, %c0_32] : memref<4x8x1xf32, #tpu.memory_space<vmem>>, vector<4x8x1xf32>
      tpu.vector_store %arg19[%c0_30, %c0_31, %c0_32], %51 {strides = array<i32>} : memref<4x8x1xf32, #tpu.memory_space<vmem>>, vector<4x8x1xf32>,
      %c0_33 = arith.constant 0 : index
      %c0_34 = arith.constant 0 : index
      %c0_35 = arith.constant 0 : index
      %53 = vector.load %arg20[%c0_33, %c0_34, %c0_35] : memref<4x8x8xf32, #tpu.memory_space<vmem>>, vector<4x8x8xf32>
      %54 = vector.broadcast %43 : vector<4x8x1xf32> to vector<4x8x8xf32>
      %55 = arith.mulf %54, %53 : vector<4x8x8xf32>
      "tpu.trace_start"() <{level = 10 : i32, message = "hqk,hkd->hqd"}> : () -> ()
      %cst_36 = arith.constant dense<0.000000e+00> : vector<4x8x8xf32>
      %56 = tpu.matmul %46, %21, %cst_36 {dimension_numbers = #tpu.dot_dimension_numbers<[2], [1], [1], [2], [0, 0, 0, 1, 1, 2], [0], [0]>} : vector<4x8x8xf32>, vector<4x8x8xf32>, vector<4x8x8xf32> -> vector<4x8x8xf32>
      "tpu.trace_stop"() : () -> ()
      %57 = arith.addf %55, %56 : vector<4x8x8xf32>
      %c0_37 = arith.constant 0 : index
      %c0_38 = arith.constant 0 : index
      %c0_39 = arith.constant 0 : index
      %58 = vector.load %arg20[%c0_37, %c0_38, %c0_39] : memref<4x8x8xf32, #tpu.memory_space<vmem>>, vector<4x8x8xf32>
      tpu.vector_store %arg20[%c0_37, %c0_38, %c0_39], %57 {strides = array<i32>} : memref<4x8x8xf32, #tpu.memory_space<vmem>>, vector<4x8x8xf32>,
      %c0_40 = arith.constant 0 : index
      %c0_41 = arith.constant 0 : index
      %c0_42 = arith.constant 0 : index
      %59 = vector.load %arg18[%c0_40, %c0_41, %c0_42] : memref<4x8x1xf32, #tpu.memory_space<vmem>>, vector<4x8x1xf32>
      tpu.vector_store %arg18[%c0_40, %c0_41, %c0_42], %40 {strides = array<i32>} : memref<4x8x1xf32, #tpu.memory_space<vmem>>, vector<4x8x1xf32>,
    } else {
    }
    %c1_i32_6 = arith.constant 1 : i32
    %13 = arith.cmpi eq, %arg2, %c1_i32_6 : i32
    %14 = arith.extui %13 : i1 to i32
    %c0_i32_7 = arith.constant 0 : i32
    %15 = arith.cmpi ne, %14, %c0_i32_7 : i32
    scf.if %15 {
      %c0 = arith.constant 0 : index
      %c0_8 = arith.constant 0 : index
      %c0_9 = arith.constant 0 : index
      %16 = vector.load %arg5[%c0, %c0_8, %c0_9] : memref<1x6x32xf32, #tpu.memory_space<vmem>>, vector<1x6x32xf32>
      %17 = vector.shape_cast %16 : vector<1x6x32xf32> to vector<6x32xf32>
      %18 = vector.extract_strided_slice %17 {offsets = [2, 0], sizes = [1, 32], strides = [1, 1]} : vector<6x32xf32> to vector<1x32xf32>
      %19 = vector.extract_strided_slice %17 {offsets = [3, 0], sizes = [1, 32], strides = [1, 1]} : vector<6x32xf32> to vector<1x32xf32>
      %20 = vector.extract_strided_slice %17 {offsets = [4, 0], sizes = [1, 32], strides = [1, 1]} : vector<6x32xf32> to vector<1x32xf32>
      %21 = vector.extract_strided_slice %17 {offsets = [5, 0], sizes = [1, 32], strides = [1, 1]} : vector<6x32xf32> to vector<1x32xf32>
      %c0_10 = arith.constant 0 : index
      %c0_11 = arith.constant 0 : index
      %c0_12 = arith.constant 0 : index
      %22 = vector.load %arg20[%c0_10, %c0_11, %c0_12] : memref<4x8x8xf32, #tpu.memory_space<vmem>>, vector<4x8x8xf32>
      %c0_13 = arith.constant 0 : index
      %c0_14 = arith.constant 0 : index
      %c0_15 = arith.constant 0 : index
      %23 = vector.load %arg19[%c0_13, %c0_14, %c0_15] : memref<4x8x1xf32, #tpu.memory_space<vmem>>, vector<4x8x1xf32>
      %24 = tpu.reciprocal %23 {approx = true} : vector<4x8x1xf32> -> vector<4x8x1xf32>
      %25 = vector.broadcast %24 : vector<4x8x1xf32> to vector<4x8x8xf32>
      %26 = arith.mulf %22, %25 : vector<4x8x8xf32>
      %27 = vector.extract_strided_slice %26 {offsets = [0, 0, 0], sizes = [1, 8, 8], strides = [1, 1, 1]} : vector<4x8x8xf32> to vector<1x8x8xf32>
      %28 = vector.shape_cast %27 : vector<1x8x8xf32> to vector<8x8xf32>
      %c0_16 = arith.constant 0 : index
      %c0_17 = arith.constant 0 : index
      %c0_18 = arith.constant 0 : index
      %29 = vector.load %arg9[%c0_16, %c0_17, %c0_18] : memref<4x8x32xf32, #tpu.memory_space<vmem>>, vector<1x8x32xf32>
      %30 = vector.shape_cast %29 : vector<1x8x32xf32> to vector<8x32xf32>
      %cst = arith.constant dense<0.000000e+00> : vector<8x32xf32>
      %31 = tpu.matmul %28, %30, %cst {dimension_numbers = #tpu.dot_dimension_numbers<[1], [0], [0], [1], [0, 0, 1, 1], [], []>} : vector<8x8xf32>, vector<8x32xf32>, vector<8x32xf32> -> vector<8x32xf32>
      %32 = vector.extract_strided_slice %26 {offsets = [1, 0, 0], sizes = [1, 8, 8], strides = [1, 1, 1]} : vector<4x8x8xf32> to vector<1x8x8xf32>
      %33 = vector.shape_cast %32 : vector<1x8x8xf32> to vector<8x8xf32>
      %c1 = arith.constant 1 : index
      %c0_19 = arith.constant 0 : index
      %c0_20 = arith.constant 0 : index
      %34 = vector.load %arg9[%c1, %c0_19, %c0_20] : memref<4x8x32xf32, #tpu.memory_space<vmem>>, vector<1x8x32xf32>
      %35 = vector.shape_cast %34 : vector<1x8x32xf32> to vector<8x32xf32>
      %cst_21 = arith.constant dense<0.000000e+00> : vector<8x32xf32>
      %36 = tpu.matmul %33, %35, %cst_21 {dimension_numbers = #tpu.dot_dimension_numbers<[1], [0], [0], [1], [0, 0, 1, 1], [], []>} : vector<8x8xf32>, vector<8x32xf32>, vector<8x32xf32> -> vector<8x32xf32>
      %37 = arith.addf %31, %36 : vector<8x32xf32>
      %38 = vector.extract_strided_slice %26 {offsets = [2, 0, 0], sizes = [1, 8, 8], strides = [1, 1, 1]} : vector<4x8x8xf32> to vector<1x8x8xf32>
      %39 = vector.shape_cast %38 : vector<1x8x8xf32> to vector<8x8xf32>
      %c2 = arith.constant 2 : index
      %c0_22 = arith.constant 0 : index
      %c0_23 = arith.constant 0 : index
      %40 = vector.load %arg9[%c2, %c0_22, %c0_23] : memref<4x8x32xf32, #tpu.memory_space<vmem>>, vector<1x8x32xf32>
      %41 = vector.shape_cast %40 : vector<1x8x32xf32> to vector<8x32xf32>
      %cst_24 = arith.constant dense<0.000000e+00> : vector<8x32xf32>
      %42 = tpu.matmul %39, %41, %cst_24 {dimension_numbers = #tpu.dot_dimension_numbers<[1], [0], [0], [1], [0, 0, 1, 1], [], []>} : vector<8x8xf32>, vector<8x32xf32>, vector<8x32xf32> -> vector<8x32xf32>
      %43 = arith.addf %37, %42 : vector<8x32xf32>
      %44 = vector.extract_strided_slice %26 {offsets = [3, 0, 0], sizes = [1, 8, 8], strides = [1, 1, 1]} : vector<4x8x8xf32> to vector<1x8x8xf32>
      %45 = vector.shape_cast %44 : vector<1x8x8xf32> to vector<8x8xf32>
      %c3 = arith.constant 3 : index
      %c0_25 = arith.constant 0 : index
      %c0_26 = arith.constant 0 : index
      %46 = vector.load %arg9[%c3, %c0_25, %c0_26] : memref<4x8x32xf32, #tpu.memory_space<vmem>>, vector<1x8x32xf32>
      %47 = vector.shape_cast %46 : vector<1x8x32xf32> to vector<8x32xf32>
      %cst_27 = arith.constant dense<0.000000e+00> : vector<8x32xf32>
      %48 = tpu.matmul %45, %47, %cst_27 {dimension_numbers = #tpu.dot_dimension_numbers<[1], [0], [0], [1], [0, 0, 1, 1], [], []>} : vector<8x8xf32>, vector<8x32xf32>, vector<8x32xf32> -> vector<8x32xf32>
      %49 = arith.addf %43, %48 : vector<8x32xf32>
      %c0_28 = arith.constant 0 : index
      %c0_29 = arith.constant 0 : index
      %c0_30 = arith.constant 0 : index
      %50 = vector.load %arg3[%c0_28, %c0_29, %c0_30] : memref<1x8x32xf32, #tpu.memory_space<vmem>>, vector<1x8x32xf32>
      %51 = vector.shape_cast %50 : vector<1x8x32xf32> to vector<8x32xf32>
      %52 = vector.broadcast %18 : vector<1x32xf32> to vector<8x32xf32>
      %53 = arith.mulf %52, %49 : vector<8x32xf32>
      %54 = arith.addf %51, %53 : vector<8x32xf32>
      %cst_31 = arith.constant dense<0.000000e+00> : vector<8xf32>
      %55 = vector.multi_reduction <add>, %54, %cst_31 [1] : vector<8x32xf32> to vector<8xf32>
      %56 = vector.shape_cast %55 : vector<8xf32> to vector<8x1xf32>
      %cst_32 = arith.constant 3.200000e+01 : f32
      %57 = vector.broadcast %cst_32 : f32 to vector<8x1xf32>
      %58 = arith.divf %56, %57 : vector<8x1xf32>
      %59 = vector.broadcast %58 : vector<8x1xf32> to vector<8x32xf32>
      %60 = arith.subf %54, %59 : vector<8x32xf32>
      %61 = arith.mulf %60, %60 : vector<8x32xf32>
      %cst_33 = arith.constant dense<0.000000e+00> : vector<8xf32>
      %62 = vector.multi_reduction <add>, %61, %cst_33 [1] : vector<8x32xf32> to vector<8xf32>
      %63 = vector.shape_cast %62 : vector<8xf32> to vector<8x1xf32>
      %cst_34 = arith.constant 3.200000e+01 : f32
      %64 = vector.broadcast %cst_34 : f32 to vector<8x1xf32>
      %65 = arith.divf %63, %64 : vector<8x1xf32>
      %66 = vector.broadcast %58 : vector<8x1xf32> to vector<8x32xf32>
      %67 = arith.subf %54, %66 : vector<8x32xf32>
      %cst_35 = arith.constant 9.99999974E-6 : f32
      %68 = vector.broadcast %cst_35 : f32 to vector<8x1xf32>
      %69 = arith.addf %65, %68 : vector<8x1xf32>
      %70 = math.rsqrt %69 : vector<8x1xf32>
      %71 = vector.broadcast %70 : vector<8x1xf32> to vector<8x32xf32>
      %72 = arith.mulf %67, %71 : vector<8x32xf32>
      %73 = vector.broadcast %20 : vector<1x32xf32> to vector<8x32xf32>
      %74 = arith.mulf %72, %73 : vector<8x32xf32>
      %75 = vector.broadcast %19 : vector<1x32xf32> to vector<8x32xf32>
      %76 = arith.addf %74, %75 : vector<8x32xf32>
      %c0_36 = arith.constant 0 : index
      %c0_37 = arith.constant 0 : index
      %77 = vector.load %arg10[%c0_36, %c0_37] : memref<32x128xf32, #tpu.memory_space<vmem>>, vector<32x128xf32>
      %cst_38 = arith.constant dense<0.000000e+00> : vector<8x128xf32>
      %78 = tpu.matmul %76, %77, %cst_38 {dimension_numbers = #tpu.dot_dimension_numbers<[1], [0], [0], [1], [0, 0, 1, 1], [], []>} : vector<8x32xf32>, vector<32x128xf32>, vector<8x128xf32> -> vector<8x128xf32>
      %c0_39 = arith.constant 0 : index
      %c0_40 = arith.constant 0 : index
      %79 = vector.load %arg11[%c0_39, %c0_40] : memref<1x128xf32, #tpu.memory_space<vmem>>, vector<1x128xf32>
      %80 = vector.broadcast %79 : vector<1x128xf32> to vector<8x128xf32>
      %81 = arith.addf %78, %80 : vector<8x128xf32>
      %82 = arith.negf %81 : vector<8x128xf32>
      %83 = math.exp %82 : vector<8x128xf32>
      %cst_41 = arith.constant 1.000000e+00 : f32
      %84 = vector.broadcast %cst_41 : f32 to vector<8x128xf32>
      %85 = arith.addf %84, %83 : vector<8x128xf32>
      %86 = arith.divf %84, %85 : vector<8x128xf32>
      %87 = arith.mulf %81, %86 : vector<8x128xf32>
      %c0_42 = arith.constant 0 : index
      %c0_43 = arith.constant 0 : index
      %88 = vector.load %arg12[%c0_42, %c0_43] : memref<128x32xf32, #tpu.memory_space<vmem>>, vector<128x32xf32>
      %cst_44 = arith.constant dense<0.000000e+00> : vector<8x32xf32>
      %89 = tpu.matmul %87, %88, %cst_44 {dimension_numbers = #tpu.dot_dimension_numbers<[1], [0], [0], [1], [0, 0, 1, 1], [], []>} : vector<8x128xf32>, vector<128x32xf32>, vector<8x32xf32> -> vector<8x32xf32>
      %c0_45 = arith.constant 0 : index
      %c0_46 = arith.constant 0 : index
      %90 = vector.load %arg13[%c0_45, %c0_46] : memref<1x32xf32, #tpu.memory_space<vmem>>, vector<1x32xf32>
      %91 = vector.broadcast %90 : vector<1x32xf32> to vector<8x32xf32>
      %92 = arith.addf %89, %91 : vector<8x32xf32>
      %93 = vector.broadcast %21 : vector<1x32xf32> to vector<8x32xf32>
      %94 = arith.mulf %93, %92 : vector<8x32xf32>
      %95 = arith.addf %54, %94 : vector<8x32xf32>
      %c0_47 = arith.constant 0 : index
      %c0_48 = arith.constant 0 : index
      %c0_49 = arith.constant 0 : index
      %96 = vector.load %arg14[%c0_47, %c0_48, %c0_49] : memref<1x8x32xf32, #tpu.memory_space<vmem>>, vector<1x8x32xf32>
      %97 = vector.shape_cast %96 : vector<1x8x32xf32> to vector<8x32xf32>
      %98 = vector.shape_cast %95 : vector<8x32xf32> to vector<1x8x32xf32>
      tpu.vector_store %arg14[%c0_47, %c0_48, %c0_49], %98 {strides = array<i32>} : memref<1x8x32xf32, #tpu.memory_space<vmem>>, vector<1x8x32xf32>,
    } else {
    }
    return
  }
  func.func @transform_0(%arg0: i32, %arg1: i32, %arg2: i32) -> (i32, i32, i32) {
    %c0_i32 = arith.constant 0 : i32
    %c0_i32_0 = arith.constant 0 : i32
    return %arg0, %arg1, %c0_i32 : i32, i32, i32
  }
  func.func @transform_1(%arg0: i32, %arg1: i32, %arg2: i32) -> (i32, i32, i32) {
    %c0_i32 = arith.constant 0 : i32
    %0 = arith.cmpi eq, %arg1, %c0_i32 : i32
    %c0_i32_0 = arith.constant 0 : i32
    %1 = arith.select %0, %arg2, %c0_i32_0 : i32
    %c0_i32_1 = arith.constant 0 : i32
    %c0_i32_2 = arith.constant 0 : i32
    return %arg0, %1, %c0_i32_1 : i32, i32, i32
  }
  func.func @transform_2(%arg0: i32, %arg1: i32, %arg2: i32) -> (i32, i32, i32) {
    %c0_i32 = arith.constant 0 : i32
    %c0_i32_0 = arith.constant 0 : i32
    %c0_i32_1 = arith.constant 0 : i32
    return %arg0, %c0_i32, %c0_i32_0 : i32, i32, i32
  }
  func.func @transform_3(%arg0: i32, %arg1: i32, %arg2: i32) -> (i32, i32, i32) {
    %c0_i32 = arith.constant 0 : i32
    %c0_i32_0 = arith.constant 0 : i32
    %c0_i32_1 = arith.constant 0 : i32
    %c0_i32_2 = arith.constant 0 : i32
    return %c0_i32, %c0_i32_0, %c0_i32_1 : i32, i32, i32
  }
  func.func @transform_4(%arg0: i32, %arg1: i32, %arg2: i32) -> (i32, i32, i32) {
    %c0_i32 = arith.constant 0 : i32
    %c0_i32_0 = arith.constant 0 : i32
    %c0_i32_1 = arith.constant 0 : i32
    %c0_i32_2 = arith.constant 0 : i32
    return %c0_i32, %c0_i32_0, %c0_i32_1 : i32, i32, i32
  }
  func.func @transform_5(%arg0: i32, %arg1: i32, %arg2: i32) -> (i32, i32, i32) {
    %c0_i32 = arith.constant 0 : i32
    %c0_i32_0 = arith.constant 0 : i32
    %c0_i32_1 = arith.constant 0 : i32
    %c0_i32_2 = arith.constant 0 : i32
    return %c0_i32, %c0_i32_0, %c0_i32_1 : i32, i32, i32
  }
  func.func @transform_6(%arg0: i32, %arg1: i32, %arg2: i32) -> (i32, i32, i32) {
    %c0_i32 = arith.constant 0 : i32
    %c0_i32_0 = arith.constant 0 : i32
    %c0_i32_1 = arith.constant 0 : i32
    %c0_i32_2 = arith.constant 0 : i32
    return %c0_i32, %c0_i32_0, %c0_i32_1 : i32, i32, i32
  }
  func.func @transform_7(%arg0: i32, %arg1: i32, %arg2: i32) -> (i32, i32) {
    %c0_i32 = arith.constant 0 : i32
    %c0_i32_0 = arith.constant 0 : i32
    %c0_i32_1 = arith.constant 0 : i32
    return %c0_i32, %c0_i32_0 : i32, i32
  }
  func.func @transform_8(%arg0: i32, %arg1: i32, %arg2: i32) -> (i32, i32) {
    %c0_i32 = arith.constant 0 : i32
    %c0_i32_0 = arith.constant 0 : i32
    %c0_i32_1 = arith.constant 0 : i32
    return %c0_i32, %c0_i32_0 : i32, i32
  }
  func.func @transform_9(%arg0: i32, %arg1: i32, %arg2: i32) -> (i32, i32) {
    %c0_i32 = arith.constant 0 : i32
    %c0_i32_0 = arith.constant 0 : i32
    %c0_i32_1 = arith.constant 0 : i32
    return %c0_i32, %c0_i32_0 : i32, i32
  }
  func.func @transform_10(%arg0: i32, %arg1: i32, %arg2: i32) -> (i32, i32) {
    %c0_i32 = arith.constant 0 : i32
    %c0_i32_0 = arith.constant 0 : i32
    %c0_i32_1 = arith.constant 0 : i32
    return %c0_i32, %c0_i32_0 : i32, i32
  }
  func.func @transform_11(%arg0: i32, %arg1: i32, %arg2: i32) -> (i32, i32, i32) {
    %c0_i32 = arith.constant 0 : i32
    %c0_i32_0 = arith.constant 0 : i32
    return %arg0, %arg1, %c0_i32 : i32, i32, i32
  }
}

</mosaic_0001>

<llo_original>
// kernel: tpu_custom_call.1
$region0: #{tpu_custom_call.1}
  #allocation0 [shape = 'u32[]', space=smem, size = 0x4, offset = 0x4, fixed_abs, tag = 'smem constant byte address 0x4 - core index']
  #allocation1 [shape = 'u32[144,128]{1,0:T(1,128)}', space=vmem, size = 0x12000, scoped, tag = 'internal scratch']
  #allocation2 [shape = 'f32[4,8,8]{2,1,0:T(8,128)}', space=vmem, size = 0x4000, scoped, tag = 'scratch operand']
  #allocation3 [shape = 'f32[2,4,8,8]{3,2,1,0:T(8,128)}', space=vmem, size = 0x8000, scoped, tag = 'scratch operand']
  #allocation4 [shape = 'f32[2,4,8,8]{3,2,1,0:T(8,128)}', space=vmem, size = 0x8000, scoped, tag = 'scratch operand']
  #allocation5 [shape = 'f32[4,8,1]{2,1,0:T(8,128)}', space=vmem, size = 0x4000, scoped, tag = 'scratch operand']
  #allocation6 [shape = 'f32[4,8,1]{2,1,0:T(8,128)}', space=vmem, size = 0x4000, scoped, tag = 'scratch operand']
  #allocation7 [shape = 'f32[4,8,8]{2,1,0:T(8,128)}', space=vmem, size = 0x4000, scoped, tag = 'scratch operand']
  %s0 = inlined_call_operand.hbm [shape: f32[2,16,32], index: 0, kind: input, shape index: {}]
  %s1 = inlined_call_operand.hbm [shape: f32[2,16,32], index: 1, kind: input, shape index: {}]
  %s2 = inlined_call_operand.hbm [shape: f32[2,6,32], index: 2, kind: input, shape index: {}]
  %s3 = inlined_call_operand.hbm [shape: f32[4,32,8], index: 3, kind: input, shape index: {}]
  %s4 = inlined_call_operand.hbm [shape: f32[4,32,8], index: 4, kind: input, shape index: {}]
  %s5 = inlined_call_operand.hbm [shape: f32[4,32,8], index: 5, kind: input, shape index: {}]
  %s6 = inlined_call_operand.hbm [shape: f32[4,8,32], index: 6, kind: input, shape index: {}]
  %s7 = inlined_call_operand.hbm [shape: f32[32,128], index: 7, kind: input, shape index: {}]
  %s8 = inlined_call_operand.hbm [shape: f32[1,128], index: 8, kind: input, shape index: {}]
  %s9 = inlined_call_operand.hbm [shape: f32[128,32], index: 9, kind: input, shape index: {}]
  %s10 = inlined_call_operand.hbm [shape: f32[1,32], index: 10, kind: input, shape index: {}]
  %s11 = inlined_call_operand.hbm [shape: f32[2,16,32], index: 11, kind: output, shape index: {}]
  %s12 = sld [smem:[#allocation0]]
  $region137: #{tpu_custom_call.1} parent=0
    _
  %s14 = ssub.s32 1, %s12
  %s15 = scalar_select 0, %s14, %s12
  $region1: #{tpu_custom_call.1} parent=0
    #allocation8 [shape = 'u8[8192]{0}', space=vmem, size = 0x2000, scoped, tag = 'input window, operand 0']
    #allocation9 [shape = 's32[2]{0}', space=sflag, size = 0x8, scoped, tag = 'scoped memory for tpu_custom_call.1']
    #allocation10 [shape = 's32[2]{0}', space=sflag, size = 0x8, scoped, tag = 'scoped memory for tpu_custom_call.1']
    #allocation11 [shape = 'u8[8192]{0}', space=vmem, size = 0x2000, scoped, tag = 'input window, operand 1']
    #allocation12 [shape = 's32[2]{0}', space=sflag, size = 0x8, scoped, tag = 'scoped memory for tpu_custom_call.1']
    #allocation13 [shape = 'u8[8192]{0}', space=vmem, size = 0x2000, scoped, tag = 'input window, operand 2']
    #allocation14 [shape = 'u8[65536]{0}', space=vmem, size = 0x10000, scoped, tag = 'input window, operand 3, single buffered']
    #allocation15 [shape = 's32[1]{0}', space=sflag, size = 0x4, scoped, tag = 'scoped memory for tpu_custom_call.1']
    #allocation16 [shape = 'u8[65536]{0}', space=vmem, size = 0x10000, scoped, tag = 'input window, operand 4, single buffered']
    #allocation17 [shape = 'u8[65536]{0}', space=vmem, size = 0x10000, scoped, tag = 'input window, operand 5, single buffered']
    #allocation18 [shape = 's32[1]{0}', space=sflag, size = 0x4, scoped, tag = 'scoped memory for tpu_custom_call.1']
    #allocation19 [shape = 'u8[16384]{0}', space=vmem, size = 0x4000, scoped, tag = 'input window, operand 6, single buffered']
    #allocation20 [shape = 'u8[16384]{0}', space=vmem, size = 0x4000, scoped, tag = 'input window, operand 7, single buffered']
    #allocation21 [shape = 's32[1]{0}', space=sflag, size = 0x4, scoped, tag = 'scoped memory for tpu_custom_call.1']
    #allocation22 [shape = 'u8[512]{0}', space=vmem, size = 0x400, scoped, tag = 'input window, operand 8, single buffered']
    #allocation23 [shape = 'u8[65536]{0}', space=vmem, size = 0x10000, scoped, tag = 'input window, operand 9, single buffered']
    #allocation24 [shape = 's32[1]{0}', space=sflag, size = 0x4, scoped, tag = 'scoped memory for tpu_custom_call.1']
    #allocation25 [shape = 'u8[512]{0}', space=vmem, size = 0x400, scoped, tag = 'input window, operand 10, single buffered']
    #allocation26 [shape = 'u8[8192]{0}', space=vmem, size = 0x2000, scoped, tag = 'output window, operand 0']
    %16 = vsyncpa [#allocation9], 0
    %s17 = scalar_lea.sflag [#allocation9], 1
    %18 = vsyncpa %s17, 0
    %19 = vsyncpa [#allocation12], 0
    %s20 = scalar_lea.sflag [#allocation12], 1
    %21 = vsyncpa %s20, 0
    %22 = vsyncpa [#allocation15], 0
    %23 = vsyncpa [#allocation18], 0
    %24 = vsyncpa [#allocation21], 0
    %25 = vsyncpa [#allocation24], 0
    %26 = vsyncpa [#allocation10], 0
    %s27 = scalar_lea.sflag [#allocation10], 1
    %28 = vsyncpa %s27, 0
    loop: start=0, step=1, limit=10
    $region2: #{tpu_custom_call.1} parent=1 // loop_pre_header
      _
    $region3: #{tpu_custom_call.1} parent=1 // loop_header
      %s30 = sphi 0, %s34
      %p31 = scmp.ge.s32.totalorder %s30, 10
      %s37 = sphi 0, %s56
      %s38 = sphi 0, %s52
      %s39 = sphi 0, %s48
      %s40 = sphi 0, %s37
      %s41 = sphi 0, %s38
      %s42 = sphi 0, %s39
      %s43 = sphi 0, %s40
      %s44 = sphi 0, %s41
      %s45 = sphi 0, %s42
      %s61 = sphi 0, %s63
      %s64 = sphi 0, %s61
      %s65 = sphi 0, %s64
      %s81 = sphi 0, %s65
      %s93 = sphi 0, %s95
      %s96 = sphi 0, %s93
      %s97 = sphi 0, %s96
      %s113 = sphi 0, %s97
      %s119 = sphi 0, %s121
      %s122 = sphi 0, %s119
      %s123 = sphi 0, %s122
      %s139 = sphi 0, %s123
      %s143 = sphi 0, %s143
      %s145 = sphi 0, %s143
      %s146 = sphi 0, %s145
      %s160 = sphi 0, %s146
      %s164 = sphi 0, %s164
      %s166 = sphi 0, %s164
      %s167 = sphi 0, %s166
      %s181 = sphi 0, %s167
      %s185 = sphi 0, %s185
      %s187 = sphi 0, %s185
      %s188 = sphi 0, %s187
      %s202 = sphi 0, %s188
      %s206 = sphi 0, %s206
      %s208 = sphi 0, %s206
      %s209 = sphi 0, %s208
      %s223 = sphi 0, %s209
      %s227 = sphi 0, %s227
      %s229 = sphi 0, %s227
      %s230 = sphi 0, %s229
      %s244 = sphi 0, %s230
      %s248 = sphi 0, %s248
      %s250 = sphi 0, %s248
      %s251 = sphi 0, %s250
      %s265 = sphi 0, %s251
      %s269 = sphi 0, %s269
      %s271 = sphi 0, %s269
      %s272 = sphi 0, %s271
      %s286 = sphi 0, %s272
      %s290 = sphi 0, %s290
      %s292 = sphi 0, %s290
      %s293 = sphi 0, %s292
      %s307 = sphi 0, %s293
      %s315 = sphi 0, %s317
      %s318 = sphi 0, %s315
      %s319 = sphi 0, %s318
      %s335 = sphi 0, %s319
    $region4: #{tpu_custom_call.1} parent=1 // loop_header_branch
      %33 = sbr.rel (%p31) target = $region8
    $region5: #{tpu_custom_call.1} parent=1 // loop_body
      %s35 = ssub.s32 %s30, 1
      %s36 = ssub.s32 %s30, 2
      %s46 = sadd.s32 1, %s39
      %p47 = scmp.ge.s32.totalorder %s46, 2
      %s48 = scalar_select %p47, 0, %s46
      %s49 = sadd.s32 1, %s38
      %s50 = scalar_select %p47, %s49, %s38
      %p51 = scmp.ge.s32.totalorder %s50, 2
      %s52 = scalar_select %p51, 0, %s50
      %s53 = sadd.s32 1, %s37
      %s54 = scalar_select %p51, %s53, %s37
      %p55 = scmp.ge.s32.totalorder %s54, 2
      %s56 = scalar_select %p55, 0, %s54
      %s57 = ssub.s32 %s37, %s56
      %s58 = ssub.s32 %s38, %s52
      %s59 = sor.u32 %s57, %s58
      %p60 = scmp.eq.s32.totalorder %s59, 0
      %s62 = sadd.s32 %s61, 1
      %s63 = scalar_select %p60, %s61, %s62
      %p66 = pneg %p60
      %p67 = scmp.eq.s32.totalorder %s30, 7
      %p68 = por %p66, %p67
      %p69 = scmp.ne.s32.totalorder %s61, %s64
      %p70 = scmp.eq.s32.totalorder %s30, 0
      %p71 = por %p69, %p70
      %p72 = scmp.ne.s32.totalorder %s61, %s64
      %p73 = scmp.eq.s32.totalorder %s35, 7
      %p74 = por %p72, %p73
      %p75 = scmp.ne.s32.totalorder %s64, %s65
      %p76 = scmp.eq.s32.totalorder %s35, 0
      %p77 = por %p75, %p76
      %p78 = scmp.ne.s32.totalorder %s64, %s65
      %p79 = scmp.eq.s32.totalorder %s36, 7
      %p80 = por %p78, %p79
      %p82 = scmp.ne.s32.totalorder %s65, %s81
      %p83 = scmp.eq.s32.totalorder %s36, 0
      %p84 = por %p82, %p83
      %p85 = scmp.eq.s32.totalorder %s38, 0
      %s86 = scalar_select %p85, %s39, 0
      %p87 = scmp.eq.s32.totalorder %s52, 0
      %s88 = scalar_select %p87, %s48, 0
      %s89 = ssub.s32 %s37, %s56
      %s90 = ssub.s32 %s86, %s88
      %s91 = sor.u32 %s89, %s90
      %p92 = scmp.eq.s32.totalorder %s91, 0
      %s94 = sadd.s32 %s93, 1
      %s95 = scalar_select %p92, %s93, %s94
      %p98 = pneg %p92
      %p99 = scmp.eq.s32.totalorder %s30, 7
      %p100 = por %p98, %p99
      %p101 = scmp.ne.s32.totalorder %s93, %s96
      %p102 = scmp.eq.s32.totalorder %s30, 0
      %p103 = por %p101, %p102
      %p104 = scmp.ne.s32.totalorder %s93, %s96
      %p105 = scmp.eq.s32.totalorder %s35, 7
      %p106 = por %p104, %p105
      %p107 = scmp.ne.s32.totalorder %s96, %s97
      %p108 = scmp.eq.s32.totalorder %s35, 0
      %p109 = por %p107, %p108
      %p110 = scmp.ne.s32.totalorder %s96, %s97
      %p111 = scmp.eq.s32.totalorder %s36, 7
      %p112 = por %p110, %p111
      %p114 = scmp.ne.s32.totalorder %s97, %s113
      %p115 = scmp.eq.s32.totalorder %s36, 0
      %p116 = por %p114, %p115
      %s117 = ssub.s32 %s37, %s56
      %p118 = scmp.eq.s32.totalorder %s117, 0
      %s120 = sadd.s32 %s119, 1
      %s121 = scalar_select %p118, %s119, %s120
      %p124 = pneg %p118
      %p125 = scmp.eq.s32.totalorder %s30, 7
      %p126 = por %p124, %p125
      %p127 = scmp.ne.s32.totalorder %s119, %s122
      %p128 = scmp.eq.s32.totalorder %s30, 0
      %p129 = por %p127, %p128
      %p130 = scmp.ne.s32.totalorder %s119, %s122
      %p131 = scmp.eq.s32.totalorder %s35, 7
      %p132 = por %p130, %p131
      %p133 = scmp.ne.s32.totalorder %s122, %s123
      %p134 = scmp.eq.s32.totalorder %s35, 0
      %p135 = por %p133, %p134
      %p136 = scmp.ne.s32.totalorder %s122, %s123
      %p137 = scmp.eq.s32.totalorder %s36, 7
      %p138 = por %p136, %p137
      %p140 = scmp.ne.s32.totalorder %s123, %s139
      %p141 = scmp.eq.s32.totalorder %s36, 0
      %p142 = por %p140, %p141
      %s144 = sadd.s32 %s143, 1
      %p147 = scmp.eq.s32.totalorder %s30, 7
      %p148 = scmp.ne.s32.totalorder %s143, %s145
      %p149 = scmp.eq.s32.totalorder %s30, 0
      %p150 = por %p148, %p149
      %p151 = scmp.ne.s32.totalorder %s143, %s145
      %p152 = scmp.eq.s32.totalorder %s35, 7
      %p153 = por %p151, %p152
      %p154 = scmp.ne.s32.totalorder %s145, %s146
      %p155 = scmp.eq.s32.totalorder %s35, 0
      %p156 = por %p154, %p155
      %p157 = scmp.ne.s32.totalorder %s145, %s146
      %p158 = scmp.eq.s32.totalorder %s36, 7
      %p159 = por %p157, %p158
      %p161 = scmp.ne.s32.totalorder %s146, %s160
      %p162 = scmp.eq.s32.totalorder %s36, 0
      %p163 = por %p161, %p162
      %s165 = sadd.s32 %s164, 1
      %p168 = scmp.eq.s32.totalorder %s30, 7
      %p169 = scmp.ne.s32.totalorder %s164, %s166
      %p170 = scmp.eq.s32.totalorder %s30, 0
      %p171 = por %p169, %p170
      %p172 = scmp.ne.s32.totalorder %s164, %s166
      %p173 = scmp.eq.s32.totalorder %s35, 7
      %p174 = por %p172, %p173
      %p175 = scmp.ne.s32.totalorder %s166, %s167
      %p176 = scmp.eq.s32.totalorder %s35, 0
      %p177 = por %p175, %p176
      %p178 = scmp.ne.s32.totalorder %s166, %s167
      %p179 = scmp.eq.s32.totalorder %s36, 7
      %p180 = por %p178, %p179
      %p182 = scmp.ne.s32.totalorder %s167, %s181
      %p183 = scmp.eq.s32.totalorder %s36, 0
      %p184 = por %p182, %p183
      %s186 = sadd.s32 %s185, 1
      %p189 = scmp.eq.s32.totalorder %s30, 7
      %p190 = scmp.ne.s32.totalorder %s185, %s187
      %p191 = scmp.eq.s32.totalorder %s30, 0
      %p192 = por %p190, %p191
      %p193 = scmp.ne.s32.totalorder %s185, %s187
      %p194 = scmp.eq.s32.totalorder %s35, 7
      %p195 = por %p193, %p194
      %p196 = scmp.ne.s32.totalorder %s187, %s188
      %p197 = scmp.eq.s32.totalorder %s35, 0
      %p198 = por %p196, %p197
      %p199 = scmp.ne.s32.totalorder %s187, %s188
      %p200 = scmp.eq.s32.totalorder %s36, 7
      %p201 = por %p199, %p200
      %p203 = scmp.ne.s32.totalorder %s188, %s202
      %p204 = scmp.eq.s32.totalorder %s36, 0
      %p205 = por %p203, %p204
      %s207 = sadd.s32 %s206, 1
      %p210 = scmp.eq.s32.totalorder %s30, 7
      %p211 = scmp.ne.s32.totalorder %s206, %s208
      %p212 = scmp.eq.s32.totalorder %s30, 0
      %p213 = por %p211, %p212
      %p214 = scmp.ne.s32.totalorder %s206, %s208
      %p215 = scmp.eq.s32.totalorder %s35, 7
      %p216 = por %p214, %p215
      %p217 = scmp.ne.s32.totalorder %s208, %s209
      %p218 = scmp.eq.s32.totalorder %s35, 0
      %p219 = por %p217, %p218
      %p220 = scmp.ne.s32.totalorder %s208, %s209
      %p221 = scmp.eq.s32.totalorder %s36, 7
      %p222 = por %p220, %p221
      %p224 = scmp.ne.s32.totalorder %s209, %s223
      %p225 = scmp.eq.s32.totalorder %s36, 0
      %p226 = por %p224, %p225
      %s228 = sadd.s32 %s227, 1
      %p231 = scmp.eq.s32.totalorder %s30, 7
      %p232 = scmp.ne.s32.totalorder %s227, %s229
      %p233 = scmp.eq.s32.totalorder %s30, 0
      %p234 = por %p232, %p233
      %p235 = scmp.ne.s32.totalorder %s227, %s229
      %p236 = scmp.eq.s32.totalorder %s35, 7
      %p237 = por %p235, %p236
      %p238 = scmp.ne.s32.totalorder %s229, %s230
      %p239 = scmp.eq.s32.totalorder %s35, 0
      %p240 = por %p238, %p239
      %p241 = scmp.ne.s32.totalorder %s229, %s230
      %p242 = scmp.eq.s32.totalorder %s36, 7
      %p243 = por %p241, %p242
      %p245 = scmp.ne.s32.totalorder %s230, %s244
      %p246 = scmp.eq.s32.totalorder %s36, 0
      %p247 = por %p245, %p246
      %s249 = sadd.s32 %s248, 1
      %p252 = scmp.eq.s32.totalorder %s30, 7
      %p253 = scmp.ne.s32.totalorder %s248, %s250
      %p254 = scmp.eq.s32.totalorder %s30, 0
      %p255 = por %p253, %p254
      %p256 = scmp.ne.s32.totalorder %s248, %s250
      %p257 = scmp.eq.s32.totalorder %s35, 7
      %p258 = por %p256, %p257
      %p259 = scmp.ne.s32.totalorder %s250, %s251
      %p260 = scmp.eq.s32.totalorder %s35, 0
      %p261 = por %p259, %p260
      %p262 = scmp.ne.s32.totalorder %s250, %s251
      %p263 = scmp.eq.s32.totalorder %s36, 7
      %p264 = por %p262, %p263
      %p266 = scmp.ne.s32.totalorder %s251, %s265
      %p267 = scmp.eq.s32.totalorder %s36, 0
      %p268 = por %p266, %p267
      %s270 = sadd.s32 %s269, 1
      %p273 = scmp.eq.s32.totalorder %s30, 7
      %p274 = scmp.ne.s32.totalorder %s269, %s271
      %p275 = scmp.eq.s32.totalorder %s30, 0
      %p276 = por %p274, %p275
      %p277 = scmp.ne.s32.totalorder %s269, %s271
      %p278 = scmp.eq.s32.totalorder %s35, 7
      %p279 = por %p277, %p278
      %p280 = scmp.ne.s32.totalorder %s271, %s272
      %p281 = scmp.eq.s32.totalorder %s35, 0
      %p282 = por %p280, %p281
      %p283 = scmp.ne.s32.totalorder %s271, %s272
      %p284 = scmp.eq.s32.totalorder %s36, 7
      %p285 = por %p283, %p284
      %p287 = scmp.ne.s32.totalorder %s272, %s286
      %p288 = scmp.eq.s32.totalorder %s36, 0
      %p289 = por %p287, %p288
      %s291 = sadd.s32 %s290, 1
      %p294 = scmp.eq.s32.totalorder %s30, 7
      %p295 = scmp.ne.s32.totalorder %s290, %s292
      %p296 = scmp.eq.s32.totalorder %s30, 0
      %p297 = por %p295, %p296
      %p298 = scmp.ne.s32.totalorder %s290, %s292
      %p299 = scmp.eq.s32.totalorder %s35, 7
      %p300 = por %p298, %p299
      %p301 = scmp.ne.s32.totalorder %s292, %s293
      %p302 = scmp.eq.s32.totalorder %s35, 0
      %p303 = por %p301, %p302
      %p304 = scmp.ne.s32.totalorder %s292, %s293
      %p305 = scmp.eq.s32.totalorder %s36, 7
      %p306 = por %p304, %p305
      %p308 = scmp.ne.s32.totalorder %s293, %s307
      %p309 = scmp.eq.s32.totalorder %s36, 0
      %p310 = por %p308, %p309
      %s311 = ssub.s32 %s37, %s56
      %s312 = ssub.s32 %s38, %s52
      %s313 = sor.u32 %s311, %s312
      %p314 = scmp.eq.s32.totalorder %s313, 0
      %s316 = sadd.s32 %s315, 1
      %s317 = scalar_select %p314, %s315, %s316
      %p320 = pneg %p314
      %p321 = scmp.eq.s32.totalorder %s30, 7
      %p322 = por %p320, %p321
      %p323 = scmp.ne.s32.totalorder %s315, %s318
      %p324 = scmp.eq.s32.totalorder %s30, 0
      %p325 = por %p323, %p324
      %p326 = scmp.ne.s32.totalorder %s315, %s318
      %p327 = scmp.eq.s32.totalorder %s35, 7
      %p328 = por %p326, %p327
      %p329 = scmp.ne.s32.totalorder %s318, %s319
      %p330 = scmp.eq.s32.totalorder %s35, 0
      %p331 = por %p329, %p330
      %p332 = scmp.ne.s32.totalorder %s318, %s319
      %p333 = scmp.eq.s32.totalorder %s36, 7
      %p334 = por %p332, %p333
      %p336 = scmp.ne.s32.totalorder %s319, %s335
      %p337 = scmp.eq.s32.totalorder %s36, 0
      %p338 = por %p336, %p337
      %p339 = scmp.le.s32.totalorder 1, %s30
      %p340 = scmp.lt.s32.totalorder %s30, 9
      %p341 = pnand %p339, %p340
      %p342 = pneg %p341
      // Predicated region
      $region9: #{tpu_custom_call.1} parent=5 // pred_check
        _
      $region10: #{tpu_custom_call.1} parent=5 // pred_check_branch
        %344 = sbr.rel (%p341) target = $region12
      $region11: #{tpu_custom_call.1} parent=5 // pred_region
        %s345 = ssub.s32 %s30, 1
        // Predicated region
        $region13: #{tpu_custom_call.1} parent=11 // pred_check
          %p346 = pneg %p156
        $region14: #{tpu_custom_call.1} parent=11 // pred_check_branch
          %348 = sbr.rel (%p346) target = $region16
        $region15: #{tpu_custom_call.1} parent=11 // pred_region
          %s350 = ssub.s32 2048, 2048
          %351 = vsyncadd [#allocation15], %s350
          %s352 = sshll.u32 [#allocation14], 4
          %s353 = int_to_ptr.vmem [resolvable:$true] %s352
          %358 = dma.hbm_to_vmem [thread:$0]  %s3, 2048, %s353, [#allocation15], 128, 128, 8
        $region16: #{tpu_custom_call.1} parent=11 // pred_fallthru
          _
        // Predicated region
        $region17: #{tpu_custom_call.1} parent=11 // pred_check
          %p359 = pneg %p177
        $region18: #{tpu_custom_call.1} parent=11 // pred_check_branch
          %361 = sbr.rel (%p359) target = $region20
        $region19: #{tpu_custom_call.1} parent=11 // pred_region
          %s363 = ssub.s32 2048, 2048
          %364 = vsyncadd [#allocation15], %s363
          %s365 = sshll.u32 [#allocation16], 4
          %s366 = int_to_ptr.vmem [resolvable:$true] %s365
          %371 = dma.hbm_to_vmem [thread:$0]  %s4, 2048, %s366, [#allocation15], 128, 128, 8
        $region20: #{tpu_custom_call.1} parent=11 // pred_fallthru
          _
        // Predicated region
        $region21: #{tpu_custom_call.1} parent=11 // pred_check
          %p372 = pneg %p198
        $region22: #{tpu_custom_call.1} parent=11 // pred_check_branch
          %374 = sbr.rel (%p372) target = $region24
        $region23: #{tpu_custom_call.1} parent=11 // pred_region
          %s376 = ssub.s32 2048, 2048
          %377 = vsyncadd [#allocation18], %s376
          %s378 = sshll.u32 [#allocation17], 4
          %s379 = int_to_ptr.vmem [resolvable:$true] %s378
          %384 = dma.hbm_to_vmem [thread:$0]  %s5, 2048, %s379, [#allocation18], 128, 128, 8
        $region24: #{tpu_custom_call.1} parent=11 // pred_fallthru
          _
        // Predicated region
        $region25: #{tpu_custom_call.1} parent=11 // pred_check
          %p385 = pneg %p219
        $region26: #{tpu_custom_call.1} parent=11 // pred_check_branch
          %387 = sbr.rel (%p385) target = $region28
        $region27: #{tpu_custom_call.1} parent=11 // pred_region
          %s389 = ssub.s32 512, 512
          %390 = vsyncadd [#allocation18], %s389
          %s391 = sshll.u32 [#allocation19], 4
          %s392 = int_to_ptr.vmem [resolvable:$true] %s391
          %397 = dma.hbm_to_vmem [thread:$0]  %s6, 512, %s392, [#allocation18], 128, 128, 8
        $region28: #{tpu_custom_call.1} parent=11 // pred_fallthru
          _
        // Predicated region
        $region29: #{tpu_custom_call.1} parent=11 // pred_check
          %p398 = pneg %p240
        $region30: #{tpu_custom_call.1} parent=11 // pred_check_branch
          %400 = sbr.rel (%p398) target = $region32
        $region31: #{tpu_custom_call.1} parent=11 // pred_region
          %s402 = ssub.s32 512, 512
          %403 = vsyncadd [#allocation21], %s402
          %s404 = sshll.u32 [#allocation20], 4
          %s405 = int_to_ptr.vmem [resolvable:$true] %s404
          %410 = dma.hbm_to_vmem [thread:$0]  %s7, 512, %s405, [#allocation21], 128, 128, 8
        $region32: #{tpu_custom_call.1} parent=11 // pred_fallthru
          _
        // Predicated region
        $region33: #{tpu_custom_call.1} parent=11 // pred_check
          %p411 = pneg %p261
        $region34: #{tpu_custom_call.1} parent=11 // pred_check_branch
          %413 = sbr.rel (%p411) target = $region36
        $region35: #{tpu_custom_call.1} parent=11 // pred_region
          %s415 = ssub.s32 16, 16
          %416 = vsyncadd [#allocation21], %s415
          %s418 = sshll.u32 [#allocation22], 4
          %s419 = int_to_ptr.vmem [resolvable:$true] %s418
          %421 = dma.hbm_to_vmem [thread:$0]  %s8, 16, %s419, [#allocation21]
        $region36: #{tpu_custom_call.1} parent=11 // pred_fallthru
          _
        // Predicated region
        $region37: #{tpu_custom_call.1} parent=11 // pred_check
          %p422 = pneg %p282
        $region38: #{tpu_custom_call.1} parent=11 // pred_check_branch
          %424 = sbr.rel (%p422) target = $region40
        $region39: #{tpu_custom_call.1} parent=11 // pred_region
          %s426 = ssub.s32 2048, 2048
          %427 = vsyncadd [#allocation24], %s426
          %s428 = sshll.u32 [#allocation23], 4
          %s429 = int_to_ptr.vmem [resolvable:$true] %s428
          %434 = dma.hbm_to_vmem [thread:$0]  %s9, 2048, %s429, [#allocation24], 128, 128, 8
        $region40: #{tpu_custom_call.1} parent=11 // pred_fallthru
          _
        // Predicated region
        $region41: #{tpu_custom_call.1} parent=11 // pred_check
          %p435 = pneg %p303
        $region42: #{tpu_custom_call.1} parent=11 // pred_check_branch
          %437 = sbr.rel (%p435) target = $region44
        $region43: #{tpu_custom_call.1} parent=11 // pred_region
          %s439 = ssub.s32 16, 16
          %440 = vsyncadd [#allocation24], %s439
          %s442 = sshll.u32 [#allocation25], 4
          %s443 = int_to_ptr.vmem [resolvable:$true] %s442
          %445 = dma.hbm_to_vmem [thread:$0]  %s10, 16, %s443, [#allocation24]
        $region44: #{tpu_custom_call.1} parent=11 // pred_fallthru
          _
      $region12: #{tpu_custom_call.1} parent=5 // pred_fallthru
        _
      %p446 = scmp.lt.s32.totalorder %s30, 8
      // Predicated region
      $region45: #{tpu_custom_call.1} parent=5 // pred_check
        %p447 = pneg %p446
      $region46: #{tpu_custom_call.1} parent=5 // pred_check_branch
        %449 = sbr.rel (%p447) target = $region48
      $region47: #{tpu_custom_call.1} parent=5 // pred_region
        // Predicated region
        $region49: #{tpu_custom_call.1} parent=47 // pred_check
          %p450 = pneg %p71
        $region50: #{tpu_custom_call.1} parent=47 // pred_check_branch
          %452 = sbr.rel (%p450) target = $region52
        $region51: #{tpu_custom_call.1} parent=47 // pred_region
          %s453 = sand.u32 %s61, 1
          %s454 = scalar_lea.sflag [#allocation9], %s453
          %s455 = sand.u32 %s61, 1
          %s456 = smul.addr %s455, 8
          %s457 = scalar_lea.vmem [#allocation8], %s456
          %s459 = ssub.s32 128, 128
          %460 = vsyncadd %s454, %s459
          %s461 = smul.addr %s37, 2
          %s462 = sadd.s32 %s38, %s461
          %s463 = smul.addr %s462, 128
          %s464 = scalar_lea.hbm %s0, %s463
          %s466 = sshll.u32 %s457, 4
          %s467 = int_to_ptr.vmem [resolvable:$true] %s466
          %469 = dma.hbm_to_vmem [thread:$0]  %s464, 128, %s467, %s454
        $region52: #{tpu_custom_call.1} parent=47 // pred_fallthru
          _
        // Predicated region
        $region53: #{tpu_custom_call.1} parent=47 // pred_check
          %p470 = pneg %p103
        $region54: #{tpu_custom_call.1} parent=47 // pred_check_branch
          %472 = sbr.rel (%p470) target = $region56
        $region55: #{tpu_custom_call.1} parent=47 // pred_region
          %s473 = sand.u32 %s30, 1
          %s474 = scalar_lea.sflag [#allocation12], %s473
          %s475 = sand.u32 %s93, 1
          %s476 = smul.addr %s475, 8
          %s477 = scalar_lea.vmem [#allocation11], %s476
          %p478 = scmp.eq.s32.totalorder %s38, 0
          %s479 = scalar_select %p478, %s39, 0
          %s481 = ssub.s32 128, 128
          %482 = vsyncadd %s474, %s481
          %s483 = smul.addr %s37, 2
          %s484 = sadd.s32 %s479, %s483
          %s485 = smul.addr %s484, 128
          %s486 = scalar_lea.hbm %s1, %s485
          %s488 = sshll.u32 %s477, 4
          %s489 = int_to_ptr.vmem [resolvable:$true] %s488
          %491 = dma.hbm_to_vmem [thread:$0]  %s486, 128, %s489, %s474
        $region56: #{tpu_custom_call.1} parent=47 // pred_fallthru
          _
        // Predicated region
        $region57: #{tpu_custom_call.1} parent=47 // pred_check
          %p492 = pneg %p129
        $region58: #{tpu_custom_call.1} parent=47 // pred_check_branch
          %494 = sbr.rel (%p492) target = $region60
        $region59: #{tpu_custom_call.1} parent=47 // pred_region
          %s495 = sand.u32 %s30, 1
          %s496 = scalar_lea.sflag [#allocation12], %s495
          %s497 = sand.u32 %s119, 1
          %s498 = smul.addr %s497, 8
          %s499 = scalar_lea.vmem [#allocation13], %s498
          %s501 = ssub.s32 128, 128
          %502 = vsyncadd %s496, %s501
          %s503 = smul.addr %s37, 128
          %s504 = scalar_lea.hbm %s2, %s503
          %s506 = sshll.u32 %s499, 4
          %s507 = int_to_ptr.vmem [resolvable:$true] %s506
          %509 = dma.hbm_to_vmem [thread:$0]  %s504, 128, %s507, %s496
        $region60: #{tpu_custom_call.1} parent=47 // pred_fallthru
          _
      $region48: #{tpu_custom_call.1} parent=5 // pred_fallthru
        _
      %p510 = scmp.le.s32.totalorder 1, %s30
      %p511 = scmp.lt.s32.totalorder %s30, 9
      %p512 = pnand %p510, %p511
      %p513 = pneg %p512
      // Predicated region
      $region61: #{tpu_custom_call.1} parent=5 // pred_check
        _
      $region62: #{tpu_custom_call.1} parent=5 // pred_check_branch
        %515 = sbr.rel (%p512) target = $region64
      $region63: #{tpu_custom_call.1} parent=5 // pred_region
        %s516 = ssub.s32 %s30, 1
        %s517 = sand.u32 %s64, 1
        %s518 = scalar_lea.sflag [#allocation9], %s517
        %s519 = sand.u32 %s64, 1
        %s520 = smul.addr %s519, 8
        %s521 = scalar_lea.vmem [#allocation8], %s520
        // Predicated region
        $region65: #{tpu_custom_call.1} parent=63 // pred_check
          %p522 = pneg %p77
        $region66: #{tpu_custom_call.1} parent=63 // pred_check_branch
          %524 = sbr.rel (%p522) target = $region68
        $region67: #{tpu_custom_call.1} parent=63 // pred_region
          %525 = dma.done %s518, 128
        $region68: #{tpu_custom_call.1} parent=63 // pred_fallthru
          _
        %s526 = sand.u32 %s35, 1
        %s527 = scalar_lea.sflag [#allocation12], %s526
        %s528 = sand.u32 %s96, 1
        %s529 = smul.addr %s528, 8
        %s530 = scalar_lea.vmem [#allocation11], %s529
        // Predicated region
        $region69: #{tpu_custom_call.1} parent=63 // pred_check
          %p531 = pneg %p109
        $region70: #{tpu_custom_call.1} parent=63 // pred_check_branch
          %533 = sbr.rel (%p531) target = $region72
        $region71: #{tpu_custom_call.1} parent=63 // pred_region
          %534 = dma.done %s527, 128
        $region72: #{tpu_custom_call.1} parent=63 // pred_fallthru
          _
        %s535 = sand.u32 %s35, 1
        %s536 = scalar_lea.sflag [#allocation12], %s535
        %s537 = sand.u32 %s122, 1
        %s538 = smul.addr %s537, 8
        %s539 = scalar_lea.vmem [#allocation13], %s538
        // Predicated region
        $region73: #{tpu_custom_call.1} parent=63 // pred_check
          %p540 = pneg %p135
        $region74: #{tpu_custom_call.1} parent=63 // pred_check_branch
          %542 = sbr.rel (%p540) target = $region76
        $region75: #{tpu_custom_call.1} parent=63 // pred_region
          %543 = dma.done %s536, 128
        $region76: #{tpu_custom_call.1} parent=63 // pred_fallthru
          _
        // Predicated region
        $region77: #{tpu_custom_call.1} parent=63 // pred_check
          %p544 = pneg %p156
        $region78: #{tpu_custom_call.1} parent=63 // pred_check_branch
          %546 = sbr.rel (%p544) target = $region80
        $region79: #{tpu_custom_call.1} parent=63 // pred_region
          %547 = dma.done [#allocation15], 2048
        $region80: #{tpu_custom_call.1} parent=63 // pred_fallthru
          _
        // Predicated region
        $region81: #{tpu_custom_call.1} parent=63 // pred_check
          %p548 = pneg %p177
        $region82: #{tpu_custom_call.1} parent=63 // pred_check_branch
          %550 = sbr.rel (%p548) target = $region84
        $region83: #{tpu_custom_call.1} parent=63 // pred_region
          %551 = dma.done [#allocation15], 2048
        $region84: #{tpu_custom_call.1} parent=63 // pred_fallthru
          _
        // Predicated region
        $region85: #{tpu_custom_call.1} parent=63 // pred_check
          %p552 = pneg %p198
        $region86: #{tpu_custom_call.1} parent=63 // pred_check_branch
          %554 = sbr.rel (%p552) target = $region88
        $region87: #{tpu_custom_call.1} parent=63 // pred_region
          %555 = dma.done [#allocation18], 2048
        $region88: #{tpu_custom_call.1} parent=63 // pred_fallthru
          _
        // Predicated region
        $region89: #{tpu_custom_call.1} parent=63 // pred_check
          %p556 = pneg %p219
        $region90: #{tpu_custom_call.1} parent=63 // pred_check_branch
          %558 = sbr.rel (%p556) target = $region92
        $region91: #{tpu_custom_call.1} parent=63 // pred_region
          %559 = dma.done [#allocation18], 512
        $region92: #{tpu_custom_call.1} parent=63 // pred_fallthru
          _
        // Predicated region
        $region93: #{tpu_custom_call.1} parent=63 // pred_check
          %p560 = pneg %p240
        $region94: #{tpu_custom_call.1} parent=63 // pred_check_branch
          %562 = sbr.rel (%p560) target = $region96
        $region95: #{tpu_custom_call.1} parent=63 // pred_region
          %563 = dma.done [#allocation21], 512
        $region96: #{tpu_custom_call.1} parent=63 // pred_fallthru
          _
        // Predicated region
        $region97: #{tpu_custom_call.1} parent=63 // pred_check
          %p564 = pneg %p261
        $region98: #{tpu_custom_call.1} parent=63 // pred_check_branch
          %566 = sbr.rel (%p564) target = $region100
        $region99: #{tpu_custom_call.1} parent=63 // pred_region
          %567 = dma.done [#allocation21], 16
        $region100: #{tpu_custom_call.1} parent=63 // pred_fallthru
          _
        // Predicated region
        $region101: #{tpu_custom_call.1} parent=63 // pred_check
          %p568 = pneg %p282
        $region102: #{tpu_custom_call.1} parent=63 // pred_check_branch
          %570 = sbr.rel (%p568) target = $region104
        $region103: #{tpu_custom_call.1} parent=63 // pred_region
          %571 = dma.done [#allocation24], 2048
        $region104: #{tpu_custom_call.1} parent=63 // pred_fallthru
          _
        // Predicated region
        $region105: #{tpu_custom_call.1} parent=63 // pred_check
          %p572 = pneg %p303
        $region106: #{tpu_custom_call.1} parent=63 // pred_check_branch
          %574 = sbr.rel (%p572) target = $region108
        $region107: #{tpu_custom_call.1} parent=63 // pred_region
          %575 = dma.done [#allocation24], 16
        $region108: #{tpu_custom_call.1} parent=63 // pred_fallthru
          _
        %s576 = sand.u32 %s64, 1
        %s577 = scalar_lea.sflag [#allocation9], %s576
        %s578 = sand.u32 %s64, 1
        %s579 = smul.addr %s578, 8
        %s580 = scalar_lea.vmem [#allocation8], %s579
        %p581 = pneg %p77
        %p582 = pneg %p74
        %s583 = sand.u32 %s35, 1
        %s584 = scalar_lea.sflag [#allocation12], %s583
        %s585 = sand.u32 %s96, 1
        %s586 = smul.addr %s585, 8
        %s587 = scalar_lea.vmem [#allocation11], %s586
        %p588 = pneg %p109
        %p589 = pneg %p106
        %s590 = sand.u32 %s35, 1
        %s591 = scalar_lea.sflag [#allocation12], %s590
        %s592 = sand.u32 %s122, 1
        %s593 = smul.addr %s592, 8
        %s594 = scalar_lea.vmem [#allocation13], %s593
        %p595 = pneg %p135
        %p596 = pneg %p132
        %p597 = pneg %p156
        %p598 = pneg %p153
        %p599 = pneg %p177
        %p600 = pneg %p174
        %p601 = pneg %p198
        %p602 = pneg %p195
        %p603 = pneg %p219
        %p604 = pneg %p216
        %p605 = pneg %p240
        %p606 = pneg %p237
        %p607 = pneg %p261
        %p608 = pneg %p258
        %p609 = pneg %p282
        %p610 = pneg %p279
        %p611 = pneg %p303
        %p612 = pneg %p300
        %p613 = pneg %p331
        %p614 = pneg %p328
        %s615 = sand.u32 %s318, 1
        %s616 = scalar_lea.sflag [#allocation10], %s615
        %s617 = sand.u32 %s318, 1
        %s618 = smul.addr %s617, 8
        %s619 = scalar_lea.vmem [#allocation26], %s618
        %p620 = scmp.eq.s32.totalorder %s41, 0
        %s621 = scalar_select %p620, %s42, 0
        %p622 = scmp.eq.s32.totalorder %s42, 0
        // Predicated region
        $region109: #{tpu_custom_call.1} parent=63 // pred_check
          %p623 = pneg %p622
        $region110: #{tpu_custom_call.1} parent=63 // pred_check_branch
          %625 = sbr.rel (%p623) target = $region112
        $region111: #{tpu_custom_call.1} parent=63 // pred_region
          %v626 = vld [vmem:[%s539] sm:$0x3f]
          %v627 = vld [vmem:[%s521] sm:$0xff]
          %vm628 = vcmask 261120
          %v629 = vsel %vm628, %v627, 0.0
          %630 = vadd.xlane.f32.xlu0 %v629
          %v631 = vpop.xlane.xlu0 %630
          %v632 = vrcp.pop 32.0
          %v633 = vmul.f32 %v631, %v632
          %v634 = vsub.f32 %v627, %v633
          %v635 = vmul.f32 %v634, %v634
          %v636 = vsel %vm628, %v635, 0.0
          %637 = vadd.xlane.f32.xlu0 %v636
          %v638 = vpop.xlane.xlu0 %637
          %v639 = vmul.f32 %v638, %v632
          %v640 = vadd.f32 %v639, 1e-05
          %v641 = vrsqrt.pop %v640
          %v642 = vmul.f32 %v634, %v641
          %v643 = vlaneseq
          %v644 = vshrl.u32 %v643, 7
          %v645 = vsub.s32 1, %v644
          %v646 = vrot.slane %v626, %v645
          %v647 = vmul.f32 %v642, %v646
          %v648 = vlaneseq
          %v649 = vshrl.u32 %v648, 7
          %v650 = vsub.s32 0, %v649
          %v651 = vrot.slane %v626, %v650
          %v652 = vadd.f32 %v647, %v651
          %v653 = vld [vmem:[#allocation14] sm:$0xff]
          %v654 = vld [vmem:[#allocation14 + $0x8] sm:$0xff]
          %v655 = vld [vmem:[#allocation14 + $0x10] sm:$0xff]
          %v656 = vld [vmem:[#allocation14 + $0x18] sm:$0xff]
          %v658 = vsel %vm628, %v652, 0
          %660 = vmatprep.subr.mxu0 0.0
          %661 = vmatpush1.msra.mxu0 %v653
          %662 = vmatprep.subr.mxu0 0.0
          %663 = vmatpush1.msra.mxu0 %v654
          %664 = vmatprep.subr.mxu0 0.0
          %665 = vmatpush1.msra.mxu0 %v655
          %666 = vmatprep.subr.mxu0 0.0
          %667 = vmatpush1.msra.mxu0 %v656
          %668 = vmatprep.subr.mxu0 0.0
          %669 = vmatpush1.msra.mxu0 0.0
          %670 = vmatprep.subr.mxu0 0.0
          %671 = vmatpush1.msra.mxu0 0.0
          %672 = vmatprep.subr.mxu0 0.0
          %673 = vmatpush1.msra.mxu0 0.0
          %674 = vmatprep.subr.mxu0 0.0
          %675 = vmatpush1.msra.mxu0 0.0
          %676 = vmatprep.subr.mxu0 0.0
          %677 = vmatpush1.msra.mxu0 0.0
          %678 = vmatprep.subr.mxu0 0.0
          %679 = vmatpush1.msra.mxu0 0.0
          %680 = vmatprep.subr.mxu0 0.0
          %681 = vmatpush1.msra.mxu0 0.0
          %682 = vmatprep.subr.mxu0 0.0
          %683 = vmatpush1.msra.mxu0 0.0
          %684 = vmatprep.subr.mxu0 0.0
          %685 = vmatpush1.msra.mxu0 0.0
          %686 = vmatprep.subr.mxu0 0.0
          %687 = vmatpush1.msra.mxu0 0.0
          %688 = vmatprep.subr.mxu0 0.0
          %689 = vmatpush1.msra.mxu0 0.0
          %690 = vmatprep.subr.mxu0 0.0
          %691 = vmatpush1.msra.mxu0 0.0
          %692 = vmatprep.subr.mxu0 0.0
          %693 = vmatpush1.msra.mxu0 0.0
          %694 = vmatprep.subr.mxu0 0.0
          %695 = vmatpush1.msra.mxu0 0.0
          %696 = vmatprep.subr.mxu0 0.0
          %697 = vmatpush1.msra.mxu0 0.0
          %698 = vmatprep.subr.mxu0 0.0
          %699 = vmatpush1.msra.mxu0 0.0
          %700 = vmatprep.subr.mxu0 0.0
          %701 = vmatpush1.msra.mxu0 0.0
          %702 = vmatprep.subr.mxu0 0.0
          %703 = vmatpush1.msra.mxu0 0.0
          %704 = vmatprep.subr.mxu0 0.0
          %705 = vmatpush1.msra.mxu0 0.0
          %706 = vmatprep.subr.mxu0 0.0
          %707 = vmatpush1.msra.mxu0 0.0
          %708 = vmatprep.subr.mxu0 0.0
          %709 = vmatpush1.msra.mxu0 0.0
          %710 = vmatprep.subr.mxu0 0.0
          %711 = vmatpush1.msra.mxu0 0.0
          %712 = vmatprep.subr.mxu0 0.0
          %713 = vmatpush1.msra.mxu0 0.0
          %714 = vmatprep.subr.mxu0 0.0
          %715 = vmatpush1.msra.mxu0 0.0
          %716 = vmatprep.subr.mxu0 0.0
          %717 = vmatpush1.msra.mxu0 0.0
          %718 = vmatprep.subr.mxu0 0.0
          %719 = vmatpush1.msra.mxu0 0.0
          %720 = vmatprep.subr.mxu0 0.0
          %721 = vmatpush1.msra.mxu0 0.0
          %722 = vmatprep.subr.mxu0 0.0
          %723 = vmatpush1.msra.mxu0 0.0
          %724 = vmatprep.mubr.f32.mxu0 0.0
          %725 = vmatmul.mubr.f32.gmra.mrb[0].mxu0 %v658
          %v726 = vpop.f32.mrb[0].mxu0
          %v727 = vadd.f32 0.0, %v726
          %v728 = vpop.f32.mrb[0].mxu0
          %729 = vdwg.mxu0
          %vm730 = vcmask 64512
          %731 = vst.msk [vmem:[#allocation2] sm:$0xff] %vm730, %v727
          %s732 = scalar_lea.vmem [#allocation14], 32
          %v733 = vld [vmem:[%s732] sm:$0xff]
          %v734 = vld [vmem:[%s732 + $0x8] sm:$0xff]
          %v735 = vld [vmem:[%s732 + $0x10] sm:$0xff]
          %v736 = vld [vmem:[%s732 + $0x18] sm:$0xff]
          %737 = vmatprep.subr.mxu0 0.0
          %738 = vmatpush1.msra.mxu0 %v733
          %739 = vmatprep.subr.mxu0 0.0
          %740 = vmatpush1.msra.mxu0 %v734
          %741 = vmatprep.subr.mxu0 0.0
          %742 = vmatpush1.msra.mxu0 %v735
          %743 = vmatprep.subr.mxu0 0.0
          %744 = vmatpush1.msra.mxu0 %v736
          %745 = vmatprep.subr.mxu0 0.0
          %746 = vmatpush1.msra.mxu0 0.0
          %747 = vmatprep.subr.mxu0 0.0
          %748 = vmatpush1.msra.mxu0 0.0
          %749 = vmatprep.subr.mxu0 0.0
          %750 = vmatpush1.msra.mxu0 0.0
          %751 = vmatprep.subr.mxu0 0.0
          %752 = vmatpush1.msra.mxu0 0.0
          %753 = vmatprep.subr.mxu0 0.0
          %754 = vmatpush1.msra.mxu0 0.0
          %755 = vmatprep.subr.mxu0 0.0
          %756 = vmatpush1.msra.mxu0 0.0
          %757 = vmatprep.subr.mxu0 0.0
          %758 = vmatpush1.msra.mxu0 0.0
          %759 = vmatprep.subr.mxu0 0.0
          %760 = vmatpush1.msra.mxu0 0.0
          %761 = vmatprep.subr.mxu0 0.0
          %762 = vmatpush1.msra.mxu0 0.0
          %763 = vmatprep.subr.mxu0 0.0
          %764 = vmatpush1.msra.mxu0 0.0
          %765 = vmatprep.subr.mxu0 0.0
          %766 = vmatpush1.msra.mxu0 0.0
          %767 = vmatprep.subr.mxu0 0.0
          %768 = vmatpush1.msra.mxu0 0.0
          %769 = vmatprep.subr.mxu0 0.0
          %770 = vmatpush1.msra.mxu0 0.0
          %771 = vmatprep.subr.mxu0 0.0
          %772 = vmatpush1.msra.mxu0 0.0
          %773 = vmatprep.subr.mxu0 0.0
          %774 = vmatpush1.msra.mxu0 0.0
          %775 = vmatprep.subr.mxu0 0.0
          %776 = vmatpush1.msra.mxu0 0.0
          %777 = vmatprep.subr.mxu0 0.0
          %778 = vmatpush1.msra.mxu0 0.0
          %779 = vmatprep.subr.mxu0 0.0
          %780 = vmatpush1.msra.mxu0 0.0
          %781 = vmatprep.subr.mxu0 0.0
          %782 = vmatpush1.msra.mxu0 0.0
          %783 = vmatprep.subr.mxu0 0.0
          %784 = vmatpush1.msra.mxu0 0.0
          %785 = vmatprep.subr.mxu0 0.0
          %786 = vmatpush1.msra.mxu0 0.0
          %787 = vmatprep.subr.mxu0 0.0
          %788 = vmatpush1.msra.mxu0 0.0
          %789 = vmatprep.subr.mxu0 0.0
          %790 = vmatpush1.msra.mxu0 0.0
          %791 = vmatprep.subr.mxu0 0.0
          %792 = vmatpush1.msra.mxu0 0.0
          %793 = vmatprep.subr.mxu0 0.0
          %794 = vmatpush1.msra.mxu0 0.0
          %795 = vmatprep.subr.mxu0 0.0
          %796 = vmatpush1.msra.mxu0 0.0
          %797 = vmatprep.subr.mxu0 0.0
          %798 = vmatpush1.msra.mxu0 0.0
          %799 = vmatprep.subr.mxu0 0.0
          %800 = vmatpush1.msra.mxu0 0.0
          %801 = vmatprep.mubr.f32.mxu0 0.0
          %802 = vmatmul.mubr.f32.gmra.mrb[0].mxu0 %v658
          %v803 = vpop.f32.mrb[0].mxu0
          %v804 = vadd.f32 0.0, %v803
          %v805 = vpop.f32.mrb[0].mxu0
          %806 = vdwg.mxu0
          %s807 = scalar_lea.vmem [#allocation2], 8
          %808 = vst.msk [vmem:[%s807] sm:$0xff] %vm730, %v804
          %s809 = scalar_lea.vmem [#allocation14], 64
          %v810 = vld [vmem:[%s809] sm:$0xff]
          %v811 = vld [vmem:[%s809 + $0x8] sm:$0xff]
          %v812 = vld [vmem:[%s809 + $0x10] sm:$0xff]
          %v813 = vld [vmem:[%s809 + $0x18] sm:$0xff]
          %814 = vmatprep.subr.mxu0 0.0
          %815 = vmatpush1.msra.mxu0 %v810
          %816 = vmatprep.subr.mxu0 0.0
          %817 = vmatpush1.msra.mxu0 %v811
          %818 = vmatprep.subr.mxu0 0.0
          %819 = vmatpush1.msra.mxu0 %v812
          %820 = vmatprep.subr.mxu0 0.0
          %821 = vmatpush1.msra.mxu0 %v813
          %822 = vmatprep.subr.mxu0 0.0
          %823 = vmatpush1.msra.mxu0 0.0
          %824 = vmatprep.subr.mxu0 0.0
          %825 = vmatpush1.msra.mxu0 0.0
          %826 = vmatprep.subr.mxu0 0.0
          %827 = vmatpush1.msra.mxu0 0.0
          %828 = vmatprep.subr.mxu0 0.0
          %829 = vmatpush1.msra.mxu0 0.0
          %830 = vmatprep.subr.mxu0 0.0
          %831 = vmatpush1.msra.mxu0 0.0
          %832 = vmatprep.subr.mxu0 0.0
          %833 = vmatpush1.msra.mxu0 0.0
          %834 = vmatprep.subr.mxu0 0.0
          %835 = vmatpush1.msra.mxu0 0.0
          %836 = vmatprep.subr.mxu0 0.0
          %837 = vmatpush1.msra.mxu0 0.0
          %838 = vmatprep.subr.mxu0 0.0
          %839 = vmatpush1.msra.mxu0 0.0
          %840 = vmatprep.subr.mxu0 0.0
          %841 = vmatpush1.msra.mxu0 0.0
          %842 = vmatprep.subr.mxu0 0.0
          %843 = vmatpush1.msra.mxu0 0.0
          %844 = vmatprep.subr.mxu0 0.0
          %845 = vmatpush1.msra.mxu0 0.0
          %846 = vmatprep.subr.mxu0 0.0
          %847 = vmatpush1.msra.mxu0 0.0
          %848 = vmatprep.subr.mxu0 0.0
          %849 = vmatpush1.msra.mxu0 0.0
          %850 = vmatprep.subr.mxu0 0.0
          %851 = vmatpush1.msra.mxu0 0.0
          %852 = vmatprep.subr.mxu0 0.0
          %853 = vmatpush1.msra.mxu0 0.0
          %854 = vmatprep.subr.mxu0 0.0
          %855 = vmatpush1.msra.mxu0 0.0
          %856 = vmatprep.subr.mxu0 0.0
          %857 = vmatpush1.msra.mxu0 0.0
          %858 = vmatprep.subr.mxu0 0.0
          %859 = vmatpush1.msra.mxu0 0.0
          %860 = vmatprep.subr.mxu0 0.0
          %861 = vmatpush1.msra.mxu0 0.0
          %862 = vmatprep.subr.mxu0 0.0
          %863 = vmatpush1.msra.mxu0 0.0
          %864 = vmatprep.subr.mxu0 0.0
          %865 = vmatpush1.msra.mxu0 0.0
          %866 = vmatprep.subr.mxu0 0.0
          %867 = vmatpush1.msra.mxu0 0.0
          %868 = vmatprep.subr.mxu0 0.0
          %869 = vmatpush1.msra.mxu0 0.0
          %870 = vmatprep.subr.mxu0 0.0
          %871 = vmatpush1.msra.mxu0 0.0
          %872 = vmatprep.subr.mxu0 0.0
          %873 = vmatpush1.msra.mxu0 0.0
          %874 = vmatprep.subr.mxu0 0.0
          %875 = vmatpush1.msra.mxu0 0.0
          %876 = vmatprep.subr.mxu0 0.0
          %877 = vmatpush1.msra.mxu0 0.0
          %878 = vmatprep.mubr.f32.mxu0 0.0
          %879 = vmatmul.mubr.f32.gmra.mrb[0].mxu0 %v658
          %v880 = vpop.f32.mrb[0].mxu0
          %v881 = vadd.f32 0.0, %v880
          %v882 = vpop.f32.mrb[0].mxu0
          %883 = vdwg.mxu0
          %s884 = scalar_lea.vmem [#allocation2], 16
          %885 = vst.msk [vmem:[%s884] sm:$0xff] %vm730, %v881
          %s886 = scalar_lea.vmem [#allocation14], 96
          %v887 = vld [vmem:[%s886] sm:$0xff]
          %v888 = vld [vmem:[%s886 + $0x8] sm:$0xff]
          %v889 = vld [vmem:[%s886 + $0x10] sm:$0xff]
          %v890 = vld [vmem:[%s886 + $0x18] sm:$0xff]
          %891 = vmatprep.subr.mxu0 0.0
          %892 = vmatpush1.msra.mxu0 %v887
          %893 = vmatprep.subr.mxu0 0.0
          %894 = vmatpush1.msra.mxu0 %v888
          %895 = vmatprep.subr.mxu0 0.0
          %896 = vmatpush1.msra.mxu0 %v889
          %897 = vmatprep.subr.mxu0 0.0
          %898 = vmatpush1.msra.mxu0 %v890
          %899 = vmatprep.subr.mxu0 0.0
          %900 = vmatpush1.msra.mxu0 0.0
          %901 = vmatprep.subr.mxu0 0.0
          %902 = vmatpush1.msra.mxu0 0.0
          %903 = vmatprep.subr.mxu0 0.0
          %904 = vmatpush1.msra.mxu0 0.0
          %905 = vmatprep.subr.mxu0 0.0
          %906 = vmatpush1.msra.mxu0 0.0
          %907 = vmatprep.subr.mxu0 0.0
          %908 = vmatpush1.msra.mxu0 0.0
          %909 = vmatprep.subr.mxu0 0.0
          %910 = vmatpush1.msra.mxu0 0.0
          %911 = vmatprep.subr.mxu0 0.0
          %912 = vmatpush1.msra.mxu0 0.0
          %913 = vmatprep.subr.mxu0 0.0
          %914 = vmatpush1.msra.mxu0 0.0
          %915 = vmatprep.subr.mxu0 0.0
          %916 = vmatpush1.msra.mxu0 0.0
          %917 = vmatprep.subr.mxu0 0.0
          %918 = vmatpush1.msra.mxu0 0.0
          %919 = vmatprep.subr.mxu0 0.0
          %920 = vmatpush1.msra.mxu0 0.0
          %921 = vmatprep.subr.mxu0 0.0
          %922 = vmatpush1.msra.mxu0 0.0
          %923 = vmatprep.subr.mxu0 0.0
          %924 = vmatpush1.msra.mxu0 0.0
          %925 = vmatprep.subr.mxu0 0.0
          %926 = vmatpush1.msra.mxu0 0.0
          %927 = vmatprep.subr.mxu0 0.0
          %928 = vmatpush1.msra.mxu0 0.0
          %929 = vmatprep.subr.mxu0 0.0
          %930 = vmatpush1.msra.mxu0 0.0
          %931 = vmatprep.subr.mxu0 0.0
          %932 = vmatpush1.msra.mxu0 0.0
          %933 = vmatprep.subr.mxu0 0.0
          %934 = vmatpush1.msra.mxu0 0.0
          %935 = vmatprep.subr.mxu0 0.0
          %936 = vmatpush1.msra.mxu0 0.0
          %937 = vmatprep.subr.mxu0 0.0
          %938 = vmatpush1.msra.mxu0 0.0
          %939 = vmatprep.subr.mxu0 0.0
          %940 = vmatpush1.msra.mxu0 0.0
          %941 = vmatprep.subr.mxu0 0.0
          %942 = vmatpush1.msra.mxu0 0.0
          %943 = vmatprep.subr.mxu0 0.0
          %944 = vmatpush1.msra.mxu0 0.0
          %945 = vmatprep.subr.mxu0 0.0
          %946 = vmatpush1.msra.mxu0 0.0
          %947 = vmatprep.subr.mxu0 0.0
          %948 = vmatpush1.msra.mxu0 0.0
          %949 = vmatprep.subr.mxu0 0.0
          %950 = vmatpush1.msra.mxu0 0.0
          %951 = vmatprep.subr.mxu0 0.0
          %952 = vmatpush1.msra.mxu0 0.0
          %953 = vmatprep.subr.mxu0 0.0
          %954 = vmatpush1.msra.mxu0 0.0
          %955 = vmatprep.mubr.f32.mxu0 0.0
          %956 = vmatmul.mubr.f32.gmra.mrb[0].mxu0 %v658
          %v957 = vpop.f32.mrb[0].mxu0
          %v958 = vadd.f32 0.0, %v957
          %v959 = vpop.f32.mrb[0].mxu0
          %960 = vdwg.mxu0
          %s961 = scalar_lea.vmem [#allocation2], 24
          %962 = vst.msk [vmem:[%s961] sm:$0xff] %vm730, %v958
          %vm963 = vcmask 7168
          %964 = vst.msk [vmem:[#allocation5] sm:$0xff] %vm963, -inf
          %965 = vst.msk [vmem:[#allocation5 + $0x8] sm:$0xff] %vm963, -inf
          %966 = vst.msk [vmem:[#allocation5 + $0x10] sm:$0xff] %vm963, -inf
          %967 = vst.msk [vmem:[#allocation5 + $0x18] sm:$0xff] %vm963, -inf
          %968 = vst.msk [vmem:[#allocation6] sm:$0xff] %vm963, 0.0
          %969 = vst.msk [vmem:[#allocation6 + $0x8] sm:$0xff] %vm963, 0.0
          %970 = vst.msk [vmem:[#allocation6 + $0x10] sm:$0xff] %vm963, 0.0
          %971 = vst.msk [vmem:[#allocation6 + $0x18] sm:$0xff] %vm963, 0.0
          %972 = vst.msk [vmem:[#allocation7] sm:$0xff] %vm730, 0.0
          %973 = vst.msk [vmem:[#allocation7 + $0x8] sm:$0xff] %vm730, 0.0
          %974 = vst.msk [vmem:[#allocation7 + $0x10] sm:$0xff] %vm730, 0.0
          %975 = vst.msk [vmem:[#allocation7 + $0x18] sm:$0xff] %vm730, 0.0
        $region112: #{tpu_custom_call.1} parent=63 // pred_fallthru
          _
        %p976 = scmp.eq.s32.totalorder %s41, 0
        // Predicated region
        $region113: #{tpu_custom_call.1} parent=63 // pred_check
          %p977 = pneg %p976
        $region114: #{tpu_custom_call.1} parent=63 // pred_check_branch
          %979 = sbr.rel (%p977) target = $region116
        $region115: #{tpu_custom_call.1} parent=63 // pred_region
          %v980 = vld [vmem:[%s539] sm:$0x3f]
          %v981 = vld [vmem:[%s530] sm:$0xff]
          %vm982 = vcmask 261120
          %v983 = vsel %vm982, %v981, 0.0
          %984 = vadd.xlane.f32.xlu0 %v983
          %v985 = vpop.xlane.xlu0 %984
          %v986 = vrcp.pop 32.0
          %v987 = vmul.f32 %v985, %v986
          %v988 = vsub.f32 %v981, %v987
          %v989 = vmul.f32 %v988, %v988
          %v990 = vsel %vm982, %v989, 0.0
          %991 = vadd.xlane.f32.xlu0 %v990
          %v992 = vpop.xlane.xlu0 %991
          %v993 = vmul.f32 %v992, %v986
          %v994 = vadd.f32 %v993, 1e-05
          %v995 = vrsqrt.pop %v994
          %v996 = vmul.f32 %v988, %v995
          %v997 = vlaneseq
          %v998 = vshrl.u32 %v997, 7
          %v999 = vsub.s32 1, %v998
          %v1000 = vrot.slane %v980, %v999
          %v1001 = vmul.f32 %v996, %v1000
          %v1002 = vlaneseq
          %v1003 = vshrl.u32 %v1002, 7
          %v1004 = vsub.s32 0, %v1003
          %v1005 = vrot.slane %v980, %v1004
          %v1006 = vadd.f32 %v1001, %v1005
          %v1007 = vld [vmem:[#allocation16] sm:$0xff]
          %v1008 = vld [vmem:[#allocation16 + $0x8] sm:$0xff]
          %v1009 = vld [vmem:[#allocation16 + $0x10] sm:$0xff]
          %v1010 = vld [vmem:[#allocation16 + $0x18] sm:$0xff]
          %v1012 = vsel %vm982, %v1006, 0
          %1014 = vmatprep.subr.mxu0 0.0
          %1015 = vmatpush1.msra.mxu0 %v1007
          %1016 = vmatprep.subr.mxu0 0.0
          %1017 = vmatpush1.msra.mxu0 %v1008
          %1018 = vmatprep.subr.mxu0 0.0
          %1019 = vmatpush1.msra.mxu0 %v1009
          %1020 = vmatprep.subr.mxu0 0.0
          %1021 = vmatpush1.msra.mxu0 %v1010
          %1022 = vmatprep.subr.mxu0 0.0
          %1023 = vmatpush1.msra.mxu0 0.0
          %1024 = vmatprep.subr.mxu0 0.0
          %1025 = vmatpush1.msra.mxu0 0.0
          %1026 = vmatprep.subr.mxu0 0.0
          %1027 = vmatpush1.msra.mxu0 0.0
          %1028 = vmatprep.subr.mxu0 0.0
          %1029 = vmatpush1.msra.mxu0 0.0
          %1030 = vmatprep.subr.mxu0 0.0
          %1031 = vmatpush1.msra.mxu0 0.0
          %1032 = vmatprep.subr.mxu0 0.0
          %1033 = vmatpush1.msra.mxu0 0.0
          %1034 = vmatprep.subr.mxu0 0.0
          %1035 = vmatpush1.msra.mxu0 0.0
          %1036 = vmatprep.subr.mxu0 0.0
          %1037 = vmatpush1.msra.mxu0 0.0
          %1038 = vmatprep.subr.mxu0 0.0
          %1039 = vmatpush1.msra.mxu0 0.0
          %1040 = vmatprep.subr.mxu0 0.0
          %1041 = vmatpush1.msra.mxu0 0.0
          %1042 = vmatprep.subr.mxu0 0.0
          %1043 = vmatpush1.msra.mxu0 0.0
          %1044 = vmatprep.subr.mxu0 0.0
          %1045 = vmatpush1.msra.mxu0 0.0
          %1046 = vmatprep.subr.mxu0 0.0
          %1047 = vmatpush1.msra.mxu0 0.0
          %1048 = vmatprep.subr.mxu0 0.0
          %1049 = vmatpush1.msra.mxu0 0.0
          %1050 = vmatprep.subr.mxu0 0.0
          %1051 = vmatpush1.msra.mxu0 0.0
          %1052 = vmatprep.subr.mxu0 0.0
          %1053 = vmatpush1.msra.mxu0 0.0
          %1054 = vmatprep.subr.mxu0 0.0
          %1055 = vmatpush1.msra.mxu0 0.0
          %1056 = vmatprep.subr.mxu0 0.0
          %1057 = vmatpush1.msra.mxu0 0.0
          %1058 = vmatprep.subr.mxu0 0.0
          %1059 = vmatpush1.msra.mxu0 0.0
          %1060 = vmatprep.subr.mxu0 0.0
          %1061 = vmatpush1.msra.mxu0 0.0
          %1062 = vmatprep.subr.mxu0 0.0
          %1063 = vmatpush1.msra.mxu0 0.0
          %1064 = vmatprep.subr.mxu0 0.0
          %1065 = vmatpush1.msra.mxu0 0.0
          %1066 = vmatprep.subr.mxu0 0.0
          %1067 = vmatpush1.msra.mxu0 0.0
          %1068 = vmatprep.subr.mxu0 0.0
          %1069 = vmatpush1.msra.mxu0 0.0
          %1070 = vmatprep.subr.mxu0 0.0
          %1071 = vmatpush1.msra.mxu0 0.0
          %1072 = vmatprep.subr.mxu0 0.0
          %1073 = vmatpush1.msra.mxu0 0.0
          %1074 = vmatprep.subr.mxu0 0.0
          %1075 = vmatpush1.msra.mxu0 0.0
          %1076 = vmatprep.subr.mxu0 0.0
          %1077 = vmatpush1.msra.mxu0 0.0
          %1078 = vmatprep.mubr.f32.mxu0 0.0
          %1079 = vmatmul.mubr.f32.gmra.mrb[0].mxu0 %v1012
          %v1080 = vpop.f32.mrb[0].mxu0
          %v1081 = vadd.f32 0.0, %v1080
          %v1082 = vpop.f32.mrb[0].mxu0
          %1083 = vdwg.mxu0
          %s1084 = smul.u32 %s42, 32
          %s1085 = scalar_lea.vmem [#allocation3], %s1084
          %vm1086 = vcmask 64512
          %1087 = vst.msk [vmem:[%s1085] sm:$0xff] %vm1086, %v1081
          %v1088 = vld [vmem:[#allocation17] sm:$0xff]
          %v1089 = vld [vmem:[#allocation17 + $0x8] sm:$0xff]
          %v1090 = vld [vmem:[#allocation17 + $0x10] sm:$0xff]
          %v1091 = vld [vmem:[#allocation17 + $0x18] sm:$0xff]
          %1092 = vmatprep.subr.mxu0 0.0
          %1093 = vmatpush1.msra.mxu0 %v1088
          %1094 = vmatprep.subr.mxu0 0.0
          %1095 = vmatpush1.msra.mxu0 %v1089
          %1096 = vmatprep.subr.mxu0 0.0
          %1097 = vmatpush1.msra.mxu0 %v1090
          %1098 = vmatprep.subr.mxu0 0.0
          %1099 = vmatpush1.msra.mxu0 %v1091
          %1100 = vmatprep.subr.mxu0 0.0
          %1101 = vmatpush1.msra.mxu0 0.0
          %1102 = vmatprep.subr.mxu0 0.0
          %1103 = vmatpush1.msra.mxu0 0.0
          %1104 = vmatprep.subr.mxu0 0.0
          %1105 = vmatpush1.msra.mxu0 0.0
          %1106 = vmatprep.subr.mxu0 0.0
          %1107 = vmatpush1.msra.mxu0 0.0
          %1108 = vmatprep.subr.mxu0 0.0
          %1109 = vmatpush1.msra.mxu0 0.0
          %1110 = vmatprep.subr.mxu0 0.0
          %1111 = vmatpush1.msra.mxu0 0.0
          %1112 = vmatprep.subr.mxu0 0.0
          %1113 = vmatpush1.msra.mxu0 0.0
          %1114 = vmatprep.subr.mxu0 0.0
          %1115 = vmatpush1.msra.mxu0 0.0
          %1116 = vmatprep.subr.mxu0 0.0
          %1117 = vmatpush1.msra.mxu0 0.0
          %1118 = vmatprep.subr.mxu0 0.0
          %1119 = vmatpush1.msra.mxu0 0.0
          %1120 = vmatprep.subr.mxu0 0.0
          %1121 = vmatpush1.msra.mxu0 0.0
          %1122 = vmatprep.subr.mxu0 0.0
          %1123 = vmatpush1.msra.mxu0 0.0
          %1124 = vmatprep.subr.mxu0 0.0
          %1125 = vmatpush1.msra.mxu0 0.0
          %1126 = vmatprep.subr.mxu0 0.0
          %1127 = vmatpush1.msra.mxu0 0.0
          %1128 = vmatprep.subr.mxu0 0.0
          %1129 = vmatpush1.msra.mxu0 0.0
          %1130 = vmatprep.subr.mxu0 0.0
          %1131 = vmatpush1.msra.mxu0 0.0
          %1132 = vmatprep.subr.mxu0 0.0
          %1133 = vmatpush1.msra.mxu0 0.0
          %1134 = vmatprep.subr.mxu0 0.0
          %1135 = vmatpush1.msra.mxu0 0.0
          %1136 = vmatprep.subr.mxu0 0.0
          %1137 = vmatpush1.msra.mxu0 0.0
          %1138 = vmatprep.subr.mxu0 0.0
          %1139 = vmatpush1.msra.mxu0 0.0
          %1140 = vmatprep.subr.mxu0 0.0
          %1141 = vmatpush1.msra.mxu0 0.0
          %1142 = vmatprep.subr.mxu0 0.0
          %1143 = vmatpush1.msra.mxu0 0.0
          %1144 = vmatprep.subr.mxu0 0.0
          %1145 = vmatpush1.msra.mxu0 0.0
          %1146 = vmatprep.subr.mxu0 0.0
          %1147 = vmatpush1.msra.mxu0 0.0
          %1148 = vmatprep.subr.mxu0 0.0
          %1149 = vmatpush1.msra.mxu0 0.0
          %1150 = vmatprep.subr.mxu0 0.0
          %1151 = vmatpush1.msra.mxu0 0.0
          %1152 = vmatprep.subr.mxu0 0.0
          %1153 = vmatpush1.msra.mxu0 0.0
          %1154 = vmatprep.subr.mxu0 0.0
          %1155 = vmatpush1.msra.mxu0 0.0
          %1156 = vmatprep.mubr.f32.mxu0 0.0
          %1157 = vmatmul.mubr.f32.gmra.mrb[0].mxu0 %v1012
          %v1158 = vpop.f32.mrb[0].mxu0
          %v1159 = vadd.f32 0.0, %v1158
          %v1160 = vpop.f32.mrb[0].mxu0
          %1161 = vdwg.mxu0
          %s1162 = scalar_lea.vmem [#allocation4], %s1084
          %1163 = vst.msk [vmem:[%s1162] sm:$0xff] %vm1086, %v1159
          %s1164 = scalar_lea.vmem [#allocation16], 32
          %v1165 = vld [vmem:[%s1164] sm:$0xff]
          %v1166 = vld [vmem:[%s1164 + $0x8] sm:$0xff]
          %v1167 = vld [vmem:[%s1164 + $0x10] sm:$0xff]
          %v1168 = vld [vmem:[%s1164 + $0x18] sm:$0xff]
          %1169 = vmatprep.subr.mxu0 0.0
          %1170 = vmatpush1.msra.mxu0 %v1165
          %1171 = vmatprep.subr.mxu0 0.0
          %1172 = vmatpush1.msra.mxu0 %v1166
          %1173 = vmatprep.subr.mxu0 0.0
          %1174 = vmatpush1.msra.mxu0 %v1167
          %1175 = vmatprep.subr.mxu0 0.0
          %1176 = vmatpush1.msra.mxu0 %v1168
          %1177 = vmatprep.subr.mxu0 0.0
          %1178 = vmatpush1.msra.mxu0 0.0
          %1179 = vmatprep.subr.mxu0 0.0
          %1180 = vmatpush1.msra.mxu0 0.0
          %1181 = vmatprep.subr.mxu0 0.0
          %1182 = vmatpush1.msra.mxu0 0.0
          %1183 = vmatprep.subr.mxu0 0.0
          %1184 = vmatpush1.msra.mxu0 0.0
          %1185 = vmatprep.subr.mxu0 0.0
          %1186 = vmatpush1.msra.mxu0 0.0
          %1187 = vmatprep.subr.mxu0 0.0
          %1188 = vmatpush1.msra.mxu0 0.0
          %1189 = vmatprep.subr.mxu0 0.0
          %1190 = vmatpush1.msra.mxu0 0.0
          %1191 = vmatprep.subr.mxu0 0.0
          %1192 = vmatpush1.msra.mxu0 0.0
          %1193 = vmatprep.subr.mxu0 0.0
          %1194 = vmatpush1.msra.mxu0 0.0
          %1195 = vmatprep.subr.mxu0 0.0
          %1196 = vmatpush1.msra.mxu0 0.0
          %1197 = vmatprep.subr.mxu0 0.0
          %1198 = vmatpush1.msra.mxu0 0.0
          %1199 = vmatprep.subr.mxu0 0.0
          %1200 = vmatpush1.msra.mxu0 0.0
          %1201 = vmatprep.subr.mxu0 0.0
          %1202 = vmatpush1.msra.mxu0 0.0
          %1203 = vmatprep.subr.mxu0 0.0
          %1204 = vmatpush1.msra.mxu0 0.0
          %1205 = vmatprep.subr.mxu0 0.0
          %1206 = vmatpush1.msra.mxu0 0.0
          %1207 = vmatprep.subr.mxu0 0.0
          %1208 = vmatpush1.msra.mxu0 0.0
          %1209 = vmatprep.subr.mxu0 0.0
          %1210 = vmatpush1.msra.mxu0 0.0
          %1211 = vmatprep.subr.mxu0 0.0
          %1212 = vmatpush1.msra.mxu0 0.0
          %1213 = vmatprep.subr.mxu0 0.0
          %1214 = vmatpush1.msra.mxu0 0.0
          %1215 = vmatprep.subr.mxu0 0.0
          %1216 = vmatpush1.msra.mxu0 0.0
          %1217 = vmatprep.subr.mxu0 0.0
          %1218 = vmatpush1.msra.mxu0 0.0
          %1219 = vmatprep.subr.mxu0 0.0
          %1220 = vmatpush1.msra.mxu0 0.0
          %1221 = vmatprep.subr.mxu0 0.0
          %1222 = vmatpush1.msra.mxu0 0.0
          %1223 = vmatprep.subr.mxu0 0.0
          %1224 = vmatpush1.msra.mxu0 0.0
          %1225 = vmatprep.subr.mxu0 0.0
          %1226 = vmatpush1.msra.mxu0 0.0
          %1227 = vmatprep.subr.mxu0 0.0
          %1228 = vmatpush1.msra.mxu0 0.0
          %1229 = vmatprep.subr.mxu0 0.0
          %1230 = vmatpush1.msra.mxu0 0.0
          %1231 = vmatprep.subr.mxu0 0.0
          %1232 = vmatpush1.msra.mxu0 0.0
          %1233 = vmatprep.mubr.f32.mxu0 0.0
          %1234 = vmatmul.mubr.f32.gmra.mrb[0].mxu0 %v1012
          %v1235 = vpop.f32.mrb[0].mxu0
          %v1236 = vadd.f32 0.0, %v1235
          %v1237 = vpop.f32.mrb[0].mxu0
          %1238 = vdwg.mxu0
          %s1239 = sadd.s32 8, %s1084
          %s1240 = scalar_lea.vmem [#allocation3], %s1239
          %1241 = vst.msk [vmem:[%s1240] sm:$0xff] %vm1086, %v1236
          %s1242 = scalar_lea.vmem [#allocation17], 32
          %v1243 = vld [vmem:[%s1242] sm:$0xff]
          %v1244 = vld [vmem:[%s1242 + $0x8] sm:$0xff]
          %v1245 = vld [vmem:[%s1242 + $0x10] sm:$0xff]
          %v1246 = vld [vmem:[%s1242 + $0x18] sm:$0xff]
          %1247 = vmatprep.subr.mxu0 0.0
          %1248 = vmatpush1.msra.mxu0 %v1243
          %1249 = vmatprep.subr.mxu0 0.0
          %1250 = vmatpush1.msra.mxu0 %v1244
          %1251 = vmatprep.subr.mxu0 0.0
          %1252 = vmatpush1.msra.mxu0 %v1245
          %1253 = vmatprep.subr.mxu0 0.0
          %1254 = vmatpush1.msra.mxu0 %v1246
          %1255 = vmatprep.subr.mxu0 0.0
          %1256 = vmatpush1.msra.mxu0 0.0
          %1257 = vmatprep.subr.mxu0 0.0
          %1258 = vmatpush1.msra.mxu0 0.0
          %1259 = vmatprep.subr.mxu0 0.0
          %1260 = vmatpush1.msra.mxu0 0.0
          %1261 = vmatprep.subr.mxu0 0.0
          %1262 = vmatpush1.msra.mxu0 0.0
          %1263 = vmatprep.subr.mxu0 0.0
          %1264 = vmatpush1.msra.mxu0 0.0
          %1265 = vmatprep.subr.mxu0 0.0
          %1266 = vmatpush1.msra.mxu0 0.0
          %1267 = vmatprep.subr.mxu0 0.0
          %1268 = vmatpush1.msra.mxu0 0.0
          %1269 = vmatprep.subr.mxu0 0.0
          %1270 = vmatpush1.msra.mxu0 0.0
          %1271 = vmatprep.subr.mxu0 0.0
          %1272 = vmatpush1.msra.mxu0 0.0
          %1273 = vmatprep.subr.mxu0 0.0
          %1274 = vmatpush1.msra.mxu0 0.0
          %1275 = vmatprep.subr.mxu0 0.0
          %1276 = vmatpush1.msra.mxu0 0.0
          %1277 = vmatprep.subr.mxu0 0.0
          %1278 = vmatpush1.msra.mxu0 0.0
          %1279 = vmatprep.subr.mxu0 0.0
          %1280 = vmatpush1.msra.mxu0 0.0
          %1281 = vmatprep.subr.mxu0 0.0
          %1282 = vmatpush1.msra.mxu0 0.0
          %1283 = vmatprep.subr.mxu0 0.0
          %1284 = vmatpush1.msra.mxu0 0.0
          %1285 = vmatprep.subr.mxu0 0.0
          %1286 = vmatpush1.msra.mxu0 0.0
          %1287 = vmatprep.subr.mxu0 0.0
          %1288 = vmatpush1.msra.mxu0 0.0
          %1289 = vmatprep.subr.mxu0 0.0
          %1290 = vmatpush1.msra.mxu0 0.0
          %1291 = vmatprep.subr.mxu0 0.0
          %1292 = vmatpush1.msra.mxu0 0.0
          %1293 = vmatprep.subr.mxu0 0.0
          %1294 = vmatpush1.msra.mxu0 0.0
          %1295 = vmatprep.subr.mxu0 0.0
          %1296 = vmatpush1.msra.mxu0 0.0
          %1297 = vmatprep.subr.mxu0 0.0
          %1298 = vmatpush1.msra.mxu0 0.0
          %1299 = vmatprep.subr.mxu0 0.0
          %1300 = vmatpush1.msra.mxu0 0.0
          %1301 = vmatprep.subr.mxu0 0.0
          %1302 = vmatpush1.msra.mxu0 0.0
          %1303 = vmatprep.subr.mxu0 0.0
          %1304 = vmatpush1.msra.mxu0 0.0
          %1305 = vmatprep.subr.mxu0 0.0
          %1306 = vmatpush1.msra.mxu0 0.0
          %1307 = vmatprep.subr.mxu0 0.0
          %1308 = vmatpush1.msra.mxu0 0.0
          %1309 = vmatprep.subr.mxu0 0.0
          %1310 = vmatpush1.msra.mxu0 0.0
          %1311 = vmatprep.mubr.f32.mxu0 0.0
          %1312 = vmatmul.mubr.f32.gmra.mrb[0].mxu0 %v1012
          %v1313 = vpop.f32.mrb[0].mxu0
          %v1314 = vadd.f32 0.0, %v1313
          %v1315 = vpop.f32.mrb[0].mxu0
          %1316 = vdwg.mxu0
          %s1317 = scalar_lea.vmem [#allocation4], %s1239
          %1318 = vst.msk [vmem:[%s1317] sm:$0xff] %vm1086, %v1314
          %s1319 = scalar_lea.vmem [#allocation16], 64
          %v1320 = vld [vmem:[%s1319] sm:$0xff]
          %v1321 = vld [vmem:[%s1319 + $0x8] sm:$0xff]
          %v1322 = vld [vmem:[%s1319 + $0x10] sm:$0xff]
          %v1323 = vld [vmem:[%s1319 + $0x18] sm:$0xff]
          %1324 = vmatprep.subr.mxu0 0.0
          %1325 = vmatpush1.msra.mxu0 %v1320
          %1326 = vmatprep.subr.mxu0 0.0
          %1327 = vmatpush1.msra.mxu0 %v1321
          %1328 = vmatprep.subr.mxu0 0.0
          %1329 = vmatpush1.msra.mxu0 %v1322
          %1330 = vmatprep.subr.mxu0 0.0
          %1331 = vmatpush1.msra.mxu0 %v1323
          %1332 = vmatprep.subr.mxu0 0.0
          %1333 = vmatpush1.msra.mxu0 0.0
          %1334 = vmatprep.subr.mxu0 0.0
          %1335 = vmatpush1.msra.mxu0 0.0
          %1336 = vmatprep.subr.mxu0 0.0
          %1337 = vmatpush1.msra.mxu0 0.0
          %1338 = vmatprep.subr.mxu0 0.0
          %1339 = vmatpush1.msra.mxu0 0.0
          %1340 = vmatprep.subr.mxu0 0.0
          %1341 = vmatpush1.msra.mxu0 0.0
          %1342 = vmatprep.subr.mxu0 0.0
          %1343 = vmatpush1.msra.mxu0 0.0
          %1344 = vmatprep.subr.mxu0 0.0
          %1345 = vmatpush1.msra.mxu0 0.0
          %1346 = vmatprep.subr.mxu0 0.0
          %1347 = vmatpush1.msra.mxu0 0.0
          %1348 = vmatprep.subr.mxu0 0.0
          %1349 = vmatpush1.msra.mxu0 0.0
          %1350 = vmatprep.subr.mxu0 0.0
          %1351 = vmatpush1.msra.mxu0 0.0
          %1352 = vmatprep.subr.mxu0 0.0
          %1353 = vmatpush1.msra.mxu0 0.0
          %1354 = vmatprep.subr.mxu0 0.0
          %1355 = vmatpush1.msra.mxu0 0.0
          %1356 = vmatprep.subr.mxu0 0.0
          %1357 = vmatpush1.msra.mxu0 0.0
          %1358 = vmatprep.subr.mxu0 0.0
          %1359 = vmatpush1.msra.mxu0 0.0
          %1360 = vmatprep.subr.mxu0 0.0
          %1361 = vmatpush1.msra.mxu0 0.0
          %1362 = vmatprep.subr.mxu0 0.0
          %1363 = vmatpush1.msra.mxu0 0.0
          %1364 = vmatprep.subr.mxu0 0.0
          %1365 = vmatpush1.msra.mxu0 0.0
          %1366 = vmatprep.subr.mxu0 0.0
          %1367 = vmatpush1.msra.mxu0 0.0
          %1368 = vmatprep.subr.mxu0 0.0
          %1369 = vmatpush1.msra.mxu0 0.0
          %1370 = vmatprep.subr.mxu0 0.0
          %1371 = vmatpush1.msra.mxu0 0.0
          %1372 = vmatprep.subr.mxu0 0.0
          %1373 = vmatpush1.msra.mxu0 0.0
          %1374 = vmatprep.subr.mxu0 0.0
          %1375 = vmatpush1.msra.mxu0 0.0
          %1376 = vmatprep.subr.mxu0 0.0
          %1377 = vmatpush1.msra.mxu0 0.0
          %1378 = vmatprep.subr.mxu0 0.0
          %1379 = vmatpush1.msra.mxu0 0.0
          %1380 = vmatprep.subr.mxu0 0.0
          %1381 = vmatpush1.msra.mxu0 0.0
          %1382 = vmatprep.subr.mxu0 0.0
          %1383 = vmatpush1.msra.mxu0 0.0
          %1384 = vmatprep.subr.mxu0 0.0
          %1385 = vmatpush1.msra.mxu0 0.0
          %1386 = vmatprep.subr.mxu0 0.0
          %1387 = vmatpush1.msra.mxu0 0.0
          %1388 = vmatprep.mubr.f32.mxu0 0.0
          %1389 = vmatmul.mubr.f32.gmra.mrb[0].mxu0 %v1012
          %v1390 = vpop.f32.mrb[0].mxu0
          %v1391 = vadd.f32 0.0, %v1390
          %v1392 = vpop.f32.mrb[0].mxu0
          %1393 = vdwg.mxu0
          %s1394 = sadd.s32 16, %s1084
          %s1395 = scalar_lea.vmem [#allocation3], %s1394
          %1396 = vst.msk [vmem:[%s1395] sm:$0xff] %vm1086, %v1391
          %s1397 = scalar_lea.vmem [#allocation17], 64
          %v1398 = vld [vmem:[%s1397] sm:$0xff]
          %v1399 = vld [vmem:[%s1397 + $0x8] sm:$0xff]
          %v1400 = vld [vmem:[%s1397 + $0x10] sm:$0xff]
          %v1401 = vld [vmem:[%s1397 + $0x18] sm:$0xff]
          %1402 = vmatprep.subr.mxu0 0.0
          %1403 = vmatpush1.msra.mxu0 %v1398
          %1404 = vmatprep.subr.mxu0 0.0
          %1405 = vmatpush1.msra.mxu0 %v1399
          %1406 = vmatprep.subr.mxu0 0.0
          %1407 = vmatpush1.msra.mxu0 %v1400
          %1408 = vmatprep.subr.mxu0 0.0
          %1409 = vmatpush1.msra.mxu0 %v1401
          %1410 = vmatprep.subr.mxu0 0.0
          %1411 = vmatpush1.msra.mxu0 0.0
          %1412 = vmatprep.subr.mxu0 0.0
          %1413 = vmatpush1.msra.mxu0 0.0
          %1414 = vmatprep.subr.mxu0 0.0
          %1415 = vmatpush1.msra.mxu0 0.0
          %1416 = vmatprep.subr.mxu0 0.0
          %1417 = vmatpush1.msra.mxu0 0.0
          %1418 = vmatprep.subr.mxu0 0.0
          %1419 = vmatpush1.msra.mxu0 0.0
          %1420 = vmatprep.subr.mxu0 0.0
          %1421 = vmatpush1.msra.mxu0 0.0
          %1422 = vmatprep.subr.mxu0 0.0
          %1423 = vmatpush1.msra.mxu0 0.0
          %1424 = vmatprep.subr.mxu0 0.0
          %1425 = vmatpush1.msra.mxu0 0.0
          %1426 = vmatprep.subr.mxu0 0.0
          %1427 = vmatpush1.msra.mxu0 0.0
          %1428 = vmatprep.subr.mxu0 0.0
          %1429 = vmatpush1.msra.mxu0 0.0
          %1430 = vmatprep.subr.mxu0 0.0
          %1431 = vmatpush1.msra.mxu0 0.0
          %1432 = vmatprep.subr.mxu0 0.0
          %1433 = vmatpush1.msra.mxu0 0.0
          %1434 = vmatprep.subr.mxu0 0.0
          %1435 = vmatpush1.msra.mxu0 0.0
          %1436 = vmatprep.subr.mxu0 0.0
          %1437 = vmatpush1.msra.mxu0 0.0
          %1438 = vmatprep.subr.mxu0 0.0
          %1439 = vmatpush1.msra.mxu0 0.0
          %1440 = vmatprep.subr.mxu0 0.0
          %1441 = vmatpush1.msra.mxu0 0.0
          %1442 = vmatprep.subr.mxu0 0.0
          %1443 = vmatpush1.msra.mxu0 0.0
          %1444 = vmatprep.subr.mxu0 0.0
          %1445 = vmatpush1.msra.mxu0 0.0
          %1446 = vmatprep.subr.mxu0 0.0
          %1447 = vmatpush1.msra.mxu0 0.0
          %1448 = vmatprep.subr.mxu0 0.0
          %1449 = vmatpush1.msra.mxu0 0.0
          %1450 = vmatprep.subr.mxu0 0.0
          %1451 = vmatpush1.msra.mxu0 0.0
          %1452 = vmatprep.subr.mxu0 0.0
          %1453 = vmatpush1.msra.mxu0 0.0
          %1454 = vmatprep.subr.mxu0 0.0
          %1455 = vmatpush1.msra.mxu0 0.0
          %1456 = vmatprep.subr.mxu0 0.0
          %1457 = vmatpush1.msra.mxu0 0.0
          %1458 = vmatprep.subr.mxu0 0.0
          %1459 = vmatpush1.msra.mxu0 0.0
          %1460 = vmatprep.subr.mxu0 0.0
          %1461 = vmatpush1.msra.mxu0 0.0
          %1462 = vmatprep.subr.mxu0 0.0
          %1463 = vmatpush1.msra.mxu0 0.0
          %1464 = vmatprep.subr.mxu0 0.0
          %1465 = vmatpush1.msra.mxu0 0.0
          %1466 = vmatprep.mubr.f32.mxu0 0.0
          %1467 = vmatmul.mubr.f32.gmra.mrb[0].mxu0 %v1012
          %v1468 = vpop.f32.mrb[0].mxu0
          %v1469 = vadd.f32 0.0, %v1468
          %v1470 = vpop.f32.mrb[0].mxu0
          %1471 = vdwg.mxu0
          %s1472 = scalar_lea.vmem [#allocation4], %s1394
          %1473 = vst.msk [vmem:[%s1472] sm:$0xff] %vm1086, %v1469
          %s1474 = scalar_lea.vmem [#allocation16], 96
          %v1475 = vld [vmem:[%s1474] sm:$0xff]
          %v1476 = vld [vmem:[%s1474 + $0x8] sm:$0xff]
          %v1477 = vld [vmem:[%s1474 + $0x10] sm:$0xff]
          %v1478 = vld [vmem:[%s1474 + $0x18] sm:$0xff]
          %1479 = vmatprep.subr.mxu0 0.0
          %1480 = vmatpush1.msra.mxu0 %v1475
          %1481 = vmatprep.subr.mxu0 0.0
          %1482 = vmatpush1.msra.mxu0 %v1476
          %1483 = vmatprep.subr.mxu0 0.0
          %1484 = vmatpush1.msra.mxu0 %v1477
          %1485 = vmatprep.subr.mxu0 0.0
          %1486 = vmatpush1.msra.mxu0 %v1478
          %1487 = vmatprep.subr.mxu0 0.0
          %1488 = vmatpush1.msra.mxu0 0.0
          %1489 = vmatprep.subr.mxu0 0.0
          %1490 = vmatpush1.msra.mxu0 0.0
          %1491 = vmatprep.subr.mxu0 0.0
          %1492 = vmatpush1.msra.mxu0 0.0
          %1493 = vmatprep.subr.mxu0 0.0
          %1494 = vmatpush1.msra.mxu0 0.0
          %1495 = vmatprep.subr.mxu0 0.0
          %1496 = vmatpush1.msra.mxu0 0.0
          %1497 = vmatprep.subr.mxu0 0.0
          %1498 = vmatpush1.msra.mxu0 0.0
          %1499 = vmatprep.subr.mxu0 0.0
          %1500 = vmatpush1.msra.mxu0 0.0
          %1501 = vmatprep.subr.mxu0 0.0
          %1502 = vmatpush1.msra.mxu0 0.0
          %1503 = vmatprep.subr.mxu0 0.0
          %1504 = vmatpush1.msra.mxu0 0.0
          %1505 = vmatprep.subr.mxu0 0.0
          %1506 = vmatpush1.msra.mxu0 0.0
          %1507 = vmatprep.subr.mxu0 0.0
          %1508 = vmatpush1.msra.mxu0 0.0
          %1509 = vmatprep.subr.mxu0 0.0
          %1510 = vmatpush1.msra.mxu0 0.0
          %1511 = vmatprep.subr.mxu0 0.0
          %1512 = vmatpush1.msra.mxu0 0.0
          %1513 = vmatprep.subr.mxu0 0.0
          %1514 = vmatpush1.msra.mxu0 0.0
          %1515 = vmatprep.subr.mxu0 0.0
          %1516 = vmatpush1.msra.mxu0 0.0
          %1517 = vmatprep.subr.mxu0 0.0
          %1518 = vmatpush1.msra.mxu0 0.0
          %1519 = vmatprep.subr.mxu0 0.0
          %1520 = vmatpush1.msra.mxu0 0.0
          %1521 = vmatprep.subr.mxu0 0.0
          %1522 = vmatpush1.msra.mxu0 0.0
          %1523 = vmatprep.subr.mxu0 0.0
          %1524 = vmatpush1.msra.mxu0 0.0
          %1525 = vmatprep.subr.mxu0 0.0
          %1526 = vmatpush1.msra.mxu0 0.0
          %1527 = vmatprep.subr.mxu0 0.0
          %1528 = vmatpush1.msra.mxu0 0.0
          %1529 = vmatprep.subr.mxu0 0.0
          %1530 = vmatpush1.msra.mxu0 0.0
          %1531 = vmatprep.subr.mxu0 0.0
          %1532 = vmatpush1.msra.mxu0 0.0
          %1533 = vmatprep.subr.mxu0 0.0
          %1534 = vmatpush1.msra.mxu0 0.0
          %1535 = vmatprep.subr.mxu0 0.0
          %1536 = vmatpush1.msra.mxu0 0.0
          %1537 = vmatprep.subr.mxu0 0.0
          %1538 = vmatpush1.msra.mxu0 0.0
          %1539 = vmatprep.subr.mxu0 0.0
          %1540 = vmatpush1.msra.mxu0 0.0
          %1541 = vmatprep.subr.mxu0 0.0
          %1542 = vmatpush1.msra.mxu0 0.0
          %1543 = vmatprep.mubr.f32.mxu0 0.0
          %1544 = vmatmul.mubr.f32.gmra.mrb[0].mxu0 %v1012
          %v1545 = vpop.f32.mrb[0].mxu0
          %v1546 = vadd.f32 0.0, %v1545
          %v1547 = vpop.f32.mrb[0].mxu0
          %1548 = vdwg.mxu0
          %s1549 = sadd.s32 24, %s1084
          %s1550 = scalar_lea.vmem [#allocation3], %s1549
          %1551 = vst.msk [vmem:[%s1550] sm:$0xff] %vm1086, %v1546
          %s1552 = scalar_lea.vmem [#allocation17], 96
          %v1553 = vld [vmem:[%s1552] sm:$0xff]
          %v1554 = vld [vmem:[%s1552 + $0x8] sm:$0xff]
          %v1555 = vld [vmem:[%s1552 + $0x10] sm:$0xff]
          %v1556 = vld [vmem:[%s1552 + $0x18] sm:$0xff]
          %1557 = vmatprep.subr.mxu0 0.0
          %1558 = vmatpush1.msra.mxu0 %v1553
          %1559 = vmatprep.subr.mxu0 0.0
          %1560 = vmatpush1.msra.mxu0 %v1554
          %1561 = vmatprep.subr.mxu0 0.0
          %1562 = vmatpush1.msra.mxu0 %v1555
          %1563 = vmatprep.subr.mxu0 0.0
          %1564 = vmatpush1.msra.mxu0 %v1556
          %1565 = vmatprep.subr.mxu0 0.0
          %1566 = vmatpush1.msra.mxu0 0.0
          %1567 = vmatprep.subr.mxu0 0.0
          %1568 = vmatpush1.msra.mxu0 0.0
          %1569 = vmatprep.subr.mxu0 0.0
          %1570 = vmatpush1.msra.mxu0 0.0
          %1571 = vmatprep.subr.mxu0 0.0
          %1572 = vmatpush1.msra.mxu0 0.0
          %1573 = vmatprep.subr.mxu0 0.0
          %1574 = vmatpush1.msra.mxu0 0.0
          %1575 = vmatprep.subr.mxu0 0.0
          %1576 = vmatpush1.msra.mxu0 0.0
          %1577 = vmatprep.subr.mxu0 0.0
          %1578 = vmatpush1.msra.mxu0 0.0
          %1579 = vmatprep.subr.mxu0 0.0
          %1580 = vmatpush1.msra.mxu0 0.0
          %1581 = vmatprep.subr.mxu0 0.0
          %1582 = vmatpush1.msra.mxu0 0.0
          %1583 = vmatprep.subr.mxu0 0.0
          %1584 = vmatpush1.msra.mxu0 0.0
          %1585 = vmatprep.subr.mxu0 0.0
          %1586 = vmatpush1.msra.mxu0 0.0
          %1587 = vmatprep.subr.mxu0 0.0
          %1588 = vmatpush1.msra.mxu0 0.0
          %1589 = vmatprep.subr.mxu0 0.0
          %1590 = vmatpush1.msra.mxu0 0.0
          %1591 = vmatprep.subr.mxu0 0.0
          %1592 = vmatpush1.msra.mxu0 0.0
          %1593 = vmatprep.subr.mxu0 0.0
          %1594 = vmatpush1.msra.mxu0 0.0
          %1595 = vmatprep.subr.mxu0 0.0
          %1596 = vmatpush1.msra.mxu0 0.0
          %1597 = vmatprep.subr.mxu0 0.0
          %1598 = vmatpush1.msra.mxu0 0.0
          %1599 = vmatprep.subr.mxu0 0.0
          %1600 = vmatpush1.msra.mxu0 0.0
          %1601 = vmatprep.subr.mxu0 0.0
          %1602 = vmatpush1.msra.mxu0 0.0
          %1603 = vmatprep.subr.mxu0 0.0
          %1604 = vmatpush1.msra.mxu0 0.0
          %1605 = vmatprep.subr.mxu0 0.0
          %1606 = vmatpush1.msra.mxu0 0.0
          %1607 = vmatprep.subr.mxu0 0.0
          %1608 = vmatpush1.msra.mxu0 0.0
          %1609 = vmatprep.subr.mxu0 0.0
          %1610 = vmatpush1.msra.mxu0 0.0
          %1611 = vmatprep.subr.mxu0 0.0
          %1612 = vmatpush1.msra.mxu0 0.0
          %1613 = vmatprep.subr.mxu0 0.0
          %1614 = vmatpush1.msra.mxu0 0.0
          %1615 = vmatprep.subr.mxu0 0.0
          %1616 = vmatpush1.msra.mxu0 0.0
          %1617 = vmatprep.subr.mxu0 0.0
          %1618 = vmatpush1.msra.mxu0 0.0
          %1619 = vmatprep.subr.mxu0 0.0
          %1620 = vmatpush1.msra.mxu0 0.0
          %1621 = vmatprep.mubr.f32.mxu0 0.0
          %1622 = vmatmul.mubr.f32.gmra.mrb[0].mxu0 %v1012
          %v1623 = vpop.f32.mrb[0].mxu0
          %v1624 = vadd.f32 0.0, %v1623
          %v1625 = vpop.f32.mrb[0].mxu0
          %1626 = vdwg.mxu0
          %s1627 = scalar_lea.vmem [#allocation4], %s1549
          %1628 = vst.msk [vmem:[%s1627] sm:$0xff] %vm1086, %v1624
        $region116: #{tpu_custom_call.1} parent=63 // pred_fallthru
          _
        %s1629 = sadd.s32 %s41, 1
        %s1630 = smul.u32 %s1629, 8
        %s1631 = ssub.s32 %s1630, 1
        %s1632 = smul.u32 %s42, 8
        %p1633 = scmp.le.s32.totalorder %s1632, %s1631
        // Predicated region
        $region117: #{tpu_custom_call.1} parent=63 // pred_check
          %p1634 = pneg %p1633
        $region118: #{tpu_custom_call.1} parent=63 // pred_check_branch
          %1636 = sbr.rel (%p1634) target = $region120
        $region119: #{tpu_custom_call.1} parent=63 // pred_region
          %s1637 = smul.u32 %s42, 32
          %s1638 = scalar_lea.vmem [#allocation3], %s1637
          %v1639 = vld [vmem:[%s1638] sm:$0xff]
          %v1640 = vld [vmem:[%s1638 + $0x8] sm:$0xff]
          %v1641 = vld [vmem:[%s1638 + $0x10] sm:$0xff]
          %v1642 = vld [vmem:[%s1638 + $0x18] sm:$0xff]
          %s1643 = scalar_lea.vmem [#allocation4], %s1637
          %v1644 = vld [vmem:[%s1643] sm:$0xff]
          %v1645 = vld [vmem:[%s1643 + $0x8] sm:$0xff]
          %v1646 = vld [vmem:[%s1643 + $0x10] sm:$0xff]
          %v1647 = vld [vmem:[%s1643 + $0x18] sm:$0xff]
          %v1648 = vld [vmem:[#allocation2] sm:$0xff]
          %v1649 = vld [vmem:[#allocation2 + $0x8] sm:$0xff]
          %v1650 = vld [vmem:[#allocation2 + $0x10] sm:$0xff]
          %v1651 = vld [vmem:[#allocation2 + $0x18] sm:$0xff]
          %vm1652 = vcmask 64512
          %v1654 = vsel %vm1652, %v1648, 0
          %v1657 = vsel %vm1652, %v1639, 0
          %1659 = vmatprep.subr.mxu0 0.0
          %1660 = vmatpush1.xpose.msra.mxu0 %v1657
          %1661 = vmatprep.subr.mxu0 0.0
          %1662 = vmatpush1.xpose.msra.mxu0 0.0
          %1663 = vmatprep.subr.mxu0 0.0
          %1664 = vmatpush1.xpose.msra.mxu0 0.0
          %1665 = vmatprep.subr.mxu0 0.0
          %1666 = vmatpush1.xpose.msra.mxu0 0.0
          %1667 = vmatprep.subr.mxu0 0.0
          %1668 = vmatpush1.xpose.msra.mxu0 0.0
          %1669 = vmatprep.subr.mxu0 0.0
          %1670 = vmatpush1.xpose.msra.mxu0 0.0
          %1671 = vmatprep.subr.mxu0 0.0
          %1672 = vmatpush1.xpose.msra.mxu0 0.0
          %1673 = vmatprep.subr.mxu0 0.0
          %1674 = vmatpush1.xpose.msra.mxu0 0.0
          %1675 = vmatprep.subr.mxu0 0.0
          %1676 = vmatpush1.xpose.msra.mxu0 0.0
          %1677 = vmatprep.subr.mxu0 0.0
          %1678 = vmatpush1.xpose.msra.mxu0 0.0
          %1679 = vmatprep.subr.mxu0 0.0
          %1680 = vmatpush1.xpose.msra.mxu0 0.0
          %1681 = vmatprep.subr.mxu0 0.0
          %1682 = vmatpush1.xpose.msra.mxu0 0.0
          %1683 = vmatprep.subr.mxu0 0.0
          %1684 = vmatpush1.xpose.msra.mxu0 0.0
          %1685 = vmatprep.subr.mxu0 0.0
          %1686 = vmatpush1.xpose.msra.mxu0 0.0
          %1687 = vmatprep.subr.mxu0 0.0
          %1688 = vmatpush1.xpose.msra.mxu0 0.0
          %1689 = vmatprep.subr.mxu0 0.0
          %1690 = vmatpush1.xpose.msra.mxu0 0.0
          %1691 = vmatprep.subr.mxu0 0.0
          %1692 = vmatpush1.xpose.msra.mxu0 0.0
          %1693 = vmatprep.subr.mxu0 0.0
          %1694 = vmatpush1.xpose.msra.mxu0 0.0
          %1695 = vmatprep.subr.mxu0 0.0
          %1696 = vmatpush1.xpose.msra.mxu0 0.0
          %1697 = vmatprep.subr.mxu0 0.0
          %1698 = vmatpush1.xpose.msra.mxu0 0.0
          %1699 = vmatprep.subr.mxu0 0.0
          %1700 = vmatpush1.xpose.msra.mxu0 0.0
          %1701 = vmatprep.subr.mxu0 0.0
          %1702 = vmatpush1.xpose.msra.mxu0 0.0
          %1703 = vmatprep.subr.mxu0 0.0
          %1704 = vmatpush1.xpose.msra.mxu0 0.0
          %1705 = vmatprep.subr.mxu0 0.0
          %1706 = vmatpush1.xpose.msra.mxu0 0.0
          %1707 = vmatprep.subr.mxu0 0.0
          %1708 = vmatpush1.xpose.msra.mxu0 0.0
          %1709 = vmatprep.subr.mxu0 0.0
          %1710 = vmatpush1.xpose.msra.mxu0 0.0
          %1711 = vmatprep.subr.mxu0 0.0
          %1712 = vmatpush1.xpose.msra.mxu0 0.0
          %1713 = vmatprep.subr.mxu0 0.0
          %1714 = vmatpush1.xpose.msra.mxu0 0.0
          %1715 = vmatprep.subr.mxu0 0.0
          %1716 = vmatpush1.xpose.msra.mxu0 0.0
          %1717 = vmatprep.subr.mxu0 0.0
          %1718 = vmatpush1.xpose.msra.mxu0 0.0
          %1719 = vmatprep.subr.mxu0 0.0
          %1720 = vmatpush1.xpose.msra.mxu0 0.0
          %1721 = vmatprep.subr.mxu0 0.0
          %1722 = vmatpush1.xpose.msra.mxu0 0.0
          %1723 = vmatprep.mubr.f32.mxu0 0.0
          %1724 = vmatmul.mubr.f32.gmra.mrb[0].mxu0 %v1654
          %v1725 = vpop.f32.mrb[0].mxu0
          %v1726 = vadd.f32 0.0, %v1725
          %v1727 = vpop.f32.mrb[0].mxu0
          %1728 = vdwg.mxu0
          %v1730 = vsel %vm1652, %v1649, 0
          %v1733 = vsel %vm1652, %v1640, 0
          %1735 = vmatprep.subr.mxu0 0.0
          %1736 = vmatpush1.xpose.msra.mxu0 %v1733
          %1737 = vmatprep.subr.mxu0 0.0
          %1738 = vmatpush1.xpose.msra.mxu0 0.0
          %1739 = vmatprep.subr.mxu0 0.0
          %1740 = vmatpush1.xpose.msra.mxu0 0.0
          %1741 = vmatprep.subr.mxu0 0.0
          %1742 = vmatpush1.xpose.msra.mxu0 0.0
          %1743 = vmatprep.subr.mxu0 0.0
          %1744 = vmatpush1.xpose.msra.mxu0 0.0
          %1745 = vmatprep.subr.mxu0 0.0
          %1746 = vmatpush1.xpose.msra.mxu0 0.0
          %1747 = vmatprep.subr.mxu0 0.0
          %1748 = vmatpush1.xpose.msra.mxu0 0.0
          %1749 = vmatprep.subr.mxu0 0.0
          %1750 = vmatpush1.xpose.msra.mxu0 0.0
          %1751 = vmatprep.subr.mxu0 0.0
          %1752 = vmatpush1.xpose.msra.mxu0 0.0
          %1753 = vmatprep.subr.mxu0 0.0
          %1754 = vmatpush1.xpose.msra.mxu0 0.0
          %1755 = vmatprep.subr.mxu0 0.0
          %1756 = vmatpush1.xpose.msra.mxu0 0.0
          %1757 = vmatprep.subr.mxu0 0.0
          %1758 = vmatpush1.xpose.msra.mxu0 0.0
          %1759 = vmatprep.subr.mxu0 0.0
          %1760 = vmatpush1.xpose.msra.mxu0 0.0
          %1761 = vmatprep.subr.mxu0 0.0
          %1762 = vmatpush1.xpose.msra.mxu0 0.0
          %1763 = vmatprep.subr.mxu0 0.0
          %1764 = vmatpush1.xpose.msra.mxu0 0.0
          %1765 = vmatprep.subr.mxu0 0.0
          %1766 = vmatpush1.xpose.msra.mxu0 0.0
          %1767 = vmatprep.subr.mxu0 0.0
          %1768 = vmatpush1.xpose.msra.mxu0 0.0
          %1769 = vmatprep.subr.mxu0 0.0
          %1770 = vmatpush1.xpose.msra.mxu0 0.0
          %1771 = vmatprep.subr.mxu0 0.0
          %1772 = vmatpush1.xpose.msra.mxu0 0.0
          %1773 = vmatprep.subr.mxu0 0.0
          %1774 = vmatpush1.xpose.msra.mxu0 0.0
          %1775 = vmatprep.subr.mxu0 0.0
          %1776 = vmatpush1.xpose.msra.mxu0 0.0
          %1777 = vmatprep.subr.mxu0 0.0
          %1778 = vmatpush1.xpose.msra.mxu0 0.0
          %1779 = vmatprep.subr.mxu0 0.0
          %1780 = vmatpush1.xpose.msra.mxu0 0.0
          %1781 = vmatprep.subr.mxu0 0.0
          %1782 = vmatpush1.xpose.msra.mxu0 0.0
          %1783 = vmatprep.subr.mxu0 0.0
          %1784 = vmatpush1.xpose.msra.mxu0 0.0
          %1785 = vmatprep.subr.mxu0 0.0
          %1786 = vmatpush1.xpose.msra.mxu0 0.0
          %1787 = vmatprep.subr.mxu0 0.0
          %1788 = vmatpush1.xpose.msra.mxu0 0.0
          %1789 = vmatprep.subr.mxu0 0.0
          %1790 = vmatpush1.xpose.msra.mxu0 0.0
          %1791 = vmatprep.subr.mxu0 0.0
          %1792 = vmatpush1.xpose.msra.mxu0 0.0
          %1793 = vmatprep.subr.mxu0 0.0
          %1794 = vmatpush1.xpose.msra.mxu0 0.0
          %1795 = vmatprep.subr.mxu0 0.0
          %1796 = vmatpush1.xpose.msra.mxu0 0.0
          %1797 = vmatprep.subr.mxu0 0.0
          %1798 = vmatpush1.xpose.msra.mxu0 0.0
          %1799 = vmatprep.mubr.f32.mxu0 0.0
          %1800 = vmatmul.mubr.f32.gmra.mrb[0].mxu0 %v1730
          %v1801 = vpop.f32.mrb[0].mxu0
          %v1802 = vadd.f32 0.0, %v1801
          %v1803 = vpop.f32.mrb[0].mxu0
          %1804 = vdwg.mxu0
          %v1806 = vsel %vm1652, %v1650, 0
          %v1809 = vsel %vm1652, %v1641, 0
          %1811 = vmatprep.subr.mxu0 0.0
          %1812 = vmatpush1.xpose.msra.mxu0 %v1809
          %1813 = vmatprep.subr.mxu0 0.0
          %1814 = vmatpush1.xpose.msra.mxu0 0.0
          %1815 = vmatprep.subr.mxu0 0.0
          %1816 = vmatpush1.xpose.msra.mxu0 0.0
          %1817 = vmatprep.subr.mxu0 0.0
          %1818 = vmatpush1.xpose.msra.mxu0 0.0
          %1819 = vmatprep.subr.mxu0 0.0
          %1820 = vmatpush1.xpose.msra.mxu0 0.0
          %1821 = vmatprep.subr.mxu0 0.0
          %1822 = vmatpush1.xpose.msra.mxu0 0.0
          %1823 = vmatprep.subr.mxu0 0.0
          %1824 = vmatpush1.xpose.msra.mxu0 0.0
          %1825 = vmatprep.subr.mxu0 0.0
          %1826 = vmatpush1.xpose.msra.mxu0 0.0
          %1827 = vmatprep.subr.mxu0 0.0
          %1828 = vmatpush1.xpose.msra.mxu0 0.0
          %1829 = vmatprep.subr.mxu0 0.0
          %1830 = vmatpush1.xpose.msra.mxu0 0.0
          %1831 = vmatprep.subr.mxu0 0.0
          %1832 = vmatpush1.xpose.msra.mxu0 0.0
          %1833 = vmatprep.subr.mxu0 0.0
          %1834 = vmatpush1.xpose.msra.mxu0 0.0
          %1835 = vmatprep.subr.mxu0 0.0
          %1836 = vmatpush1.xpose.msra.mxu0 0.0
          %1837 = vmatprep.subr.mxu0 0.0
          %1838 = vmatpush1.xpose.msra.mxu0 0.0
          %1839 = vmatprep.subr.mxu0 0.0
          %1840 = vmatpush1.xpose.msra.mxu0 0.0
          %1841 = vmatprep.subr.mxu0 0.0
          %1842 = vmatpush1.xpose.msra.mxu0 0.0
          %1843 = vmatprep.subr.mxu0 0.0
          %1844 = vmatpush1.xpose.msra.mxu0 0.0
          %1845 = vmatprep.subr.mxu0 0.0
          %1846 = vmatpush1.xpose.msra.mxu0 0.0
          %1847 = vmatprep.subr.mxu0 0.0
          %1848 = vmatpush1.xpose.msra.mxu0 0.0
          %1849 = vmatprep.subr.mxu0 0.0
          %1850 = vmatpush1.xpose.msra.mxu0 0.0
          %1851 = vmatprep.subr.mxu0 0.0
          %1852 = vmatpush1.xpose.msra.mxu0 0.0
          %1853 = vmatprep.subr.mxu0 0.0
          %1854 = vmatpush1.xpose.msra.mxu0 0.0
          %1855 = vmatprep.subr.mxu0 0.0
          %1856 = vmatpush1.xpose.msra.mxu0 0.0
          %1857 = vmatprep.subr.mxu0 0.0
          %1858 = vmatpush1.xpose.msra.mxu0 0.0
          %1859 = vmatprep.subr.mxu0 0.0
          %1860 = vmatpush1.xpose.msra.mxu0 0.0
          %1861 = vmatprep.subr.mxu0 0.0
          %1862 = vmatpush1.xpose.msra.mxu0 0.0
          %1863 = vmatprep.subr.mxu0 0.0
          %1864 = vmatpush1.xpose.msra.mxu0 0.0
          %1865 = vmatprep.subr.mxu0 0.0
          %1866 = vmatpush1.xpose.msra.mxu0 0.0
          %1867 = vmatprep.subr.mxu0 0.0
          %1868 = vmatpush1.xpose.msra.mxu0 0.0
          %1869 = vmatprep.subr.mxu0 0.0
          %1870 = vmatpush1.xpose.msra.mxu0 0.0
          %1871 = vmatprep.subr.mxu0 0.0
          %1872 = vmatpush1.xpose.msra.mxu0 0.0
          %1873 = vmatprep.subr.mxu0 0.0
          %1874 = vmatpush1.xpose.msra.mxu0 0.0
          %1875 = vmatprep.mubr.f32.mxu0 0.0
          %1876 = vmatmul.mubr.f32.gmra.mrb[0].mxu0 %v1806
          %v1877 = vpop.f32.mrb[0].mxu0
          %v1878 = vadd.f32 0.0, %v1877
          %v1879 = vpop.f32.mrb[0].mxu0
          %1880 = vdwg.mxu0
          %v1882 = vsel %vm1652, %v1651, 0
          %v1885 = vsel %vm1652, %v1642, 0
          %1887 = vmatprep.subr.mxu0 0.0
          %1888 = vmatpush1.xpose.msra.mxu0 %v1885
          %1889 = vmatprep.subr.mxu0 0.0
          %1890 = vmatpush1.xpose.msra.mxu0 0.0
          %1891 = vmatprep.subr.mxu0 0.0
          %1892 = vmatpush1.xpose.msra.mxu0 0.0
          %1893 = vmatprep.subr.mxu0 0.0
          %1894 = vmatpush1.xpose.msra.mxu0 0.0
          %1895 = vmatprep.subr.mxu0 0.0
          %1896 = vmatpush1.xpose.msra.mxu0 0.0
          %1897 = vmatprep.subr.mxu0 0.0
          %1898 = vmatpush1.xpose.msra.mxu0 0.0
          %1899 = vmatprep.subr.mxu0 0.0
          %1900 = vmatpush1.xpose.msra.mxu0 0.0
          %1901 = vmatprep.subr.mxu0 0.0
          %1902 = vmatpush1.xpose.msra.mxu0 0.0
          %1903 = vmatprep.subr.mxu0 0.0
          %1904 = vmatpush1.xpose.msra.mxu0 0.0
          %1905 = vmatprep.subr.mxu0 0.0
          %1906 = vmatpush1.xpose.msra.mxu0 0.0
          %1907 = vmatprep.subr.mxu0 0.0
          %1908 = vmatpush1.xpose.msra.mxu0 0.0
          %1909 = vmatprep.subr.mxu0 0.0
          %1910 = vmatpush1.xpose.msra.mxu0 0.0
          %1911 = vmatprep.subr.mxu0 0.0
          %1912 = vmatpush1.xpose.msra.mxu0 0.0
          %1913 = vmatprep.subr.mxu0 0.0
          %1914 = vmatpush1.xpose.msra.mxu0 0.0
          %1915 = vmatprep.subr.mxu0 0.0
          %1916 = vmatpush1.xpose.msra.mxu0 0.0
          %1917 = vmatprep.subr.mxu0 0.0
          %1918 = vmatpush1.xpose.msra.mxu0 0.0
          %1919 = vmatprep.subr.mxu0 0.0
          %1920 = vmatpush1.xpose.msra.mxu0 0.0
          %1921 = vmatprep.subr.mxu0 0.0
          %1922 = vmatpush1.xpose.msra.mxu0 0.0
          %1923 = vmatprep.subr.mxu0 0.0
          %1924 = vmatpush1.xpose.msra.mxu0 0.0
          %1925 = vmatprep.subr.mxu0 0.0
          %1926 = vmatpush1.xpose.msra.mxu0 0.0
          %1927 = vmatprep.subr.mxu0 0.0
          %1928 = vmatpush1.xpose.msra.mxu0 0.0
          %1929 = vmatprep.subr.mxu0 0.0
          %1930 = vmatpush1.xpose.msra.mxu0 0.0
          %1931 = vmatprep.subr.mxu0 0.0
          %1932 = vmatpush1.xpose.msra.mxu0 0.0
          %1933 = vmatprep.subr.mxu0 0.0
          %1934 = vmatpush1.xpose.msra.mxu0 0.0
          %1935 = vmatprep.subr.mxu0 0.0
          %1936 = vmatpush1.xpose.msra.mxu0 0.0
          %1937 = vmatprep.subr.mxu0 0.0
          %1938 = vmatpush1.xpose.msra.mxu0 0.0
          %1939 = vmatprep.subr.mxu0 0.0
          %1940 = vmatpush1.xpose.msra.mxu0 0.0
          %1941 = vmatprep.subr.mxu0 0.0
          %1942 = vmatpush1.xpose.msra.mxu0 0.0
          %1943 = vmatprep.subr.mxu0 0.0
          %1944 = vmatpush1.xpose.msra.mxu0 0.0
          %1945 = vmatprep.subr.mxu0 0.0
          %1946 = vmatpush1.xpose.msra.mxu0 0.0
          %1947 = vmatprep.subr.mxu0 0.0
          %1948 = vmatpush1.xpose.msra.mxu0 0.0
          %1949 = vmatprep.subr.mxu0 0.0
          %1950 = vmatpush1.xpose.msra.mxu0 0.0
          %1951 = vmatprep.mubr.f32.mxu0 0.0
          %1952 = vmatmul.mubr.f32.gmra.mrb[0].mxu0 %v1882
          %v1953 = vpop.f32.mrb[0].mxu0
          %v1954 = vadd.f32 0.0, %v1953
          %v1955 = vpop.f32.mrb[0].mxu0
          %1956 = vdwg.mxu0
          %s1957 = smul.u32 %s41, 8
          %v1958 = vlaneseq
          %v1959 = vshrl.u32 %v1958, 7
          %v1960 = vstv %s1957
          %v1961 = vadd.s32 %v1960, %v1959
          %v1962 = vlaneseq
          %v1963 = vand.u32 %v1962, 127
          %v1964 = vstv %s1632
          %v1965 = vadd.s32 %v1964, %v1963
          %vm1966 = vcmp.ge.s32.totalorder %v1961, %v1965
          %v1967 = vsel %vm1966, 1, 0
          %vm1968 = vcmp.eq.s32.totalorder %v1967, 1
          %v1969 = vsel %vm1968, %v1726, -1e+30
          %v1970 = vsel %vm1968, %v1802, -1e+30
          %v1971 = vsel %vm1968, %v1878, -1e+30
          %v1972 = vsel %vm1968, %v1954, -1e+30
          %v1973 = vld [vmem:[#allocation5] sm:$0xff]
          %v1974 = vld [vmem:[#allocation5 + $0x8] sm:$0xff]
          %v1975 = vld [vmem:[#allocation5 + $0x10] sm:$0xff]
          %v1976 = vld [vmem:[#allocation5 + $0x18] sm:$0xff]
          %v1977 = vsel %vm1652, %v1969, -inf
          %1978 = vmax.xlane.f32.xlu0 %v1977
          %v1979 = vpop.xlane.xlu0 %1978
          %v1980 = vsel %vm1652, %v1970, -inf
          %1981 = vmax.xlane.f32.xlu0 %v1980
          %v1982 = vpop.xlane.xlu0 %1981
          %v1983 = vsel %vm1652, %v1971, -inf
          %1984 = vmax.xlane.f32.xlu0 %v1983
          %v1985 = vpop.xlane.xlu0 %1984
          %v1986 = vsel %vm1652, %v1972, -inf
          %1987 = vmax.xlane.f32.xlu0 %v1986
          %v1988 = vpop.xlane.xlu0 %1987
          %v1989 = vmax.f32 %v1973, %v1979
          %v1990 = vmax.f32 %v1974, %v1982
          %v1991 = vmax.f32 %v1975, %v1985
          %v1992 = vmax.f32 %v1976, %v1988
          %v1993 = vsub.f32 %v1973, %v1989
          %v1994 = vsub.f32 %v1974, %v1990
          %v1995 = vsub.f32 %v1975, %v1991
          %v1996 = vsub.f32 %v1976, %v1992
          %v1997 = vmul.f32 %v1993, 1.442695
          %v1998 = vpow.pop %v1997
          %v1999 = vmul.f32 %v1994, 1.442695
          %v2000 = vpow.pop %v1999
          %v2001 = vmul.f32 %v1995, 1.442695
          %v2002 = vpow.pop %v2001
          %v2003 = vmul.f32 %v1996, 1.442695
          %v2004 = vpow.pop %v2003
          %2006 = vset.pattern.permute.xlu0 0
          %2007 = vperm.xlu0 %2006, %v1989
          %v2008 = vpop.permute.xlu0 %2007
          %2011 = vset.pattern.permute.xlu0 0
          %2012 = vperm.xlu0 %2011, %v1990
          %v2013 = vpop.permute.xlu0 %2012
          %2016 = vset.pattern.permute.xlu0 0
          %2017 = vperm.xlu0 %2016, %v1991
          %v2018 = vpop.permute.xlu0 %2017
          %2021 = vset.pattern.permute.xlu0 0
          %2022 = vperm.xlu0 %2021, %v1992
          %v2023 = vpop.permute.xlu0 %2022
          %v2025 = vsub.f32 %v1969, %v2008
          %v2026 = vsub.f32 %v1970, %v2013
          %v2027 = vsub.f32 %v1971, %v2018
          %v2028 = vsub.f32 %v1972, %v2023
          %v2029 = vmul.f32 %v2025, 1.442695
          %v2030 = vpow.pop %v2029
          %v2031 = vmul.f32 %v2026, 1.442695
          %v2032 = vpow.pop %v2031
          %v2033 = vmul.f32 %v2027, 1.442695
          %v2034 = vpow.pop %v2033
          %v2035 = vmul.f32 %v2028, 1.442695
          %v2036 = vpow.pop %v2035
          %v2037 = vld [vmem:[#allocation6] sm:$0xff]
          %v2038 = vld [vmem:[#allocation6 + $0x8] sm:$0xff]
          %v2039 = vld [vmem:[#allocation6 + $0x10] sm:$0xff]
          %v2040 = vld [vmem:[#allocation6 + $0x18] sm:$0xff]
          %v2041 = vmul.f32 %v1998, %v2037
          %v2042 = vmul.f32 %v2000, %v2038
          %v2043 = vmul.f32 %v2002, %v2039
          %v2044 = vmul.f32 %v2004, %v2040
          %v2045 = vsel %vm1652, %v2030, 0.0
          %2046 = vadd.xlane.f32.xlu0 %v2045
          %v2047 = vpop.xlane.xlu0 %2046
          %v2048 = vsel %vm1652, %v2032, 0.0
          %2049 = vadd.xlane.f32.xlu0 %v2048
          %v2050 = vpop.xlane.xlu0 %2049
          %v2051 = vsel %vm1652, %v2034, 0.0
          %2052 = vadd.xlane.f32.xlu0 %v2051
          %v2053 = vpop.xlane.xlu0 %2052
          %v2054 = vsel %vm1652, %v2036, 0.0
          %2055 = vadd.xlane.f32.xlu0 %v2054
          %v2056 = vpop.xlane.xlu0 %2055
          %v2057 = vadd.f32 %v2041, %v2047
          %v2058 = vadd.f32 %v2042, %v2050
          %v2059 = vadd.f32 %v2043, %v2053
          %v2060 = vadd.f32 %v2044, %v2056
          %vm2061 = vcmask 7168
          %2062 = vst.msk [vmem:[#allocation6] sm:$0xff] %vm2061, %v2057
          %2063 = vst.msk [vmem:[#allocation6 + $0x8] sm:$0xff] %vm2061, %v2058
          %2064 = vst.msk [vmem:[#allocation6 + $0x10] sm:$0xff] %vm2061, %v2059
          %2065 = vst.msk [vmem:[#allocation6 + $0x18] sm:$0xff] %vm2061, %v2060
          %v2066 = vld [vmem:[#allocation7] sm:$0xff]
          %v2067 = vld [vmem:[#allocation7 + $0x8] sm:$0xff]
          %v2068 = vld [vmem:[#allocation7 + $0x10] sm:$0xff]
          %v2069 = vld [vmem:[#allocation7 + $0x18] sm:$0xff]
          %2071 = vset.pattern.permute.xlu0 0
          %2072 = vperm.xlu0 %2071, %v1998
          %v2073 = vpop.permute.xlu0 %2072
          %2076 = vset.pattern.permute.xlu0 0
          %2077 = vperm.xlu0 %2076, %v2000
          %v2078 = vpop.permute.xlu0 %2077
          %2081 = vset.pattern.permute.xlu0 0
          %2082 = vperm.xlu0 %2081, %v2002
          %v2083 = vpop.permute.xlu0 %2082
          %2086 = vset.pattern.permute.xlu0 0
          %2087 = vperm.xlu0 %2086, %v2004
          %v2088 = vpop.permute.xlu0 %2087
          %v2090 = vmul.f32 %v2073, %v2066
          %v2091 = vmul.f32 %v2078, %v2067
          %v2092 = vmul.f32 %v2083, %v2068
          %v2093 = vmul.f32 %v2088, %v2069
          %v2095 = vsel %vm1652, %v2030, 0
          %2097 = vmatprep.subr.mxu0 0.0
          %2098 = vmatpush1.msra.mxu0 %v1644
          %2099 = vmatprep.subr.mxu0 0.0
          %2100 = vmatpush1.msra.mxu0 0.0
          %2101 = vmatprep.subr.mxu0 0.0
          %2102 = vmatpush1.msra.mxu0 0.0
          %2103 = vmatprep.subr.mxu0 0.0
          %2104 = vmatpush1.msra.mxu0 0.0
          %2105 = vmatprep.subr.mxu0 0.0
          %2106 = vmatpush1.msra.mxu0 0.0
          %2107 = vmatprep.subr.mxu0 0.0
          %2108 = vmatpush1.msra.mxu0 0.0
          %2109 = vmatprep.subr.mxu0 0.0
          %2110 = vmatpush1.msra.mxu0 0.0
          %2111 = vmatprep.subr.mxu0 0.0
          %2112 = vmatpush1.msra.mxu0 0.0
          %2113 = vmatprep.subr.mxu0 0.0
          %2114 = vmatpush1.msra.mxu0 0.0
          %2115 = vmatprep.subr.mxu0 0.0
          %2116 = vmatpush1.msra.mxu0 0.0
          %2117 = vmatprep.subr.mxu0 0.0
          %2118 = vmatpush1.msra.mxu0 0.0
          %2119 = vmatprep.subr.mxu0 0.0
          %2120 = vmatpush1.msra.mxu0 0.0
          %2121 = vmatprep.subr.mxu0 0.0
          %2122 = vmatpush1.msra.mxu0 0.0
          %2123 = vmatprep.subr.mxu0 0.0
          %2124 = vmatpush1.msra.mxu0 0.0
          %2125 = vmatprep.subr.mxu0 0.0
          %2126 = vmatpush1.msra.mxu0 0.0
          %2127 = vmatprep.subr.mxu0 0.0
          %2128 = vmatpush1.msra.mxu0 0.0
          %2129 = vmatprep.subr.mxu0 0.0
          %2130 = vmatpush1.msra.mxu0 0.0
          %2131 = vmatprep.subr.mxu0 0.0
          %2132 = vmatpush1.msra.mxu0 0.0
          %2133 = vmatprep.subr.mxu0 0.0
          %2134 = vmatpush1.msra.mxu0 0.0
          %2135 = vmatprep.subr.mxu0 0.0
          %2136 = vmatpush1.msra.mxu0 0.0
          %2137 = vmatprep.subr.mxu0 0.0
          %2138 = vmatpush1.msra.mxu0 0.0
          %2139 = vmatprep.subr.mxu0 0.0
          %2140 = vmatpush1.msra.mxu0 0.0
          %2141 = vmatprep.subr.mxu0 0.0
          %2142 = vmatpush1.msra.mxu0 0.0
          %2143 = vmatprep.subr.mxu0 0.0
          %2144 = vmatpush1.msra.mxu0 0.0
          %2145 = vmatprep.subr.mxu0 0.0
          %2146 = vmatpush1.msra.mxu0 0.0
          %2147 = vmatprep.subr.mxu0 0.0
          %2148 = vmatpush1.msra.mxu0 0.0
          %2149 = vmatprep.subr.mxu0 0.0
          %2150 = vmatpush1.msra.mxu0 0.0
          %2151 = vmatprep.subr.mxu0 0.0
          %2152 = vmatpush1.msra.mxu0 0.0
          %2153 = vmatprep.subr.mxu0 0.0
          %2154 = vmatpush1.msra.mxu0 0.0
          %2155 = vmatprep.subr.mxu0 0.0
          %2156 = vmatpush1.msra.mxu0 0.0
          %2157 = vmatprep.subr.mxu0 0.0
          %2158 = vmatpush1.msra.mxu0 0.0
          %2159 = vmatprep.subr.mxu0 0.0
          %2160 = vmatpush1.msra.mxu0 0.0
          %2161 = vmatprep.mubr.f32.mxu0 0.0
          %2162 = vmatmul.mubr.f32.gmra.mrb[0].mxu0 %v2095
          %v2163 = vpop.f32.mrb[0].mxu0
          %v2164 = vadd.f32 0.0, %v2163
          %v2165 = vpop.f32.mrb[0].mxu0
          %2166 = vdwg.mxu0
          %v2168 = vsel %vm1652, %v2032, 0
          %2170 = vmatprep.subr.mxu0 0.0
          %2171 = vmatpush1.msra.mxu0 %v1645
          %2172 = vmatprep.subr.mxu0 0.0
          %2173 = vmatpush1.msra.mxu0 0.0
          %2174 = vmatprep.subr.mxu0 0.0
          %2175 = vmatpush1.msra.mxu0 0.0
          %2176 = vmatprep.subr.mxu0 0.0
          %2177 = vmatpush1.msra.mxu0 0.0
          %2178 = vmatprep.subr.mxu0 0.0
          %2179 = vmatpush1.msra.mxu0 0.0
          %2180 = vmatprep.subr.mxu0 0.0
          %2181 = vmatpush1.msra.mxu0 0.0
          %2182 = vmatprep.subr.mxu0 0.0
          %2183 = vmatpush1.msra.mxu0 0.0
          %2184 = vmatprep.subr.mxu0 0.0
          %2185 = vmatpush1.msra.mxu0 0.0
          %2186 = vmatprep.subr.mxu0 0.0
          %2187 = vmatpush1.msra.mxu0 0.0
          %2188 = vmatprep.subr.mxu0 0.0
          %2189 = vmatpush1.msra.mxu0 0.0
          %2190 = vmatprep.subr.mxu0 0.0
          %2191 = vmatpush1.msra.mxu0 0.0
          %2192 = vmatprep.subr.mxu0 0.0
          %2193 = vmatpush1.msra.mxu0 0.0
          %2194 = vmatprep.subr.mxu0 0.0
          %2195 = vmatpush1.msra.mxu0 0.0
          %2196 = vmatprep.subr.mxu0 0.0
          %2197 = vmatpush1.msra.mxu0 0.0
          %2198 = vmatprep.subr.mxu0 0.0
          %2199 = vmatpush1.msra.mxu0 0.0
          %2200 = vmatprep.subr.mxu0 0.0
          %2201 = vmatpush1.msra.mxu0 0.0
          %2202 = vmatprep.subr.mxu0 0.0
          %2203 = vmatpush1.msra.mxu0 0.0
          %2204 = vmatprep.subr.mxu0 0.0
          %2205 = vmatpush1.msra.mxu0 0.0
          %2206 = vmatprep.subr.mxu0 0.0
          %2207 = vmatpush1.msra.mxu0 0.0
          %2208 = vmatprep.subr.mxu0 0.0
          %2209 = vmatpush1.msra.mxu0 0.0
          %2210 = vmatprep.subr.mxu0 0.0
          %2211 = vmatpush1.msra.mxu0 0.0
          %2212 = vmatprep.subr.mxu0 0.0
          %2213 = vmatpush1.msra.mxu0 0.0
          %2214 = vmatprep.subr.mxu0 0.0
          %2215 = vmatpush1.msra.mxu0 0.0
          %2216 = vmatprep.subr.mxu0 0.0
          %2217 = vmatpush1.msra.mxu0 0.0
          %2218 = vmatprep.subr.mxu0 0.0
          %2219 = vmatpush1.msra.mxu0 0.0
          %2220 = vmatprep.subr.mxu0 0.0
          %2221 = vmatpush1.msra.mxu0 0.0
          %2222 = vmatprep.subr.mxu0 0.0
          %2223 = vmatpush1.msra.mxu0 0.0
          %2224 = vmatprep.subr.mxu0 0.0
          %2225 = vmatpush1.msra.mxu0 0.0
          %2226 = vmatprep.subr.mxu0 0.0
          %2227 = vmatpush1.msra.mxu0 0.0
          %2228 = vmatprep.subr.mxu0 0.0
          %2229 = vmatpush1.msra.mxu0 0.0
          %2230 = vmatprep.subr.mxu0 0.0
          %2231 = vmatpush1.msra.mxu0 0.0
          %2232 = vmatprep.subr.mxu0 0.0
          %2233 = vmatpush1.msra.mxu0 0.0
          %2234 = vmatprep.mubr.f32.mxu0 0.0
          %2235 = vmatmul.mubr.f32.gmra.mrb[0].mxu0 %v2168
          %v2236 = vpop.f32.mrb[0].mxu0
          %v2237 = vadd.f32 0.0, %v2236
          %v2238 = vpop.f32.mrb[0].mxu0
          %2239 = vdwg.mxu0
          %v2241 = vsel %vm1652, %v2034, 0
          %2243 = vmatprep.subr.mxu0 0.0
          %2244 = vmatpush1.msra.mxu0 %v1646
          %2245 = vmatprep.subr.mxu0 0.0
          %2246 = vmatpush1.msra.mxu0 0.0
          %2247 = vmatprep.subr.mxu0 0.0
          %2248 = vmatpush1.msra.mxu0 0.0
          %2249 = vmatprep.subr.mxu0 0.0
          %2250 = vmatpush1.msra.mxu0 0.0
          %2251 = vmatprep.subr.mxu0 0.0
          %2252 = vmatpush1.msra.mxu0 0.0
          %2253 = vmatprep.subr.mxu0 0.0
          %2254 = vmatpush1.msra.mxu0 0.0
          %2255 = vmatprep.subr.mxu0 0.0
          %2256 = vmatpush1.msra.mxu0 0.0
          %2257 = vmatprep.subr.mxu0 0.0
          %2258 = vmatpush1.msra.mxu0 0.0
          %2259 = vmatprep.subr.mxu0 0.0
          %2260 = vmatpush1.msra.mxu0 0.0
          %2261 = vmatprep.subr.mxu0 0.0
          %2262 = vmatpush1.msra.mxu0 0.0
          %2263 = vmatprep.subr.mxu0 0.0
          %2264 = vmatpush1.msra.mxu0 0.0
          %2265 = vmatprep.subr.mxu0 0.0
          %2266 = vmatpush1.msra.mxu0 0.0
          %2267 = vmatprep.subr.mxu0 0.0
          %2268 = vmatpush1.msra.mxu0 0.0
          %2269 = vmatprep.subr.mxu0 0.0
          %2270 = vmatpush1.msra.mxu0 0.0
          %2271 = vmatprep.subr.mxu0 0.0
          %2272 = vmatpush1.msra.mxu0 0.0
          %2273 = vmatprep.subr.mxu0 0.0
          %2274 = vmatpush1.msra.mxu0 0.0
          %2275 = vmatprep.subr.mxu0 0.0
          %2276 = vmatpush1.msra.mxu0 0.0
          %2277 = vmatprep.subr.mxu0 0.0
          %2278 = vmatpush1.msra.mxu0 0.0
          %2279 = vmatprep.subr.mxu0 0.0
          %2280 = vmatpush1.msra.mxu0 0.0
          %2281 = vmatprep.subr.mxu0 0.0
          %2282 = vmatpush1.msra.mxu0 0.0
          %2283 = vmatprep.subr.mxu0 0.0
          %2284 = vmatpush1.msra.mxu0 0.0
          %2285 = vmatprep.subr.mxu0 0.0
          %2286 = vmatpush1.msra.mxu0 0.0
          %2287 = vmatprep.subr.mxu0 0.0
          %2288 = vmatpush1.msra.mxu0 0.0
          %2289 = vmatprep.subr.mxu0 0.0
          %2290 = vmatpush1.msra.mxu0 0.0
          %2291 = vmatprep.subr.mxu0 0.0
          %2292 = vmatpush1.msra.mxu0 0.0
          %2293 = vmatprep.subr.mxu0 0.0
          %2294 = vmatpush1.msra.mxu0 0.0
          %2295 = vmatprep.subr.mxu0 0.0
          %2296 = vmatpush1.msra.mxu0 0.0
          %2297 = vmatprep.subr.mxu0 0.0
          %2298 = vmatpush1.msra.mxu0 0.0
          %2299 = vmatprep.subr.mxu0 0.0
          %2300 = vmatpush1.msra.mxu0 0.0
          %2301 = vmatprep.subr.mxu0 0.0
          %2302 = vmatpush1.msra.mxu0 0.0
          %2303 = vmatprep.subr.mxu0 0.0
          %2304 = vmatpush1.msra.mxu0 0.0
          %2305 = vmatprep.subr.mxu0 0.0
          %2306 = vmatpush1.msra.mxu0 0.0
          %2307 = vmatprep.mubr.f32.mxu0 0.0
          %2308 = vmatmul.mubr.f32.gmra.mrb[0].mxu0 %v2241
          %v2309 = vpop.f32.mrb[0].mxu0
          %v2310 = vadd.f32 0.0, %v2309
          %v2311 = vpop.f32.mrb[0].mxu0
          %2312 = vdwg.mxu0
          %v2314 = vsel %vm1652, %v2036, 0
          %2316 = vmatprep.subr.mxu0 0.0
          %2317 = vmatpush1.msra.mxu0 %v1647
          %2318 = vmatprep.subr.mxu0 0.0
          %2319 = vmatpush1.msra.mxu0 0.0
          %2320 = vmatprep.subr.mxu0 0.0
          %2321 = vmatpush1.msra.mxu0 0.0
          %2322 = vmatprep.subr.mxu0 0.0
          %2323 = vmatpush1.msra.mxu0 0.0
          %2324 = vmatprep.subr.mxu0 0.0
          %2325 = vmatpush1.msra.mxu0 0.0
          %2326 = vmatprep.subr.mxu0 0.0
          %2327 = vmatpush1.msra.mxu0 0.0
          %2328 = vmatprep.subr.mxu0 0.0
          %2329 = vmatpush1.msra.mxu0 0.0
          %2330 = vmatprep.subr.mxu0 0.0
          %2331 = vmatpush1.msra.mxu0 0.0
          %2332 = vmatprep.subr.mxu0 0.0
          %2333 = vmatpush1.msra.mxu0 0.0
          %2334 = vmatprep.subr.mxu0 0.0
          %2335 = vmatpush1.msra.mxu0 0.0
          %2336 = vmatprep.subr.mxu0 0.0
          %2337 = vmatpush1.msra.mxu0 0.0
          %2338 = vmatprep.subr.mxu0 0.0
          %2339 = vmatpush1.msra.mxu0 0.0
          %2340 = vmatprep.subr.mxu0 0.0
          %2341 = vmatpush1.msra.mxu0 0.0
          %2342 = vmatprep.subr.mxu0 0.0
          %2343 = vmatpush1.msra.mxu0 0.0
          %2344 = vmatprep.subr.mxu0 0.0
          %2345 = vmatpush1.msra.mxu0 0.0
          %2346 = vmatprep.subr.mxu0 0.0
          %2347 = vmatpush1.msra.mxu0 0.0
          %2348 = vmatprep.subr.mxu0 0.0
          %2349 = vmatpush1.msra.mxu0 0.0
          %2350 = vmatprep.subr.mxu0 0.0
          %2351 = vmatpush1.msra.mxu0 0.0
          %2352 = vmatprep.subr.mxu0 0.0
          %2353 = vmatpush1.msra.mxu0 0.0
          %2354 = vmatprep.subr.mxu0 0.0
          %2355 = vmatpush1.msra.mxu0 0.0
          %2356 = vmatprep.subr.mxu0 0.0
          %2357 = vmatpush1.msra.mxu0 0.0
          %2358 = vmatprep.subr.mxu0 0.0
          %2359 = vmatpush1.msra.mxu0 0.0
          %2360 = vmatprep.subr.mxu0 0.0
          %2361 = vmatpush1.msra.mxu0 0.0
          %2362 = vmatprep.subr.mxu0 0.0
          %2363 = vmatpush1.msra.mxu0 0.0
          %2364 = vmatprep.subr.mxu0 0.0
          %2365 = vmatpush1.msra.mxu0 0.0
          %2366 = vmatprep.subr.mxu0 0.0
          %2367 = vmatpush1.msra.mxu0 0.0
          %2368 = vmatprep.subr.mxu0 0.0
          %2369 = vmatpush1.msra.mxu0 0.0
          %2370 = vmatprep.subr.mxu0 0.0
          %2371 = vmatpush1.msra.mxu0 0.0
          %2372 = vmatprep.subr.mxu0 0.0
          %2373 = vmatpush1.msra.mxu0 0.0
          %2374 = vmatprep.subr.mxu0 0.0
          %2375 = vmatpush1.msra.mxu0 0.0
          %2376 = vmatprep.subr.mxu0 0.0
          %2377 = vmatpush1.msra.mxu0 0.0
          %2378 = vmatprep.subr.mxu0 0.0
          %2379 = vmatpush1.msra.mxu0 0.0
          %2380 = vmatprep.mubr.f32.mxu0 0.0
          %2381 = vmatmul.mubr.f32.gmra.mrb[0].mxu0 %v2314
          %v2382 = vpop.f32.mrb[0].mxu0
          %v2383 = vadd.f32 0.0, %v2382
          %v2384 = vpop.f32.mrb[0].mxu0
          %2385 = vdwg.mxu0
          %v2386 = vadd.f32 %v2090, %v2164
          %v2387 = vadd.f32 %v2091, %v2237
          %v2388 = vadd.f32 %v2092, %v2310
          %v2389 = vadd.f32 %v2093, %v2383
          %2390 = vst.msk [vmem:[#allocation7] sm:$0xff] %vm1652, %v2386
          %2391 = vst.msk [vmem:[#allocation7 + $0x8] sm:$0xff] %vm1652, %v2387
          %2392 = vst.msk [vmem:[#allocation7 + $0x10] sm:$0xff] %vm1652, %v2388
          %2393 = vst.msk [vmem:[#allocation7 + $0x18] sm:$0xff] %vm1652, %v2389
          %2394 = vst.msk [vmem:[#allocation5] sm:$0xff] %vm2061, %v1989
          %2395 = vst.msk [vmem:[#allocation5 + $0x8] sm:$0xff] %vm2061, %v1990
          %2396 = vst.msk [vmem:[#allocation5 + $0x10] sm:$0xff] %vm2061, %v1991
          %2397 = vst.msk [vmem:[#allocation5 + $0x18] sm:$0xff] %vm2061, %v1992
        $region120: #{tpu_custom_call.1} parent=63 // pred_fallthru
          _
        %p2398 = scmp.eq.s32.totalorder %s42, 1
        // Predicated region
        $region121: #{tpu_custom_call.1} parent=63 // pred_check
          %p2399 = pneg %p2398
        $region122: #{tpu_custom_call.1} parent=63 // pred_check_branch
          %2401 = sbr.rel (%p2399) target = $region124
        $region123: #{tpu_custom_call.1} parent=63 // pred_region
          %v2402 = vld [vmem:[%s539] sm:$0x3f]
          %v2403 = vld [vmem:[#allocation7] sm:$0xff]
          %v2404 = vld [vmem:[#allocation7 + $0x8] sm:$0xff]
          %v2405 = vld [vmem:[#allocation7 + $0x10] sm:$0xff]
          %v2406 = vld [vmem:[#allocation7 + $0x18] sm:$0xff]
          %v2407 = vld [vmem:[#allocation6] sm:$0xff]
          %v2408 = vld [vmem:[#allocation6 + $0x8] sm:$0xff]
          %v2409 = vld [vmem:[#allocation6 + $0x10] sm:$0xff]
          %v2410 = vld [vmem:[#allocation6 + $0x18] sm:$0xff]
          %v2411 = vrcp.pop %v2407
          %v2412 = vrcp.pop %v2408
          %v2413 = vrcp.pop %v2409
          %v2414 = vrcp.pop %v2410
          %2416 = vset.pattern.permute.xlu0 0
          %2417 = vperm.xlu0 %2416, %v2411
          %v2418 = vpop.permute.xlu0 %2417
          %2421 = vset.pattern.permute.xlu0 0
          %2422 = vperm.xlu0 %2421, %v2412
          %v2423 = vpop.permute.xlu0 %2422
          %2426 = vset.pattern.permute.xlu0 0
          %2427 = vperm.xlu0 %2426, %v2413
          %v2428 = vpop.permute.xlu0 %2427
          %2431 = vset.pattern.permute.xlu0 0
          %2432 = vperm.xlu0 %2431, %v2414
          %v2433 = vpop.permute.xlu0 %2432
          %v2435 = vmul.f32 %v2403, %v2418
          %v2436 = vmul.f32 %v2404, %v2423
          %v2437 = vmul.f32 %v2405, %v2428
          %v2438 = vmul.f32 %v2406, %v2433
          %v2439 = vld [vmem:[#allocation19] sm:$0xff]
          %s2440 = scalar_lea.vmem [#allocation19], 8
          %v2441 = vld [vmem:[%s2440] sm:$0xff]
          %vm2442 = vcmask 64512
          %v2444 = vsel %vm2442, %v2436, 0
          %2446 = vmatprep.subr.mxu0 0.0
          %2447 = vmatpush1.msra.mxu0 %v2441
          %2448 = vmatprep.subr.mxu0 0.0
          %2449 = vmatpush1.msra.mxu0 0.0
          %2450 = vmatprep.subr.mxu0 0.0
          %2451 = vmatpush1.msra.mxu0 0.0
          %2452 = vmatprep.subr.mxu0 0.0
          %2453 = vmatpush1.msra.mxu0 0.0
          %2454 = vmatprep.subr.mxu0 0.0
          %2455 = vmatpush1.msra.mxu0 0.0
          %2456 = vmatprep.subr.mxu0 0.0
          %2457 = vmatpush1.msra.mxu0 0.0
          %2458 = vmatprep.subr.mxu0 0.0
          %2459 = vmatpush1.msra.mxu0 0.0
          %2460 = vmatprep.subr.mxu0 0.0
          %2461 = vmatpush1.msra.mxu0 0.0
          %2462 = vmatprep.subr.mxu0 0.0
          %2463 = vmatpush1.msra.mxu0 0.0
          %2464 = vmatprep.subr.mxu0 0.0
          %2465 = vmatpush1.msra.mxu0 0.0
          %2466 = vmatprep.subr.mxu0 0.0
          %2467 = vmatpush1.msra.mxu0 0.0
          %2468 = vmatprep.subr.mxu0 0.0
          %2469 = vmatpush1.msra.mxu0 0.0
          %2470 = vmatprep.subr.mxu0 0.0
          %2471 = vmatpush1.msra.mxu0 0.0
          %2472 = vmatprep.subr.mxu0 0.0
          %2473 = vmatpush1.msra.mxu0 0.0
          %2474 = vmatprep.subr.mxu0 0.0
          %2475 = vmatpush1.msra.mxu0 0.0
          %2476 = vmatprep.subr.mxu0 0.0
          %2477 = vmatpush1.msra.mxu0 0.0
          %2478 = vmatprep.subr.mxu0 0.0
          %2479 = vmatpush1.msra.mxu0 0.0
          %2480 = vmatprep.subr.mxu0 0.0
          %2481 = vmatpush1.msra.mxu0 0.0
          %2482 = vmatprep.subr.mxu0 0.0
          %2483 = vmatpush1.msra.mxu0 0.0
          %2484 = vmatprep.subr.mxu0 0.0
          %2485 = vmatpush1.msra.mxu0 0.0
          %2486 = vmatprep.subr.mxu0 0.0
          %2487 = vmatpush1.msra.mxu0 0.0
          %2488 = vmatprep.subr.mxu0 0.0
          %2489 = vmatpush1.msra.mxu0 0.0
          %2490 = vmatprep.subr.mxu0 0.0
          %2491 = vmatpush1.msra.mxu0 0.0
          %2492 = vmatprep.subr.mxu0 0.0
          %2493 = vmatpush1.msra.mxu0 0.0
          %2494 = vmatprep.subr.mxu0 0.0
          %2495 = vmatpush1.msra.mxu0 0.0
          %2496 = vmatprep.subr.mxu0 0.0
          %2497 = vmatpush1.msra.mxu0 0.0
          %2498 = vmatprep.subr.mxu0 0.0
          %2499 = vmatpush1.msra.mxu0 0.0
          %2500 = vmatprep.subr.mxu0 0.0
          %2501 = vmatpush1.msra.mxu0 0.0
          %2502 = vmatprep.subr.mxu0 0.0
          %2503 = vmatpush1.msra.mxu0 0.0
          %2504 = vmatprep.subr.mxu0 0.0
          %2505 = vmatpush1.msra.mxu0 0.0
          %2506 = vmatprep.subr.mxu0 0.0
          %2507 = vmatpush1.msra.mxu0 0.0
          %2508 = vmatprep.subr.mxu0 0.0
          %2509 = vmatpush1.msra.mxu0 0.0
          %2510 = vmatprep.mubr.f32.mxu0 0.0
          %2511 = vmatmul.mubr.f32.gmra.mrb[0].mxu0 %v2444
          %v2512 = vpop.f32.mrb[0].mxu0
          %v2513 = vadd.f32 0.0, %v2512
          %v2514 = vpop.f32.mrb[0].mxu0
          %2515 = vdwg.mxu0
          %v2517 = vsel %vm2442, %v2435, 0
          %2519 = vmatprep.subr.mxu0 0.0
          %2520 = vmatpush1.msra.mxu0 %v2439
          %2521 = vmatprep.subr.mxu0 0.0
          %2522 = vmatpush1.msra.mxu0 0.0
          %2523 = vmatprep.subr.mxu0 0.0
          %2524 = vmatpush1.msra.mxu0 0.0
          %2525 = vmatprep.subr.mxu0 0.0
          %2526 = vmatpush1.msra.mxu0 0.0
          %2527 = vmatprep.subr.mxu0 0.0
          %2528 = vmatpush1.msra.mxu0 0.0
          %2529 = vmatprep.subr.mxu0 0.0
          %2530 = vmatpush1.msra.mxu0 0.0
          %2531 = vmatprep.subr.mxu0 0.0
          %2532 = vmatpush1.msra.mxu0 0.0
          %2533 = vmatprep.subr.mxu0 0.0
          %2534 = vmatpush1.msra.mxu0 0.0
          %2535 = vmatprep.subr.mxu0 0.0
          %2536 = vmatpush1.msra.mxu0 0.0
          %2537 = vmatprep.subr.mxu0 0.0
          %2538 = vmatpush1.msra.mxu0 0.0
          %2539 = vmatprep.subr.mxu0 0.0
          %2540 = vmatpush1.msra.mxu0 0.0
          %2541 = vmatprep.subr.mxu0 0.0
          %2542 = vmatpush1.msra.mxu0 0.0
          %2543 = vmatprep.subr.mxu0 0.0
          %2544 = vmatpush1.msra.mxu0 0.0
          %2545 = vmatprep.subr.mxu0 0.0
          %2546 = vmatpush1.msra.mxu0 0.0
          %2547 = vmatprep.subr.mxu0 0.0
          %2548 = vmatpush1.msra.mxu0 0.0
          %2549 = vmatprep.subr.mxu0 0.0
          %2550 = vmatpush1.msra.mxu0 0.0
          %2551 = vmatprep.subr.mxu0 0.0
          %2552 = vmatpush1.msra.mxu0 0.0
          %2553 = vmatprep.subr.mxu0 0.0
          %2554 = vmatpush1.msra.mxu0 0.0
          %2555 = vmatprep.subr.mxu0 0.0
          %2556 = vmatpush1.msra.mxu0 0.0
          %2557 = vmatprep.subr.mxu0 0.0
          %2558 = vmatpush1.msra.mxu0 0.0
          %2559 = vmatprep.subr.mxu0 0.0
          %2560 = vmatpush1.msra.mxu0 0.0
          %2561 = vmatprep.subr.mxu0 0.0
          %2562 = vmatpush1.msra.mxu0 0.0
          %2563 = vmatprep.subr.mxu0 0.0
          %2564 = vmatpush1.msra.mxu0 0.0
          %2565 = vmatprep.subr.mxu0 0.0
          %2566 = vmatpush1.msra.mxu0 0.0
          %2567 = vmatprep.subr.mxu0 0.0
          %2568 = vmatpush1.msra.mxu0 0.0
          %2569 = vmatprep.subr.mxu0 0.0
          %2570 = vmatpush1.msra.mxu0 0.0
          %2571 = vmatprep.subr.mxu0 0.0
          %2572 = vmatpush1.msra.mxu0 0.0
          %2573 = vmatprep.subr.mxu0 0.0
          %2574 = vmatpush1.msra.mxu0 0.0
          %2575 = vmatprep.subr.mxu0 0.0
          %2576 = vmatpush1.msra.mxu0 0.0
          %2577 = vmatprep.subr.mxu0 0.0
          %2578 = vmatpush1.msra.mxu0 0.0
          %2579 = vmatprep.subr.mxu0 0.0
          %2580 = vmatpush1.msra.mxu0 0.0
          %2581 = vmatprep.subr.mxu0 0.0
          %2582 = vmatpush1.msra.mxu0 0.0
          %2583 = vmatprep.mubr.f32.mxu0 0.0
          %2584 = vmatmul.mubr.f32.gmra.mrb[0].mxu0 %v2517
          %v2585 = vpop.f32.mrb[0].mxu0
          %v2586 = vadd.f32 %v2513, %v2585
          %v2587 = vpop.f32.mrb[0].mxu0
          %2588 = vdwg.mxu0
          %s2589 = scalar_lea.vmem [#allocation19], 16
          %v2590 = vld [vmem:[%s2589] sm:$0xff]
          %v2592 = vsel %vm2442, %v2437, 0
          %2594 = vmatprep.subr.mxu0 0.0
          %2595 = vmatpush1.msra.mxu0 %v2590
          %2596 = vmatprep.subr.mxu0 0.0
          %2597 = vmatpush1.msra.mxu0 0.0
          %2598 = vmatprep.subr.mxu0 0.0
          %2599 = vmatpush1.msra.mxu0 0.0
          %2600 = vmatprep.subr.mxu0 0.0
          %2601 = vmatpush1.msra.mxu0 0.0
          %2602 = vmatprep.subr.mxu0 0.0
          %2603 = vmatpush1.msra.mxu0 0.0
          %2604 = vmatprep.subr.mxu0 0.0
          %2605 = vmatpush1.msra.mxu0 0.0
          %2606 = vmatprep.subr.mxu0 0.0
          %2607 = vmatpush1.msra.mxu0 0.0
          %2608 = vmatprep.subr.mxu0 0.0
          %2609 = vmatpush1.msra.mxu0 0.0
          %2610 = vmatprep.subr.mxu0 0.0
          %2611 = vmatpush1.msra.mxu0 0.0
          %2612 = vmatprep.subr.mxu0 0.0
          %2613 = vmatpush1.msra.mxu0 0.0
          %2614 = vmatprep.subr.mxu0 0.0
          %2615 = vmatpush1.msra.mxu0 0.0
          %2616 = vmatprep.subr.mxu0 0.0
          %2617 = vmatpush1.msra.mxu0 0.0
          %2618 = vmatprep.subr.mxu0 0.0
          %2619 = vmatpush1.msra.mxu0 0.0
          %2620 = vmatprep.subr.mxu0 0.0
          %2621 = vmatpush1.msra.mxu0 0.0
          %2622 = vmatprep.subr.mxu0 0.0
          %2623 = vmatpush1.msra.mxu0 0.0
          %2624 = vmatprep.subr.mxu0 0.0
          %2625 = vmatpush1.msra.mxu0 0.0
          %2626 = vmatprep.subr.mxu0 0.0
          %2627 = vmatpush1.msra.mxu0 0.0
          %2628 = vmatprep.subr.mxu0 0.0
          %2629 = vmatpush1.msra.mxu0 0.0
          %2630 = vmatprep.subr.mxu0 0.0
          %2631 = vmatpush1.msra.mxu0 0.0
          %2632 = vmatprep.subr.mxu0 0.0
          %2633 = vmatpush1.msra.mxu0 0.0
          %2634 = vmatprep.subr.mxu0 0.0
          %2635 = vmatpush1.msra.mxu0 0.0
          %2636 = vmatprep.subr.mxu0 0.0
          %2637 = vmatpush1.msra.mxu0 0.0
          %2638 = vmatprep.subr.mxu0 0.0
          %2639 = vmatpush1.msra.mxu0 0.0
          %2640 = vmatprep.subr.mxu0 0.0
          %2641 = vmatpush1.msra.mxu0 0.0
          %2642 = vmatprep.subr.mxu0 0.0
          %2643 = vmatpush1.msra.mxu0 0.0
          %2644 = vmatprep.subr.mxu0 0.0
          %2645 = vmatpush1.msra.mxu0 0.0
          %2646 = vmatprep.subr.mxu0 0.0
          %2647 = vmatpush1.msra.mxu0 0.0
          %2648 = vmatprep.subr.mxu0 0.0
          %2649 = vmatpush1.msra.mxu0 0.0
          %2650 = vmatprep.subr.mxu0 0.0
          %2651 = vmatpush1.msra.mxu0 0.0
          %2652 = vmatprep.subr.mxu0 0.0
          %2653 = vmatpush1.msra.mxu0 0.0
          %2654 = vmatprep.subr.mxu0 0.0
          %2655 = vmatpush1.msra.mxu0 0.0
          %2656 = vmatprep.subr.mxu0 0.0
          %2657 = vmatpush1.msra.mxu0 0.0
          %2658 = vmatprep.mubr.f32.mxu0 0.0
          %2659 = vmatmul.mubr.f32.gmra.mrb[0].mxu0 %v2592
          %v2660 = vpop.f32.mrb[0].mxu0
          %v2661 = vadd.f32 0.0, %v2660
          %v2662 = vpop.f32.mrb[0].mxu0
          %2663 = vdwg.mxu0
          %v2664 = vadd.f32 %v2586, %v2661
          %s2665 = scalar_lea.vmem [#allocation19], 24
          %v2666 = vld [vmem:[%s2665] sm:$0xff]
          %v2668 = vsel %vm2442, %v2438, 0
          %2670 = vmatprep.subr.mxu0 0.0
          %2671 = vmatpush1.msra.mxu0 %v2666
          %2672 = vmatprep.subr.mxu0 0.0
          %2673 = vmatpush1.msra.mxu0 0.0
          %2674 = vmatprep.subr.mxu0 0.0
          %2675 = vmatpush1.msra.mxu0 0.0
          %2676 = vmatprep.subr.mxu0 0.0
          %2677 = vmatpush1.msra.mxu0 0.0
          %2678 = vmatprep.subr.mxu0 0.0
          %2679 = vmatpush1.msra.mxu0 0.0
          %2680 = vmatprep.subr.mxu0 0.0
          %2681 = vmatpush1.msra.mxu0 0.0
          %2682 = vmatprep.subr.mxu0 0.0
          %2683 = vmatpush1.msra.mxu0 0.0
          %2684 = vmatprep.subr.mxu0 0.0
          %2685 = vmatpush1.msra.mxu0 0.0
          %2686 = vmatprep.subr.mxu0 0.0
          %2687 = vmatpush1.msra.mxu0 0.0
          %2688 = vmatprep.subr.mxu0 0.0
          %2689 = vmatpush1.msra.mxu0 0.0
          %2690 = vmatprep.subr.mxu0 0.0
          %2691 = vmatpush1.msra.mxu0 0.0
          %2692 = vmatprep.subr.mxu0 0.0
          %2693 = vmatpush1.msra.mxu0 0.0
          %2694 = vmatprep.subr.mxu0 0.0
          %2695 = vmatpush1.msra.mxu0 0.0
          %2696 = vmatprep.subr.mxu0 0.0
          %2697 = vmatpush1.msra.mxu0 0.0
          %2698 = vmatprep.subr.mxu0 0.0
          %2699 = vmatpush1.msra.mxu0 0.0
          %2700 = vmatprep.subr.mxu0 0.0
          %2701 = vmatpush1.msra.mxu0 0.0
          %2702 = vmatprep.subr.mxu0 0.0
          %2703 = vmatpush1.msra.mxu0 0.0
          %2704 = vmatprep.subr.mxu0 0.0
          %2705 = vmatpush1.msra.mxu0 0.0
          %2706 = vmatprep.subr.mxu0 0.0
          %2707 = vmatpush1.msra.mxu0 0.0
          %2708 = vmatprep.subr.mxu0 0.0
          %2709 = vmatpush1.msra.mxu0 0.0
          %2710 = vmatprep.subr.mxu0 0.0
          %2711 = vmatpush1.msra.mxu0 0.0
          %2712 = vmatprep.subr.mxu0 0.0
          %2713 = vmatpush1.msra.mxu0 0.0
          %2714 = vmatprep.subr.mxu0 0.0
          %2715 = vmatpush1.msra.mxu0 0.0
          %2716 = vmatprep.subr.mxu0 0.0
          %2717 = vmatpush1.msra.mxu0 0.0
          %2718 = vmatprep.subr.mxu0 0.0
          %2719 = vmatpush1.msra.mxu0 0.0
          %2720 = vmatprep.subr.mxu0 0.0
          %2721 = vmatpush1.msra.mxu0 0.0
          %2722 = vmatprep.subr.mxu0 0.0
          %2723 = vmatpush1.msra.mxu0 0.0
          %2724 = vmatprep.subr.mxu0 0.0
          %2725 = vmatpush1.msra.mxu0 0.0
          %2726 = vmatprep.subr.mxu0 0.0
          %2727 = vmatpush1.msra.mxu0 0.0
          %2728 = vmatprep.subr.mxu0 0.0
          %2729 = vmatpush1.msra.mxu0 0.0
          %2730 = vmatprep.subr.mxu0 0.0
          %2731 = vmatpush1.msra.mxu0 0.0
          %2732 = vmatprep.subr.mxu0 0.0
          %2733 = vmatpush1.msra.mxu0 0.0
          %2734 = vmatprep.mubr.f32.mxu0 0.0
          %2735 = vmatmul.mubr.f32.gmra.mrb[0].mxu0 %v2668
          %v2736 = vpop.f32.mrb[0].mxu0
          %v2737 = vadd.f32 0.0, %v2736
          %v2738 = vpop.f32.mrb[0].mxu0
          %2739 = vdwg.mxu0
          %v2740 = vadd.f32 %v2664, %v2737
          %v2741 = vld [vmem:[%s521] sm:$0xff]
          %v2742 = vlaneseq
          %v2743 = vshrl.u32 %v2742, 7
          %v2744 = vsub.s32 2, %v2743
          %v2745 = vrot.slane %v2402, %v2744
          %v2746 = vmul.f32 %v2745, %v2740
          %v2747 = vadd.f32 %v2741, %v2746
          %vm2748 = vcmask 261120
          %v2749 = vsel %vm2748, %v2747, 0.0
          %2750 = vadd.xlane.f32.xlu0 %v2749
          %v2751 = vpop.xlane.xlu0 %2750
          %v2752 = vrcp.pop 32.0
          %v2753 = vmul.f32 %v2751, %v2752
          %v2754 = vsub.f32 %v2747, %v2753
          %v2755 = vmul.f32 %v2754, %v2754
          %v2756 = vsel %vm2748, %v2755, 0.0
          %2757 = vadd.xlane.f32.xlu0 %v2756
          %v2758 = vpop.xlane.xlu0 %2757
          %v2759 = vmul.f32 %v2758, %v2752
          %v2760 = vadd.f32 %v2759, 1e-05
          %v2761 = vrsqrt.pop %v2760
          %v2762 = vmul.f32 %v2754, %v2761
          %v2763 = vlaneseq
          %v2764 = vshrl.u32 %v2763, 7
          %v2765 = vsub.s32 4, %v2764
          %v2766 = vrot.slane %v2402, %v2765
          %v2767 = vmul.f32 %v2762, %v2766
          %v2768 = vlaneseq
          %v2769 = vshrl.u32 %v2768, 7
          %v2770 = vsub.s32 3, %v2769
          %v2771 = vrot.slane %v2402, %v2770
          %v2772 = vadd.f32 %v2767, %v2771
          %v2773 = vld [vmem:[#allocation20] sm:$0xff]
          %v2774 = vld [vmem:[#allocation20 + $0x8] sm:$0xff]
          %v2775 = vld [vmem:[#allocation20 + $0x10] sm:$0xff]
          %v2776 = vld [vmem:[#allocation20 + $0x18] sm:$0xff]
          %v2777 = vld [vmem:[#allocation22] sm:$0x1]
          %v2779 = vlaneseq
          %v2780 = vshrl.u32 %v2779, 7
          %v2781 = vsub.s32 0, %v2780
          %v2782 = vrot.slane %v2777, %v2781
          %v2785 = vsel %vm2748, %v2772, 0
          %2787 = vmatprep.subr.mxu0 0.0
          %2788 = vmatpush1.msra.mxu0 %v2773
          %2789 = vmatprep.subr.mxu0 0.0
          %2790 = vmatpush1.msra.mxu0 %v2774
          %2791 = vmatprep.subr.mxu0 0.0
          %2792 = vmatpush1.msra.mxu0 %v2775
          %2793 = vmatprep.subr.mxu0 0.0
          %2794 = vmatpush1.msra.mxu0 %v2776
          %2795 = vmatprep.subr.mxu0 0.0
          %2796 = vmatpush1.msra.mxu0 0.0
          %2797 = vmatprep.subr.mxu0 0.0
          %2798 = vmatpush1.msra.mxu0 0.0
          %2799 = vmatprep.subr.mxu0 0.0
          %2800 = vmatpush1.msra.mxu0 0.0
          %2801 = vmatprep.subr.mxu0 0.0
          %2802 = vmatpush1.msra.mxu0 0.0
          %2803 = vmatprep.subr.mxu0 0.0
          %2804 = vmatpush1.msra.mxu0 0.0
          %2805 = vmatprep.subr.mxu0 0.0
          %2806 = vmatpush1.msra.mxu0 0.0
          %2807 = vmatprep.subr.mxu0 0.0
          %2808 = vmatpush1.msra.mxu0 0.0
          %2809 = vmatprep.subr.mxu0 0.0
          %2810 = vmatpush1.msra.mxu0 0.0
          %2811 = vmatprep.subr.mxu0 0.0
          %2812 = vmatpush1.msra.mxu0 0.0
          %2813 = vmatprep.subr.mxu0 0.0
          %2814 = vmatpush1.msra.mxu0 0.0
          %2815 = vmatprep.subr.mxu0 0.0
          %2816 = vmatpush1.msra.mxu0 0.0
          %2817 = vmatprep.subr.mxu0 0.0
          %2818 = vmatpush1.msra.mxu0 0.0
          %2819 = vmatprep.subr.mxu0 0.0
          %2820 = vmatpush1.msra.mxu0 0.0
          %2821 = vmatprep.subr.mxu0 0.0
          %2822 = vmatpush1.msra.mxu0 0.0
          %2823 = vmatprep.subr.mxu0 0.0
          %2824 = vmatpush1.msra.mxu0 0.0
          %2825 = vmatprep.subr.mxu0 0.0
          %2826 = vmatpush1.msra.mxu0 0.0
          %2827 = vmatprep.subr.mxu0 0.0
          %2828 = vmatpush1.msra.mxu0 0.0
          %2829 = vmatprep.subr.mxu0 0.0
          %2830 = vmatpush1.msra.mxu0 0.0
          %2831 = vmatprep.subr.mxu0 0.0
          %2832 = vmatpush1.msra.mxu0 0.0
          %2833 = vmatprep.subr.mxu0 0.0
          %2834 = vmatpush1.msra.mxu0 0.0
          %2835 = vmatprep.subr.mxu0 0.0
          %2836 = vmatpush1.msra.mxu0 0.0
          %2837 = vmatprep.subr.mxu0 0.0
          %2838 = vmatpush1.msra.mxu0 0.0
          %2839 = vmatprep.subr.mxu0 0.0
          %2840 = vmatpush1.msra.mxu0 0.0
          %2841 = vmatprep.subr.mxu0 0.0
          %2842 = vmatpush1.msra.mxu0 0.0
          %2843 = vmatprep.subr.mxu0 0.0
          %2844 = vmatpush1.msra.mxu0 0.0
          %2845 = vmatprep.subr.mxu0 0.0
          %2846 = vmatpush1.msra.mxu0 0.0
          %2847 = vmatprep.subr.mxu0 0.0
          %2848 = vmatpush1.msra.mxu0 0.0
          %2849 = vmatprep.subr.mxu0 0.0
          %2850 = vmatpush1.msra.mxu0 0.0
          %2851 = vmatprep.mubr.f32.mxu0 0.0
          %2852 = vmatmul.mubr.f32.gmra.mrb[0].mxu0 %v2785
          %v2853 = vpop.f32.mrb[0].mxu0
          %v2854 = vadd.f32 %v2782, %v2853
          %v2855 = vpop.f32.mrb[0].mxu0
          %2856 = vdwg.mxu0
          %v2857 = vxor.u32 %v2854, 2147483648
          %v2858 = vmul.f32 %v2857, 1.442695
          %v2859 = vpow.pop %v2858
          %v2860 = vadd.f32 %v2859, 1.0
          %v2861 = vrcp.pop %v2860
          %v2862 = vmul.f32 1.0, %v2861
          %v2863 = vmul.f32 %v2854, %v2862
          %v2864 = vld [vmem:[#allocation23] sm:$0xff]
          %v2865 = vld [vmem:[#allocation23 + $0x8] sm:$0xff]
          %v2866 = vld [vmem:[#allocation23 + $0x10] sm:$0xff]
          %v2867 = vld [vmem:[#allocation23 + $0x18] sm:$0xff]
          %v2868 = vld [vmem:[#allocation23 + $0x20] sm:$0xff]
          %v2869 = vld [vmem:[#allocation23 + $0x28] sm:$0xff]
          %v2870 = vld [vmem:[#allocation23 + $0x30] sm:$0xff]
          %v2871 = vld [vmem:[#allocation23 + $0x38] sm:$0xff]
          %v2872 = vld [vmem:[#allocation23 + $0x40] sm:$0xff]
          %v2873 = vld [vmem:[#allocation23 + $0x48] sm:$0xff]
          %v2874 = vld [vmem:[#allocation23 + $0x50] sm:$0xff]
          %v2875 = vld [vmem:[#allocation23 + $0x58] sm:$0xff]
          %v2876 = vld [vmem:[#allocation23 + $0x60] sm:$0xff]
          %v2877 = vld [vmem:[#allocation23 + $0x68] sm:$0xff]
          %v2878 = vld [vmem:[#allocation23 + $0x70] sm:$0xff]
          %v2879 = vld [vmem:[#allocation23 + $0x78] sm:$0xff]
          %v2880 = vld [vmem:[#allocation25] sm:$0x1]
          %v2882 = vlaneseq
          %v2883 = vshrl.u32 %v2882, 7
          %v2884 = vsub.s32 0, %v2883
          %v2885 = vrot.slane %v2880, %v2884
          %2887 = vmatprep.subr.mxu0 0.0
          %2888 = vmatpush1.msra.mxu0 %v2864
          %2889 = vmatprep.subr.mxu0 0.0
          %2890 = vmatpush1.msra.mxu0 %v2865
          %2891 = vmatprep.subr.mxu0 0.0
          %2892 = vmatpush1.msra.mxu0 %v2866
          %2893 = vmatprep.subr.mxu0 0.0
          %2894 = vmatpush1.msra.mxu0 %v2867
          %2895 = vmatprep.subr.mxu0 0.0
          %2896 = vmatpush1.msra.mxu0 %v2868
          %2897 = vmatprep.subr.mxu0 0.0
          %2898 = vmatpush1.msra.mxu0 %v2869
          %2899 = vmatprep.subr.mxu0 0.0
          %2900 = vmatpush1.msra.mxu0 %v2870
          %2901 = vmatprep.subr.mxu0 0.0
          %2902 = vmatpush1.msra.mxu0 %v2871
          %2903 = vmatprep.subr.mxu0 0.0
          %2904 = vmatpush1.msra.mxu0 %v2872
          %2905 = vmatprep.subr.mxu0 0.0
          %2906 = vmatpush1.msra.mxu0 %v2873
          %2907 = vmatprep.subr.mxu0 0.0
          %2908 = vmatpush1.msra.mxu0 %v2874
          %2909 = vmatprep.subr.mxu0 0.0
          %2910 = vmatpush1.msra.mxu0 %v2875
          %2911 = vmatprep.subr.mxu0 0.0
          %2912 = vmatpush1.msra.mxu0 %v2876
          %2913 = vmatprep.subr.mxu0 0.0
          %2914 = vmatpush1.msra.mxu0 %v2877
          %2915 = vmatprep.subr.mxu0 0.0
          %2916 = vmatpush1.msra.mxu0 %v2878
          %2917 = vmatprep.subr.mxu0 0.0
          %2918 = vmatpush1.msra.mxu0 %v2879
          %2919 = vmatprep.subr.mxu0 0.0
          %2920 = vmatpush1.msra.mxu0 0.0
          %2921 = vmatprep.subr.mxu0 0.0
          %2922 = vmatpush1.msra.mxu0 0.0
          %2923 = vmatprep.subr.mxu0 0.0
          %2924 = vmatpush1.msra.mxu0 0.0
          %2925 = vmatprep.subr.mxu0 0.0
          %2926 = vmatpush1.msra.mxu0 0.0
          %2927 = vmatprep.subr.mxu0 0.0
          %2928 = vmatpush1.msra.mxu0 0.0
          %2929 = vmatprep.subr.mxu0 0.0
          %2930 = vmatpush1.msra.mxu0 0.0
          %2931 = vmatprep.subr.mxu0 0.0
          %2932 = vmatpush1.msra.mxu0 0.0
          %2933 = vmatprep.subr.mxu0 0.0
          %2934 = vmatpush1.msra.mxu0 0.0
          %2935 = vmatprep.subr.mxu0 0.0
          %2936 = vmatpush1.msra.mxu0 0.0
          %2937 = vmatprep.subr.mxu0 0.0
          %2938 = vmatpush1.msra.mxu0 0.0
          %2939 = vmatprep.subr.mxu0 0.0
          %2940 = vmatpush1.msra.mxu0 0.0
          %2941 = vmatprep.subr.mxu0 0.0
          %2942 = vmatpush1.msra.mxu0 0.0
          %2943 = vmatprep.subr.mxu0 0.0
          %2944 = vmatpush1.msra.mxu0 0.0
          %2945 = vmatprep.subr.mxu0 0.0
          %2946 = vmatpush1.msra.mxu0 0.0
          %2947 = vmatprep.subr.mxu0 0.0
          %2948 = vmatpush1.msra.mxu0 0.0
          %2949 = vmatprep.subr.mxu0 0.0
          %2950 = vmatpush1.msra.mxu0 0.0
          %2951 = vmatprep.mubr.f32.mxu0 0.0
          %2952 = vmatmul.mubr.f32.gmra.mrb[0].mxu0 %v2863
          %v2953 = vpop.f32.mrb[0].mxu0
          %v2954 = vadd.f32 %v2885, %v2953
          %v2955 = vpop.f32.mrb[0].mxu0
          %2956 = vdwg.mxu0
          %v2957 = vlaneseq
          %v2958 = vshrl.u32 %v2957, 7
          %v2959 = vsub.s32 5, %v2958
          %v2960 = vrot.slane %v2402, %v2959
          %v2961 = vmul.f32 %v2960, %v2954
          %v2962 = vadd.f32 %v2747, %v2961
          %2963 = vst.msk [vmem:[%s619] sm:$0xff] %vm2748, %v2962
        $region124: #{tpu_custom_call.1} parent=63 // pred_fallthru
          _
        %s2964 = sand.u32 %s318, 1
        %s2965 = scalar_lea.sflag [#allocation10], %s2964
        %s2966 = sand.u32 %s318, 1
        %s2967 = smul.addr %s2966, 8
        %s2968 = scalar_lea.vmem [#allocation26], %s2967
        // Predicated region
        $region125: #{tpu_custom_call.1} parent=63 // pred_check
          %p2969 = pneg %p328
        $region126: #{tpu_custom_call.1} parent=63 // pred_check_branch
          %2971 = sbr.rel (%p2969) target = $region128
        $region127: #{tpu_custom_call.1} parent=63 // pred_region
          %s2973 = ssub.s32 128, 128
          %2974 = vsyncadd %s2965, %s2973
          %s2975 = smul.addr %s40, 2
          %s2976 = sadd.s32 %s41, %s2975
          %s2977 = smul.addr %s2976, 128
          %s2978 = scalar_lea.hbm %s11, %s2977
          %s2980 = sshll.u32 %s2968, 4
          %s2981 = int_to_ptr.vmem [resolvable:$true] %s2980
          %2983 = dma.vmem_to_hbm [thread:$0]  %s2981, 128, %s2978, %s2965
        $region128: #{tpu_custom_call.1} parent=63 // pred_fallthru
          _
      $region64: #{tpu_custom_call.1} parent=5 // pred_fallthru
        _
      %p2984 = scmp.le.s32.totalorder 2, %s30
      // Predicated region
      $region129: #{tpu_custom_call.1} parent=5 // pred_check
        %p2985 = pneg %p2984
      $region130: #{tpu_custom_call.1} parent=5 // pred_check_branch
        %2987 = sbr.rel (%p2985) target = $region132
      $region131: #{tpu_custom_call.1} parent=5 // pred_region
        %s2988 = ssub.s32 %s30, 2
        // Predicated region
        $region133: #{tpu_custom_call.1} parent=131 // pred_check
          %p2989 = pneg %p334
        $region134: #{tpu_custom_call.1} parent=131 // pred_check_branch
          %2991 = sbr.rel (%p2989) target = $region136
        $region135: #{tpu_custom_call.1} parent=131 // pred_region
          %s2992 = sand.u32 %s319, 1
          %s2993 = scalar_lea.sflag [#allocation10], %s2992
          %s2994 = sand.u32 %s319, 1
          %s2995 = smul.addr %s2994, 8
          %s2996 = scalar_lea.vmem [#allocation26], %s2995
          %2997 = dma.done %s2993, 128
        $region136: #{tpu_custom_call.1} parent=131 // pred_fallthru
          _
      $region132: #{tpu_custom_call.1} parent=5 // pred_fallthru
        _
    $region6: #{tpu_custom_call.1} parent=1 // loop_footer
      %s34 = sadd.s32 1, %s30
    $region7: #{tpu_custom_call.1} parent=1 // loop_footer_branch
      %29 = sbr.rel target = $region3
    $region8: #{tpu_custom_call.1} parent=1 // loop_exit
      _
    %2998 = vsyncpa [#allocation9], 1
    %s2999 = scalar_lea.sflag [#allocation9], 1
    %3000 = vsyncpa %s2999, 1
    %3001 = vsyncpa [#allocation12], 1
    %s3002 = scalar_lea.sflag [#allocation12], 1
    %3003 = vsyncpa %s3002, 1
    %3004 = vsyncpa [#allocation15], 1
    %3005 = vsyncpa [#allocation18], 1
    %3006 = vsyncpa [#allocation21], 1
    %3007 = vsyncpa [#allocation24], 1
    %3008 = vsyncpa [#allocation10], 1
    %s3009 = scalar_lea.sflag [#allocation10], 1
    %3010 = vsyncpa %s3009, 1

</llo_original>
